<compile_context>
chip_gen: v5e
topology: v5e:2x2
jax: 0.10.0
libtpu: 0.0.40
codegen_flags: <defaults>
</compile_context>

<pallas_src>
import functools

import jax
import jax.numpy as jnp
from jax.experimental import pallas as pl
from jax.experimental.pallas import tpu as pltpu

EPS = 1e-5        # PyTorch BatchNorm1d default eps
TILE_M = 512      # rows per grid step; MXU-aligned, fits v5e 16 MiB scoped VMEM
OUT_PAD = 128     # pad the 3-wide final output to a full lane width

_PARALLEL = pltpu.CompilerParams(dimension_semantics=("parallel",))


# --------------------------------------------------------------------------
# Kernels
# --------------------------------------------------------------------------
def _conv_stats_kernel(x_ref, w_ref, h_ref, ssum_ref, ssq_ref):
    """conv1 (1x1) as MXU matmul; emit per-tile per-channel sum / sumsq."""
    h = jnp.dot(x_ref[...], w_ref[...], preferred_element_type=jnp.float32)
    hb = h.astype(h_ref.dtype)
    h_ref[...] = hb
    # Stats on the bf16-rounded value actually stored -> next layer's BN
    # normalizes exactly the tensor it is applied to.
    hs = hb.astype(jnp.float32)
    ssum_ref[0] = jnp.sum(hs, axis=0, keepdims=True)
    ssq_ref[0] = jnp.sum(hs * hs, axis=0, keepdims=True)


def _bn_conv_stats_kernel(h_ref, a_ref, c_ref, w_ref,
                          o_ref, ssum_ref, ssq_ref,
                          *, tile_m, valid_rows, mask_rows):
    """Apply previous BN (folded scale/shift) + ReLU, next conv, emit stats."""
    y = jnp.maximum(h_ref[...].astype(jnp.float32) * a_ref[...] + c_ref[...],
                    0.0)
    if mask_rows:
        # Keep zero-padded rows out of the next layer's statistics.
        row = (pl.program_id(0) * tile_m
               + jax.lax.broadcasted_iota(jnp.int32, y.shape, 0))
        y = jnp.where(row < valid_rows, y, 0.0)
    h = jnp.dot(y.astype(jnp.bfloat16), w_ref[...],
                preferred_element_type=jnp.float32)
    hb = h.astype(o_ref.dtype)
    o_ref[...] = hb
    hs = hb.astype(jnp.float32)
    ssum_ref[0] = jnp.sum(hs, axis=0, keepdims=True)
    ssq_ref[0] = jnp.sum(hs * hs, axis=0, keepdims=True)


def _bn_conv_tanh_kernel(h_ref, a_ref, c_ref, w_ref, b_ref, o_ref):
    """Apply bn3 + ReLU, conv4 (+bias), 2*tanh.  Output lane-padded bf16."""
    y = jnp.maximum(h_ref[...].astype(jnp.float32) * a_ref[...] + c_ref[...],
                    0.0)
    z = jnp.dot(y.astype(jnp.bfloat16), w_ref[...],
                preferred_element_type=jnp.float32) + b_ref[...]
    o_ref[...] = (2.0 * jnp.tanh(z)).astype(o_ref.dtype)


# --------------------------------------------------------------------------
# pallas_call wrappers (one per layer)
# --------------------------------------------------------------------------
def _row_spec(tile_m, c):
    return pl.BlockSpec((tile_m, c), lambda i: (i, 0))


def _const_spec(shape):
    n = len(shape)
    return pl.BlockSpec(shape, lambda i, _n=n: (0,) * _n)


def _stats_spec(c):
    return pl.BlockSpec((1, 1, c), lambda i: (i, 0, 0))


def _layer_conv_stats(x, w):
    rows_p, c_in = x.shape
    c_out = w.shape[1]
    nt = rows_p // TILE_M
    return pl.pallas_call(
        _conv_stats_kernel,
        grid=(nt,),
        in_specs=[_row_spec(TILE_M, c_in), _const_spec(w.shape)],
        out_specs=(_row_spec(TILE_M, c_out), _stats_spec(c_out),
                   _stats_spec(c_out)),
        out_shape=(jax.ShapeDtypeStruct((rows_p, c_out), jnp.bfloat16),
                   jax.ShapeDtypeStruct((nt, 1, c_out), jnp.float32),
                   jax.ShapeDtypeStruct((nt, 1, c_out), jnp.float32)),
        compiler_params=_PARALLEL,
    )(x, w)


def _layer_bn_conv_stats(h, a, c, w, valid_rows, mask_rows):
    rows_p, c_in = h.shape
    c_out = w.shape[1]
    nt = rows_p // TILE_M
    kern = functools.partial(_bn_conv_stats_kernel, tile_m=TILE_M,
                             valid_rows=valid_rows, mask_rows=mask_rows)
    return pl.pallas_call(
        kern,
        grid=(nt,),
        in_specs=[_row_spec(TILE_M, c_in),
                  _const_spec((1, c_in)), _const_spec((1, c_in)),
                  _const_spec(w.shape)],
        out_specs=(_row_spec(TILE_M, c_out), _stats_spec(c_out),
                   _stats_spec(c_out)),
        out_shape=(jax.ShapeDtypeStruct((rows_p, c_out), jnp.bfloat16),
                   jax.ShapeDtypeStruct((nt, 1, c_out), jnp.float32),
                   jax.ShapeDtypeStruct((nt, 1, c_out), jnp.float32)),
        compiler_params=_PARALLEL,
    )(h, a, c, w)


def _layer_bn_conv_tanh(h, a, c, w, b):
    rows_p, c_in = h.shape
    c_out = w.shape[1]
    nt = rows_p // TILE_M
    return pl.pallas_call(
        _bn_conv_tanh_kernel,
        grid=(nt,),
        in_specs=[_row_spec(TILE_M, c_in),
                  _const_spec((1, c_in)), _const_spec((1, c_in)),
                  _const_spec(w.shape), _const_spec(b.shape)],
        out_specs=_row_spec(TILE_M, c_out),
        out_shape=jax.ShapeDtypeStruct((rows_p, c_out), jnp.bfloat16),
        compiler_params=_PARALLEL,
    )(h, a, c, w, b)


def _bn_fold(ssum, ssq, count, gamma, beta):
    """Reduce per-tile partials into folded BN scale/shift (training stats)."""
    mean = jnp.sum(ssum, axis=0) / count                # (1, C)
    ex2 = jnp.sum(ssq, axis=0) / count                  # (1, C)
    var = jnp.maximum(ex2 - mean * mean, 0.0)           # biased variance
    inv = jax.lax.rsqrt(var + EPS)
    a = gamma * inv                                     # (1, C) scale
    c = beta - mean * a                                 # (1, C) shift
    return a, c


# --------------------------------------------------------------------------
# Parameters and forward
# --------------------------------------------------------------------------
def init_params(key, bottleneck_size):
    """Deterministic synthetic parameters matching PointGenCon.__init__ shapes.

    Conv1d(k=1) weights are stored pre-transposed as (C_in, C_out).
    Returns [w1,b1,g1,be1, w2,b2,g2,be2, w3,b3,g3,be3, w4,b4].
    (b1/b2/b3 exist for parity with PyTorch but cancel exactly under BN.)
    """
    c = bottleneck_size
    dims = [(c, c), (c, c // 2), (c // 2, c // 4), (c // 4, 3)]
    keys = jax.random.split(key, 8)
    params = []
    for i, (cin, cout) in enumerate(dims):
        w = (jax.random.normal(keys[2 * i], (cin, cout), jnp.float32)
             * (1.0 / jnp.sqrt(cin)))
        b = jax.random.normal(keys[2 * i + 1], (1, cout), jnp.float32) * 0.01
        params.append(w)
        params.append(b)
        if i < 3:  # bn1/bn2/bn3: gamma=1, beta=0 (PyTorch default init)
            params.append(jnp.ones((1, cout), jnp.float32))
            params.append(jnp.zeros((1, cout), jnp.float32))
    return params


@jax.jit
def pointgencon_forward(x, params):
    """x: (B, C, N) float32  ->  (B, 3, N) float32."""
    (w1, _b1, g1, be1, w2, _b2, g2, be2, w3, _b3, g3, be3, w4, b4) = params
    B, C, N = x.shape
    rows = B * N
    rows_p = ((rows + TILE_M - 1) // TILE_M) * TILE_M
    mask_rows = rows_p != rows

    # Cast to bf16 BEFORE the NCW -> rows transpose so the big HBM transpose
    # pass moves half the bytes; channel axis lands on lanes so 1x1 convs are
    # plain matmuls.
    xr = jnp.transpose(x.astype(jnp.bfloat16), (0, 2, 1)).reshape(rows, C)
    if mask_rows:
        xr = jnp.pad(xr, ((0, rows_p - rows), (0, 0)))

    # conv1/2/3 biases cancel under BN mean subtraction -> not applied (exact).
    w1b = w1.astype(jnp.bfloat16)
    w2b = w2.astype(jnp.bfloat16)
    w3b = w3.astype(jnp.bfloat16)
    w4p = jnp.pad(w4, ((0, 0), (0, OUT_PAD - w4.shape[1]))).astype(jnp.bfloat16)
    b4p = jnp.pad(b4, ((0, 0), (0, OUT_PAD - b4.shape[1])))

    # Layer 1: conv1 (+ stats of its output).
    h1, s1, q1 = _layer_conv_stats(xr, w1b)
    a1, c1 = _bn_fold(s1, q1, rows, g1, be1)

    # Layer 2: bn1+relu fused with conv2 (+ stats).
    h2, s2, q2 = _layer_bn_conv_stats(h1, a1, c1, w2b, rows, mask_rows)
    a2, c2 = _bn_fold(s2, q2, rows, g2, be2)

    # Layer 3: bn2+relu fused with conv3 (+ stats).
    h3, s3, q3 = _layer_bn_conv_stats(h2, a2, c2, w3b, rows, mask_rows)
    a3, c3 = _bn_fold(s3, q3, rows, g3, be3)

    # Layer 4: bn3+relu fused with conv4 + bias + 2*tanh (lane-padded, bf16).
    out_p = _layer_bn_conv_tanh(h3, a3, c3, w4p, b4p)   # (rows_p, OUT_PAD) bf16
    out = out_p[:rows, :3].astype(jnp.float32)
    return jnp.transpose(out.reshape(B, N, 3), (0, 2, 1))


# --------------------------------------------------------------------------
# Pure-JAX reference (f32, with the conv biases that cancel under BN)
# --------------------------------------------------------------------------
def _reference(x, params):
    (w1, b1, g1, be1, w2, b2, g2, be2, w3, b3, g3, be3, w4, b4) = params
    B, C, N = x.shape
    h = jnp.transpose(x, (0, 2, 1)).reshape(B * N, C)

    def bn_relu(h, g, be):
        m = jnp.mean(h, axis=0, keepdims=True)
        v = jnp.mean((h - m) ** 2, axis=0, keepdims=True)
        return jnp.maximum((h - m) * jax.lax.rsqrt(v + EPS) * g + be, 0.0)

    h = bn_relu(h @ w1 + b1, g1, be1)
    h = bn_relu(h @ w2 + b2, g2, be2)
    h = bn_relu(h @ w3 + b3, g3, be3)
    h = 2.0 * jnp.tanh(h @ w4 + b4)
    return jnp.transpose(h.reshape(B, N, 3), (0, 2, 1))


if __name__ == "__main__":
    bottleneck_size = 32   # small stand-in for the default 1024 (divisible by 4)
    B, N = 2, 64

    key = jax.random.PRNGKey(0)
    k_x, k_p = jax.random.split(key)
    x = jax.random.normal(k_x, (B, bottleneck_size, N), jnp.float32)
    params = tuple(init_params(k_p, bottleneck_size))

    y = pointgencon_forward(x, params)
    jax.block_until_ready(y)

    assert y.shape == (B, 3, N)
    assert bool(jnp.all(jnp.abs(y) <= 2.0 + 1e-5))          # 2*tanh range
    y_ref = _reference(x, params)
    err = float(jnp.max(jnp.abs(y - y_ref)))
    assert err < 0.1, f"max abs error vs reference: {err}"   # bf16-matmul drift
    print("KERNEL_OK")
</pallas_src>

<mosaic_0001>
module attributes {stable_mosaic.version = 11 : i64} {
  func.func @_conv_stats_kernel(%arg0: i32, %arg1: memref<512x32xbf16, #tpu.memory_space<vmem>>, %arg2: memref<32x32xbf16, #tpu.memory_space<vmem>>, %arg3: memref<512x32xbf16, #tpu.memory_space<vmem>>, %arg4: memref<1x1x32xf32, #tpu.memory_space<vmem>>, %arg5: memref<1x1x32xf32, #tpu.memory_space<vmem>>) attributes {dimension_semantics = [#tpu.dimension_semantics<parallel>], iteration_bounds = array<i64: 1>, scalar_prefetch = 0 : i64, scratch_operands = 0 : i64, tpu.core_type = #tpu.core_type<tc>, window_params = [{transform_indices = @transform_0, window_bounds = array<i64: 512, 32>}, {pipeline_mode = #tpu.pipeline_mode<synchronous>, transform_indices = @transform_1, window_bounds = array<i64: 32, 32>}, {transform_indices = @transform_2, window_bounds = array<i64: 512, 32>}, {transform_indices = @transform_3, window_bounds = array<i64: 1, 1, 32>}, {transform_indices = @transform_4, window_bounds = array<i64: 1, 1, 32>}]} {
    %c0 = arith.constant 0 : index
    %c0_0 = arith.constant 0 : index
    %0 = vector.load %arg1[%c0, %c0_0] : memref<512x32xbf16, #tpu.memory_space<vmem>>, vector<512x32xbf16>
    %c0_1 = arith.constant 0 : index
    %c0_2 = arith.constant 0 : index
    %1 = vector.load %arg2[%c0_1, %c0_2] : memref<32x32xbf16, #tpu.memory_space<vmem>>, vector<32x32xbf16>
    %cst = arith.constant dense<0.000000e+00> : vector<512x32xf32>
    %2 = tpu.matmul %0, %1, %cst {dimension_numbers = #tpu.dot_dimension_numbers<[1], [0], [0], [1], [0, 0, 1, 1], [], []>} : vector<512x32xbf16>, vector<32x32xbf16>, vector<512x32xf32> -> vector<512x32xf32>
    %3 = arith.truncf %2 : vector<512x32xf32> to vector<512x32xbf16>
    %c0_3 = arith.constant 0 : index
    %c0_4 = arith.constant 0 : index
    %4 = vector.load %arg3[%c0_3, %c0_4] : memref<512x32xbf16, #tpu.memory_space<vmem>>, vector<512x32xbf16>
    tpu.vector_store %arg3[%c0_3, %c0_4], %3 {strides = array<i32>} : memref<512x32xbf16, #tpu.memory_space<vmem>>, vector<512x32xbf16>,
    %5 = arith.extf %3 : vector<512x32xbf16> to vector<512x32xf32>
    %cst_5 = arith.constant dense<0.000000e+00> : vector<32xf32>
    %6 = vector.multi_reduction <add>, %5, %cst_5 [0] : vector<512x32xf32> to vector<32xf32>
    %7 = vector.shape_cast %6 : vector<32xf32> to vector<1x32xf32>
    %c0_6 = arith.constant 0 : index
    %c0_7 = arith.constant 0 : index
    %c0_8 = arith.constant 0 : index
    %8 = vector.load %arg4[%c0_6, %c0_7, %c0_8] : memref<1x1x32xf32, #tpu.memory_space<vmem>>, vector<1x1x32xf32>
    %9 = vector.shape_cast %8 : vector<1x1x32xf32> to vector<1x32xf32>
    %10 = vector.shape_cast %7 : vector<1x32xf32> to vector<1x1x32xf32>
    tpu.vector_store %arg4[%c0_6, %c0_7, %c0_8], %10 {strides = array<i32>} : memref<1x1x32xf32, #tpu.memory_space<vmem>>, vector<1x1x32xf32>,
    %11 = arith.mulf %5, %5 : vector<512x32xf32>
    %cst_9 = arith.constant dense<0.000000e+00> : vector<32xf32>
    %12 = vector.multi_reduction <add>, %11, %cst_9 [0] : vector<512x32xf32> to vector<32xf32>
    %13 = vector.shape_cast %12 : vector<32xf32> to vector<1x32xf32>
    %c0_10 = arith.constant 0 : index
    %c0_11 = arith.constant 0 : index
    %c0_12 = arith.constant 0 : index
    %14 = vector.load %arg5[%c0_10, %c0_11, %c0_12] : memref<1x1x32xf32, #tpu.memory_space<vmem>>, vector<1x1x32xf32>
    %15 = vector.shape_cast %14 : vector<1x1x32xf32> to vector<1x32xf32>
    %16 = vector.shape_cast %13 : vector<1x32xf32> to vector<1x1x32xf32>
    tpu.vector_store %arg5[%c0_10, %c0_11, %c0_12], %16 {strides = array<i32>} : memref<1x1x32xf32, #tpu.memory_space<vmem>>, vector<1x1x32xf32>,
    return
  }
  func.func @transform_0(%arg0: i32) -> (i32, i32) {
    %c0_i32 = arith.constant 0 : i32
    %c0_i32_0 = arith.constant 0 : i32
    return %arg0, %c0_i32 : i32, i32
  }
  func.func @transform_1(%arg0: i32) -> (i32, i32) {
    %c0_i32 = arith.constant 0 : i32
    %c0_i32_0 = arith.constant 0 : i32
    %c0_i32_1 = arith.constant 0 : i32
    return %c0_i32, %c0_i32_0 : i32, i32
  }
  func.func @transform_2(%arg0: i32) -> (i32, i32) {
    %c0_i32 = arith.constant 0 : i32
    %c0_i32_0 = arith.constant 0 : i32
    return %arg0, %c0_i32 : i32, i32
  }
  func.func @transform_3(%arg0: i32) -> (i32, i32, i32) {
    %c0_i32 = arith.constant 0 : i32
    %c0_i32_0 = arith.constant 0 : i32
    %c0_i32_1 = arith.constant 0 : i32
    return %arg0, %c0_i32, %c0_i32_0 : i32, i32, i32
  }
  func.func @transform_4(%arg0: i32) -> (i32, i32, i32) {
    %c0_i32 = arith.constant 0 : i32
    %c0_i32_0 = arith.constant 0 : i32
    %c0_i32_1 = arith.constant 0 : i32
    return %arg0, %c0_i32, %c0_i32_0 : i32, i32, i32
  }
}

module attributes {stable_mosaic.version = 11 : i64} {
  func.func @_bn_conv_stats_kernel(%arg0: i32, %arg1: memref<512x32xbf16, #tpu.memory_space<vmem>>, %arg2: memref<1x32xf32, #tpu.memory_space<vmem>>, %arg3: memref<1x32xf32, #tpu.memory_space<vmem>>, %arg4: memref<32x16xbf16, #tpu.memory_space<vmem>>, %arg5: memref<512x16xbf16, #tpu.memory_space<vmem>>, %arg6: memref<1x1x16xf32, #tpu.memory_space<vmem>>, %arg7: memref<1x1x16xf32, #tpu.memory_space<vmem>>) attributes {dimension_semantics = [#tpu.dimension_semantics<parallel>], iteration_bounds = array<i64: 1>, scalar_prefetch = 0 : i64, scratch_operands = 0 : i64, tpu.core_type = #tpu.core_type<tc>, window_params = [{transform_indices = @transform_0, window_bounds = array<i64: 512, 32>}, {pipeline_mode = #tpu.pipeline_mode<synchronous>, transform_indices = @transform_1, window_bounds = array<i64: 1, 32>}, {pipeline_mode = #tpu.pipeline_mode<synchronous>, transform_indices = @transform_2, window_bounds = array<i64: 1, 32>}, {pipeline_mode = #tpu.pipeline_mode<synchronous>, transform_indices = @transform_3, window_bounds = array<i64: 32, 16>}, {transform_indices = @transform_4, window_bounds = array<i64: 512, 16>}, {transform_indices = @transform_5, window_bounds = array<i64: 1, 1, 16>}, {transform_indices = @transform_6, window_bounds = array<i64: 1, 1, 16>}]} {
    %c0 = arith.constant 0 : index
    %c0_0 = arith.constant 0 : index
    %0 = vector.load %arg1[%c0, %c0_0] : memref<512x32xbf16, #tpu.memory_space<vmem>>, vector<512x32xbf16>
    %1 = arith.extf %0 : vector<512x32xbf16> to vector<512x32xf32>
    %c0_1 = arith.constant 0 : index
    %c0_2 = arith.constant 0 : index
    %2 = vector.load %arg2[%c0_1, %c0_2] : memref<1x32xf32, #tpu.memory_space<vmem>>, vector<1x32xf32>
    %3 = vector.broadcast %2 : vector<1x32xf32> to vector<512x32xf32>
    %4 = arith.mulf %1, %3 : vector<512x32xf32>
    %c0_3 = arith.constant 0 : index
    %c0_4 = arith.constant 0 : index
    %5 = vector.load %arg3[%c0_3, %c0_4] : memref<1x32xf32, #tpu.memory_space<vmem>>, vector<1x32xf32>
    %6 = vector.broadcast %5 : vector<1x32xf32> to vector<512x32xf32>
    %7 = arith.addf %4, %6 : vector<512x32xf32>
    %cst = arith.constant 0.000000e+00 : f32
    %8 = vector.broadcast %cst : f32 to vector<512x32xf32>
    %9 = arith.maximumf %7, %8 : vector<512x32xf32>
    %c512_i32 = arith.constant 512 : i32
    %10 = arith.muli %arg0, %c512_i32 : i32
    %11 = tpu.iota {dimensions = array<i32: 0>} : vector<512x32xi32>
    %12 = vector.broadcast %10 : i32 to vector<512x32xi32>
    %13 = arith.addi %12, %11 : vector<512x32xi32>
    %c128_i32 = arith.constant 128 : i32
    %14 = vector.broadcast %c128_i32 : i32 to vector<512x32xi32>
    %15 = arith.cmpi slt, %13, %14 : vector<512x32xi32>
    %cst_5 = arith.constant 0.000000e+00 : f32
    %16 = vector.broadcast %cst_5 : f32 to vector<512x32xf32>
    %17 = arith.select %15, %9, %16 : vector<512x32xi1>, vector<512x32xf32>
    %18 = arith.truncf %17 : vector<512x32xf32> to vector<512x32xbf16>
    %c0_6 = arith.constant 0 : index
    %c0_7 = arith.constant 0 : index
    %19 = vector.load %arg4[%c0_6, %c0_7] : memref<32x16xbf16, #tpu.memory_space<vmem>>, vector<32x16xbf16>
    %cst_8 = arith.constant dense<0.000000e+00> : vector<512x16xf32>
    %20 = tpu.matmul %18, %19, %cst_8 {dimension_numbers = #tpu.dot_dimension_numbers<[1], [0], [0], [1], [0, 0, 1, 1], [], []>} : vector<512x32xbf16>, vector<32x16xbf16>, vector<512x16xf32> -> vector<512x16xf32>
    %21 = arith.truncf %20 : vector<512x16xf32> to vector<512x16xbf16>
    %c0_9 = arith.constant 0 : index
    %c0_10 = arith.constant 0 : index
    %22 = vector.load %arg5[%c0_9, %c0_10] : memref<512x16xbf16, #tpu.memory_space<vmem>>, vector<512x16xbf16>
    tpu.vector_store %arg5[%c0_9, %c0_10], %21 {strides = array<i32>} : memref<512x16xbf16, #tpu.memory_space<vmem>>, vector<512x16xbf16>,
    %23 = arith.extf %21 : vector<512x16xbf16> to vector<512x16xf32>
    %cst_11 = arith.constant dense<0.000000e+00> : vector<16xf32>
    %24 = vector.multi_reduction <add>, %23, %cst_11 [0] : vector<512x16xf32> to vector<16xf32>
    %25 = vector.shape_cast %24 : vector<16xf32> to vector<1x16xf32>
    %c0_12 = arith.constant 0 : index
    %c0_13 = arith.constant 0 : index
    %c0_14 = arith.constant 0 : index
    %26 = vector.load %arg6[%c0_12, %c0_13, %c0_14] : memref<1x1x16xf32, #tpu.memory_space<vmem>>, vector<1x1x16xf32>
    %27 = vector.shape_cast %26 : vector<1x1x16xf32> to vector<1x16xf32>
    %28 = vector.shape_cast %25 : vector<1x16xf32> to vector<1x1x16xf32>
    tpu.vector_store %arg6[%c0_12, %c0_13, %c0_14], %28 {strides = array<i32>} : memref<1x1x16xf32, #tpu.memory_space<vmem>>, vector<1x1x16xf32>,
    %29 = arith.mulf %23, %23 : vector<512x16xf32>
    %cst_15 = arith.constant dense<0.000000e+00> : vector<16xf32>
    %30 = vector.multi_reduction <add>, %29, %cst_15 [0] : vector<512x16xf32> to vector<16xf32>
    %31 = vector.shape_cast %30 : vector<16xf32> to vector<1x16xf32>
    %c0_16 = arith.constant 0 : index
    %c0_17 = arith.constant 0 : index
    %c0_18 = arith.constant 0 : index
    %32 = vector.load %arg7[%c0_16, %c0_17, %c0_18] : memref<1x1x16xf32, #tpu.memory_space<vmem>>, vector<1x1x16xf32>
    %33 = vector.shape_cast %32 : vector<1x1x16xf32> to vector<1x16xf32>
    %34 = vector.shape_cast %31 : vector<1x16xf32> to vector<1x1x16xf32>
    tpu.vector_store %arg7[%c0_16, %c0_17, %c0_18], %34 {strides = array<i32>} : memref<1x1x16xf32, #tpu.memory_space<vmem>>, vector<1x1x16xf32>,
    return
  }
  func.func @transform_0(%arg0: i32) -> (i32, i32) {
    %c0_i32 = arith.constant 0 : i32
    %c0_i32_0 = arith.constant 0 : i32
    return %arg0, %c0_i32 : i32, i32
  }
  func.func @transform_1(%arg0: i32) -> (i32, i32) {
    %c0_i32 = arith.constant 0 : i32
    %c0_i32_0 = arith.constant 0 : i32
    %c0_i32_1 = arith.constant 0 : i32
    return %c0_i32, %c0_i32_0 : i32, i32
  }
  func.func @transform_2(%arg0: i32) -> (i32, i32) {
    %c0_i32 = arith.constant 0 : i32
    %c0_i32_0 = arith.constant 0 : i32
    %c0_i32_1 = arith.constant 0 : i32
    return %c0_i32, %c0_i32_0 : i32, i32
  }
  func.func @transform_3(%arg0: i32) -> (i32, i32) {
    %c0_i32 = arith.constant 0 : i32
    %c0_i32_0 = arith.constant 0 : i32
    %c0_i32_1 = arith.constant 0 : i32
    return %c0_i32, %c0_i32_0 : i32, i32
  }
  func.func @transform_4(%arg0: i32) -> (i32, i32) {
    %c0_i32 = arith.constant 0 : i32
    %c0_i32_0 = arith.constant 0 : i32
    return %arg0, %c0_i32 : i32, i32
  }
  func.func @transform_5(%arg0: i32) -> (i32, i32, i32) {
    %c0_i32 = arith.constant 0 : i32
    %c0_i32_0 = arith.constant 0 : i32
    %c0_i32_1 = arith.constant 0 : i32
    return %arg0, %c0_i32, %c0_i32_0 : i32, i32, i32
  }
  func.func @transform_6(%arg0: i32) -> (i32, i32, i32) {
    %c0_i32 = arith.constant 0 : i32
    %c0_i32_0 = arith.constant 0 : i32
    %c0_i32_1 = arith.constant 0 : i32
    return %arg0, %c0_i32, %c0_i32_0 : i32, i32, i32
  }
}

module attributes {stable_mosaic.version = 11 : i64} {
  func.func @_bn_conv_stats_kernel(%arg0: i32, %arg1: memref<512x16xbf16, #tpu.memory_space<vmem>>, %arg2: memref<1x16xf32, #tpu.memory_space<vmem>>, %arg3: memref<1x16xf32, #tpu.memory_space<vmem>>, %arg4: memref<16x8xbf16, #tpu.memory_space<vmem>>, %arg5: memref<512x8xbf16, #tpu.memory_space<vmem>>, %arg6: memref<1x1x8xf32, #tpu.memory_space<vmem>>, %arg7: memref<1x1x8xf32, #tpu.memory_space<vmem>>) attributes {dimension_semantics = [#tpu.dimension_semantics<parallel>], iteration_bounds = array<i64: 1>, scalar_prefetch = 0 : i64, scratch_operands = 0 : i64, tpu.core_type = #tpu.core_type<tc>, window_params = [{transform_indices = @transform_0, window_bounds = array<i64: 512, 16>}, {pipeline_mode = #tpu.pipeline_mode<synchronous>, transform_indices = @transform_1, window_bounds = array<i64: 1, 16>}, {pipeline_mode = #tpu.pipeline_mode<synchronous>, transform_indices = @transform_2, window_bounds = array<i64: 1, 16>}, {pipeline_mode = #tpu.pipeline_mode<synchronous>, transform_indices = @transform_3, window_bounds = array<i64: 16, 8>}, {transform_indices = @transform_4, window_bounds = array<i64: 512, 8>}, {transform_indices = @transform_5, window_bounds = array<i64: 1, 1, 8>}, {transform_indices = @transform_6, window_bounds = array<i64: 1, 1, 8>}]} {
    %c0 = arith.constant 0 : index
    %c0_0 = arith.constant 0 : index
    %0 = vector.load %arg1[%c0, %c0_0] : memref<512x16xbf16, #tpu.memory_space<vmem>>, vector<512x16xbf16>
    %1 = arith.extf %0 : vector<512x16xbf16> to vector<512x16xf32>
    %c0_1 = arith.constant 0 : index
    %c0_2 = arith.constant 0 : index
    %2 = vector.load %arg2[%c0_1, %c0_2] : memref<1x16xf32, #tpu.memory_space<vmem>>, vector<1x16xf32>
    %3 = vector.broadcast %2 : vector<1x16xf32> to vector<512x16xf32>
    %4 = arith.mulf %1, %3 : vector<512x16xf32>
    %c0_3 = arith.constant 0 : index
    %c0_4 = arith.constant 0 : index
    %5 = vector.load %arg3[%c0_3, %c0_4] : memref<1x16xf32, #tpu.memory_space<vmem>>, vector<1x16xf32>
    %6 = vector.broadcast %5 : vector<1x16xf32> to vector<512x16xf32>
    %7 = arith.addf %4, %6 : vector<512x16xf32>
    %cst = arith.constant 0.000000e+00 : f32
    %8 = vector.broadcast %cst : f32 to vector<512x16xf32>
    %9 = arith.maximumf %7, %8 : vector<512x16xf32>
    %c512_i32 = arith.constant 512 : i32
    %10 = arith.muli %arg0, %c512_i32 : i32
    %11 = tpu.iota {dimensions = array<i32: 0>} : vector<512x16xi32>
    %12 = vector.broadcast %10 : i32 to vector<512x16xi32>
    %13 = arith.addi %12, %11 : vector<512x16xi32>
    %c128_i32 = arith.constant 128 : i32
    %14 = vector.broadcast %c128_i32 : i32 to vector<512x16xi32>
    %15 = arith.cmpi slt, %13, %14 : vector<512x16xi32>
    %cst_5 = arith.constant 0.000000e+00 : f32
    %16 = vector.broadcast %cst_5 : f32 to vector<512x16xf32>
    %17 = arith.select %15, %9, %16 : vector<512x16xi1>, vector<512x16xf32>
    %18 = arith.truncf %17 : vector<512x16xf32> to vector<512x16xbf16>
    %c0_6 = arith.constant 0 : index
    %c0_7 = arith.constant 0 : index
    %19 = vector.load %arg4[%c0_6, %c0_7] : memref<16x8xbf16, #tpu.memory_space<vmem>>, vector<16x8xbf16>
    %cst_8 = arith.constant dense<0.000000e+00> : vector<512x8xf32>
    %20 = tpu.matmul %18, %19, %cst_8 {dimension_numbers = #tpu.dot_dimension_numbers<[1], [0], [0], [1], [0, 0, 1, 1], [], []>} : vector<512x16xbf16>, vector<16x8xbf16>, vector<512x8xf32> -> vector<512x8xf32>
    %21 = arith.truncf %20 : vector<512x8xf32> to vector<512x8xbf16>
    %c0_9 = arith.constant 0 : index
    %c0_10 = arith.constant 0 : index
    %22 = vector.load %arg5[%c0_9, %c0_10] : memref<512x8xbf16, #tpu.memory_space<vmem>>, vector<512x8xbf16>
    tpu.vector_store %arg5[%c0_9, %c0_10], %21 {strides = array<i32>} : memref<512x8xbf16, #tpu.memory_space<vmem>>, vector<512x8xbf16>,
    %23 = arith.extf %21 : vector<512x8xbf16> to vector<512x8xf32>
    %cst_11 = arith.constant dense<0.000000e+00> : vector<8xf32>
    %24 = vector.multi_reduction <add>, %23, %cst_11 [0] : vector<512x8xf32> to vector<8xf32>
    %25 = vector.shape_cast %24 : vector<8xf32> to vector<1x8xf32>
    %c0_12 = arith.constant 0 : index
    %c0_13 = arith.constant 0 : index
    %c0_14 = arith.constant 0 : index
    %26 = vector.load %arg6[%c0_12, %c0_13, %c0_14] : memref<1x1x8xf32, #tpu.memory_space<vmem>>, vector<1x1x8xf32>
    %27 = vector.shape_cast %26 : vector<1x1x8xf32> to vector<1x8xf32>
    %28 = vector.shape_cast %25 : vector<1x8xf32> to vector<1x1x8xf32>
    tpu.vector_store %arg6[%c0_12, %c0_13, %c0_14], %28 {strides = array<i32>} : memref<1x1x8xf32, #tpu.memory_space<vmem>>, vector<1x1x8xf32>,
    %29 = arith.mulf %23, %23 : vector<512x8xf32>
    %cst_15 = arith.constant dense<0.000000e+00> : vector<8xf32>
    %30 = vector.multi_reduction <add>, %29, %cst_15 [0] : vector<512x8xf32> to vector<8xf32>
    %31 = vector.shape_cast %30 : vector<8xf32> to vector<1x8xf32>
    %c0_16 = arith.constant 0 : index
    %c0_17 = arith.constant 0 : index
    %c0_18 = arith.constant 0 : index
    %32 = vector.load %arg7[%c0_16, %c0_17, %c0_18] : memref<1x1x8xf32, #tpu.memory_space<vmem>>, vector<1x1x8xf32>
    %33 = vector.shape_cast %32 : vector<1x1x8xf32> to vector<1x8xf32>
    %34 = vector.shape_cast %31 : vector<1x8xf32> to vector<1x1x8xf32>
    tpu.vector_store %arg7[%c0_16, %c0_17, %c0_18], %34 {strides = array<i32>} : memref<1x1x8xf32, #tpu.memory_space<vmem>>, vector<1x1x8xf32>,
    return
  }
  func.func @transform_0(%arg0: i32) -> (i32, i32) {
    %c0_i32 = arith.constant 0 : i32
    %c0_i32_0 = arith.constant 0 : i32
    return %arg0, %c0_i32 : i32, i32
  }
  func.func @transform_1(%arg0: i32) -> (i32, i32) {
    %c0_i32 = arith.constant 0 : i32
    %c0_i32_0 = arith.constant 0 : i32
    %c0_i32_1 = arith.constant 0 : i32
    return %c0_i32, %c0_i32_0 : i32, i32
  }
  func.func @transform_2(%arg0: i32) -> (i32, i32) {
    %c0_i32 = arith.constant 0 : i32
    %c0_i32_0 = arith.constant 0 : i32
    %c0_i32_1 = arith.constant 0 : i32
    return %c0_i32, %c0_i32_0 : i32, i32
  }
  func.func @transform_3(%arg0: i32) -> (i32, i32) {
    %c0_i32 = arith.constant 0 : i32
    %c0_i32_0 = arith.constant 0 : i32
    %c0_i32_1 = arith.constant 0 : i32
    return %c0_i32, %c0_i32_0 : i32, i32
  }
  func.func @transform_4(%arg0: i32) -> (i32, i32) {
    %c0_i32 = arith.constant 0 : i32
    %c0_i32_0 = arith.constant 0 : i32
    return %arg0, %c0_i32 : i32, i32
  }
  func.func @transform_5(%arg0: i32) -> (i32, i32, i32) {
    %c0_i32 = arith.constant 0 : i32
    %c0_i32_0 = arith.constant 0 : i32
    %c0_i32_1 = arith.constant 0 : i32
    return %arg0, %c0_i32, %c0_i32_0 : i32, i32, i32
  }
  func.func @transform_6(%arg0: i32) -> (i32, i32, i32) {
    %c0_i32 = arith.constant 0 : i32
    %c0_i32_0 = arith.constant 0 : i32
    %c0_i32_1 = arith.constant 0 : i32
    return %arg0, %c0_i32, %c0_i32_0 : i32, i32, i32
  }
}

module attributes {stable_mosaic.version = 11 : i64} {
  func.func @_bn_conv_tanh_kernel(%arg0: i32, %arg1: memref<512x8xbf16, #tpu.memory_space<vmem>>, %arg2: memref<1x8xf32, #tpu.memory_space<vmem>>, %arg3: memref<1x8xf32, #tpu.memory_space<vmem>>, %arg4: memref<8x128xbf16, #tpu.memory_space<vmem>>, %arg5: memref<1x128xf32, #tpu.memory_space<vmem>>, %arg6: memref<512x128xbf16, #tpu.memory_space<vmem>>) attributes {dimension_semantics = [#tpu.dimension_semantics<parallel>], iteration_bounds = array<i64: 1>, scalar_prefetch = 0 : i64, scratch_operands = 0 : i64, tpu.core_type = #tpu.core_type<tc>, window_params = [{transform_indices = @transform_0, window_bounds = array<i64: 512, 8>}, {pipeline_mode = #tpu.pipeline_mode<synchronous>, transform_indices = @transform_1, window_bounds = array<i64: 1, 8>}, {pipeline_mode = #tpu.pipeline_mode<synchronous>, transform_indices = @transform_2, window_bounds = array<i64: 1, 8>}, {pipeline_mode = #tpu.pipeline_mode<synchronous>, transform_indices = @transform_3, window_bounds = array<i64: 8, 128>}, {pipeline_mode = #tpu.pipeline_mode<synchronous>, transform_indices = @transform_4, window_bounds = array<i64: 1, 128>}, {transform_indices = @transform_5, window_bounds = array<i64: 512, 128>}]} {
    %c0 = arith.constant 0 : index
    %c0_0 = arith.constant 0 : index
    %0 = vector.load %arg1[%c0, %c0_0] : memref<512x8xbf16, #tpu.memory_space<vmem>>, vector<512x8xbf16>
    %1 = arith.extf %0 : vector<512x8xbf16> to vector<512x8xf32>
    %c0_1 = arith.constant 0 : index
    %c0_2 = arith.constant 0 : index
    %2 = vector.load %arg2[%c0_1, %c0_2] : memref<1x8xf32, #tpu.memory_space<vmem>>, vector<1x8xf32>
    %3 = vector.broadcast %2 : vector<1x8xf32> to vector<512x8xf32>
    %4 = arith.mulf %1, %3 : vector<512x8xf32>
    %c0_3 = arith.constant 0 : index
    %c0_4 = arith.constant 0 : index
    %5 = vector.load %arg3[%c0_3, %c0_4] : memref<1x8xf32, #tpu.memory_space<vmem>>, vector<1x8xf32>
    %6 = vector.broadcast %5 : vector<1x8xf32> to vector<512x8xf32>
    %7 = arith.addf %4, %6 : vector<512x8xf32>
    %cst = arith.constant 0.000000e+00 : f32
    %8 = vector.broadcast %cst : f32 to vector<512x8xf32>
    %9 = arith.maximumf %7, %8 : vector<512x8xf32>
    %10 = arith.truncf %9 : vector<512x8xf32> to vector<512x8xbf16>
    %c0_5 = arith.constant 0 : index
    %c0_6 = arith.constant 0 : index
    %11 = vector.load %arg4[%c0_5, %c0_6] : memref<8x128xbf16, #tpu.memory_space<vmem>>, vector<8x128xbf16>
    %cst_7 = arith.constant dense<0.000000e+00> : vector<512x128xf32>
    %12 = tpu.matmul %10, %11, %cst_7 {dimension_numbers = #tpu.dot_dimension_numbers<[1], [0], [0], [1], [0, 0, 1, 1], [], []>} : vector<512x8xbf16>, vector<8x128xbf16>, vector<512x128xf32> -> vector<512x128xf32>
    %c0_8 = arith.constant 0 : index
    %c0_9 = arith.constant 0 : index
    %13 = vector.load %arg5[%c0_8, %c0_9] : memref<1x128xf32, #tpu.memory_space<vmem>>, vector<1x128xf32>
    %14 = vector.broadcast %13 : vector<1x128xf32> to vector<512x128xf32>
    %15 = arith.addf %12, %14 : vector<512x128xf32>
    %16 = math.tanh %15 : vector<512x128xf32>
    %cst_10 = arith.constant 2.000000e+00 : f32
    %17 = vector.broadcast %cst_10 : f32 to vector<512x128xf32>
    %18 = arith.mulf %17, %16 : vector<512x128xf32>
    %19 = arith.truncf %18 : vector<512x128xf32> to vector<512x128xbf16>
    %c0_11 = arith.constant 0 : index
    %c0_12 = arith.constant 0 : index
    %20 = vector.load %arg6[%c0_11, %c0_12] : memref<512x128xbf16, #tpu.memory_space<vmem>>, vector<512x128xbf16>
    tpu.vector_store %arg6[%c0_11, %c0_12], %19 {strides = array<i32>} : memref<512x128xbf16, #tpu.memory_space<vmem>>, vector<512x128xbf16>,
    return
  }
  func.func @transform_0(%arg0: i32) -> (i32, i32) {
    %c0_i32 = arith.constant 0 : i32
    %c0_i32_0 = arith.constant 0 : i32
    return %arg0, %c0_i32 : i32, i32
  }
  func.func @transform_1(%arg0: i32) -> (i32, i32) {
    %c0_i32 = arith.constant 0 : i32
    %c0_i32_0 = arith.constant 0 : i32
    %c0_i32_1 = arith.constant 0 : i32
    return %c0_i32, %c0_i32_0 : i32, i32
  }
  func.func @transform_2(%arg0: i32) -> (i32, i32) {
    %c0_i32 = arith.constant 0 : i32
    %c0_i32_0 = arith.constant 0 : i32
    %c0_i32_1 = arith.constant 0 : i32
    return %c0_i32, %c0_i32_0 : i32, i32
  }
  func.func @transform_3(%arg0: i32) -> (i32, i32) {
    %c0_i32 = arith.constant 0 : i32
    %c0_i32_0 = arith.constant 0 : i32
    %c0_i32_1 = arith.constant 0 : i32
    return %c0_i32, %c0_i32_0 : i32, i32
  }
  func.func @transform_4(%arg0: i32) -> (i32, i32) {
    %c0_i32 = arith.constant 0 : i32
    %c0_i32_0 = arith.constant 0 : i32
    %c0_i32_1 = arith.constant 0 : i32
    return %c0_i32, %c0_i32_0 : i32, i32
  }
  func.func @transform_5(%arg0: i32) -> (i32, i32) {
    %c0_i32 = arith.constant 0 : i32
    %c0_i32_0 = arith.constant 0 : i32
    return %arg0, %c0_i32 : i32, i32
  }
}

</mosaic_0001>

<llo_original>
// kernel: pointgencon_forward.4
$region0: #{pointgencon_forward.4}
  #allocation0 [shape = 'u32[]', space=smem, size = 0x4, offset = 0x4, fixed_abs, tag = 'smem constant byte address 0x4 - core index']
  #allocation1 [shape = 'u32[72,128]{1,0:T(1,128)}', space=vmem, size = 0x9000, scoped, tag = 'internal scratch']
  %s0 = inlined_call_operand.vmem [shape: bf16[512,32], index: 0, kind: input, shape index: {}]
  %s1 = inlined_call_operand.vmem [shape: bf16[32,32], index: 1, kind: input, shape index: {}]
  %s2 = inlined_call_operand.vmem [shape: bf16[512,32], index: 2, kind: output, shape index: {0}]
  %s3 = inlined_call_operand.vmem [shape: f32[1,1,32], index: 3, kind: output, shape index: {1}]
  %s4 = inlined_call_operand.vmem [shape: f32[1,1,32], index: 4, kind: output, shape index: {2}]
  %5 = xla_tuple %s2, %s3, %s4
  %s6 = sld [smem:[#allocation0]]
  $region34: #{pointgencon_forward.4} parent=0
    _
  %s8 = ssub.s32 1, %s6
  %s9 = scalar_select 0, %s8, %s6
  // Predicated region
  $region2: #{pointgencon_forward.4} parent=0 // pred_check
    _
  $region3: #{pointgencon_forward.4} parent=0 // pred_check_branch
    %11 = sbr.rel (0) target = $region5
  $region4: #{pointgencon_forward.4} parent=0 // pred_region
    _
  $region5: #{pointgencon_forward.4} parent=0 // pred_fallthru
    _
  // Predicated region
  $region6: #{pointgencon_forward.4} parent=0 // pred_check
    _
  $region7: #{pointgencon_forward.4} parent=0 // pred_check_branch
    %13 = sbr.rel (0) target = $region9
  $region8: #{pointgencon_forward.4} parent=0 // pred_region
    _
  $region9: #{pointgencon_forward.4} parent=0 // pred_fallthru
    _
  %v15 = vld [vmem:[%s0] sm:$0xf]
  %v16 = vld [vmem:[%s0 + $0x4] sm:$0xf]
  %v17 = vld [vmem:[%s0 + $0x8] sm:$0xf]
  %v18 = vld [vmem:[%s0 + $0xc] sm:$0xf]
  %v19 = vld [vmem:[%s0 + $0x10] sm:$0xf]
  %v20 = vld [vmem:[%s0 + $0x14] sm:$0xf]
  %v21 = vld [vmem:[%s0 + $0x18] sm:$0xf]
  %v22 = vld [vmem:[%s0 + $0x1c] sm:$0xf]
  %v23 = vld [vmem:[%s0 + $0x20] sm:$0xf]
  %v24 = vld [vmem:[%s0 + $0x24] sm:$0xf]
  %v25 = vld [vmem:[%s0 + $0x28] sm:$0xf]
  %v26 = vld [vmem:[%s0 + $0x2c] sm:$0xf]
  %v27 = vld [vmem:[%s0 + $0x30] sm:$0xf]
  %v28 = vld [vmem:[%s0 + $0x34] sm:$0xf]
  %v29 = vld [vmem:[%s0 + $0x38] sm:$0xf]
  %v30 = vld [vmem:[%s0 + $0x3c] sm:$0xf]
  %v31 = vld [vmem:[%s0 + $0x40] sm:$0xf]
  %v32 = vld [vmem:[%s0 + $0x44] sm:$0xf]
  %v33 = vld [vmem:[%s0 + $0x48] sm:$0xf]
  %v34 = vld [vmem:[%s0 + $0x4c] sm:$0xf]
  %v35 = vld [vmem:[%s0 + $0x50] sm:$0xf]
  %v36 = vld [vmem:[%s0 + $0x54] sm:$0xf]
  %v37 = vld [vmem:[%s0 + $0x58] sm:$0xf]
  %v38 = vld [vmem:[%s0 + $0x5c] sm:$0xf]
  %v39 = vld [vmem:[%s0 + $0x60] sm:$0xf]
  %v40 = vld [vmem:[%s0 + $0x64] sm:$0xf]
  %v41 = vld [vmem:[%s0 + $0x68] sm:$0xf]
  %v42 = vld [vmem:[%s0 + $0x6c] sm:$0xf]
  %v43 = vld [vmem:[%s0 + $0x70] sm:$0xf]
  %v44 = vld [vmem:[%s0 + $0x74] sm:$0xf]
  %v45 = vld [vmem:[%s0 + $0x78] sm:$0xf]
  %v46 = vld [vmem:[%s0 + $0x7c] sm:$0xf]
  %v47 = vld [vmem:[%s0 + $0x80] sm:$0xf]
  %v48 = vld [vmem:[%s0 + $0x84] sm:$0xf]
  %v49 = vld [vmem:[%s0 + $0x88] sm:$0xf]
  %v50 = vld [vmem:[%s0 + $0x8c] sm:$0xf]
  %v51 = vld [vmem:[%s0 + $0x90] sm:$0xf]
  %v52 = vld [vmem:[%s0 + $0x94] sm:$0xf]
  %v53 = vld [vmem:[%s0 + $0x98] sm:$0xf]
  %v54 = vld [vmem:[%s0 + $0x9c] sm:$0xf]
  %v55 = vld [vmem:[%s0 + $0xa0] sm:$0xf]
  %v56 = vld [vmem:[%s0 + $0xa4] sm:$0xf]
  %v57 = vld [vmem:[%s0 + $0xa8] sm:$0xf]
  %v58 = vld [vmem:[%s0 + $0xac] sm:$0xf]
  %v59 = vld [vmem:[%s0 + $0xb0] sm:$0xf]
  %v60 = vld [vmem:[%s0 + $0xb4] sm:$0xf]
  %v61 = vld [vmem:[%s0 + $0xb8] sm:$0xf]
  %v62 = vld [vmem:[%s0 + $0xbc] sm:$0xf]
  %v63 = vld [vmem:[%s0 + $0xc0] sm:$0xf]
  %v64 = vld [vmem:[%s0 + $0xc4] sm:$0xf]
  %v65 = vld [vmem:[%s0 + $0xc8] sm:$0xf]
  %v66 = vld [vmem:[%s0 + $0xcc] sm:$0xf]
  %v67 = vld [vmem:[%s0 + $0xd0] sm:$0xf]
  %v68 = vld [vmem:[%s0 + $0xd4] sm:$0xf]
  %v69 = vld [vmem:[%s0 + $0xd8] sm:$0xf]
  %v70 = vld [vmem:[%s0 + $0xdc] sm:$0xf]
  %v71 = vld [vmem:[%s0 + $0xe0] sm:$0xf]
  %v72 = vld [vmem:[%s0 + $0xe4] sm:$0xf]
  %v73 = vld [vmem:[%s0 + $0xe8] sm:$0xf]
  %v74 = vld [vmem:[%s0 + $0xec] sm:$0xf]
  %v75 = vld [vmem:[%s0 + $0xf0] sm:$0xf]
  %v76 = vld [vmem:[%s0 + $0xf4] sm:$0xf]
  %v77 = vld [vmem:[%s0 + $0xf8] sm:$0xf]
  %v78 = vld [vmem:[%s0 + $0xfc] sm:$0xf]
  %v79 = vld [vmem:[%s1] sm:$0xf]
  %v80 = vld [vmem:[%s1 + $0x4] sm:$0xf]
  %v81 = vld [vmem:[%s1 + $0x8] sm:$0xf]
  %v82 = vld [vmem:[%s1 + $0xc] sm:$0xf]
  %v147 = vunpack.c.l.b16 %v15
  %v148 = vunpack.c.l.b16 %v16
  %v149 = vunpack.c.l.b16 %v17
  %v150 = vunpack.c.l.b16 %v18
  %v151 = vunpack.c.l.b16 %v19
  %v152 = vunpack.c.l.b16 %v20
  %v153 = vunpack.c.l.b16 %v21
  %v154 = vunpack.c.l.b16 %v22
  %v155 = vunpack.c.l.b16 %v23
  %v156 = vunpack.c.l.b16 %v24
  %v157 = vunpack.c.l.b16 %v25
  %v158 = vunpack.c.l.b16 %v26
  %v159 = vunpack.c.l.b16 %v27
  %v160 = vunpack.c.l.b16 %v28
  %v161 = vunpack.c.l.b16 %v29
  %v162 = vunpack.c.l.b16 %v30
  %v163 = vunpack.c.l.b16 %v31
  %v164 = vunpack.c.l.b16 %v32
  %v165 = vunpack.c.l.b16 %v33
  %v166 = vunpack.c.l.b16 %v34
  %v167 = vunpack.c.l.b16 %v35
  %v168 = vunpack.c.l.b16 %v36
  %v169 = vunpack.c.l.b16 %v37
  %v170 = vunpack.c.l.b16 %v38
  %v171 = vunpack.c.l.b16 %v39
  %v172 = vunpack.c.l.b16 %v40
  %v173 = vunpack.c.l.b16 %v41
  %v174 = vunpack.c.l.b16 %v42
  %v175 = vunpack.c.l.b16 %v43
  %v176 = vunpack.c.l.b16 %v44
  %v177 = vunpack.c.l.b16 %v45
  %v178 = vunpack.c.l.b16 %v46
  %v179 = vunpack.c.l.b16 %v47
  %v180 = vunpack.c.l.b16 %v48
  %v181 = vunpack.c.l.b16 %v49
  %v182 = vunpack.c.l.b16 %v50
  %v183 = vunpack.c.l.b16 %v51
  %v184 = vunpack.c.l.b16 %v52
  %v185 = vunpack.c.l.b16 %v53
  %v186 = vunpack.c.l.b16 %v54
  %v187 = vunpack.c.l.b16 %v55
  %v188 = vunpack.c.l.b16 %v56
  %v189 = vunpack.c.l.b16 %v57
  %v190 = vunpack.c.l.b16 %v58
  %v191 = vunpack.c.l.b16 %v59
  %v192 = vunpack.c.l.b16 %v60
  %v193 = vunpack.c.l.b16 %v61
  %v194 = vunpack.c.l.b16 %v62
  %v195 = vunpack.c.l.b16 %v63
  %v196 = vunpack.c.l.b16 %v64
  %v197 = vunpack.c.l.b16 %v65
  %v198 = vunpack.c.l.b16 %v66
  %v199 = vunpack.c.l.b16 %v67
  %v200 = vunpack.c.l.b16 %v68
  %v201 = vunpack.c.l.b16 %v69
  %v202 = vunpack.c.l.b16 %v70
  %v203 = vunpack.c.l.b16 %v71
  %v204 = vunpack.c.l.b16 %v72
  %v205 = vunpack.c.l.b16 %v73
  %v206 = vunpack.c.l.b16 %v74
  %v207 = vunpack.c.l.b16 %v75
  %v208 = vunpack.c.l.b16 %v76
  %v209 = vunpack.c.l.b16 %v77
  %v210 = vunpack.c.l.b16 %v78
  %v211 = vpack.c.b16 %v148, %v147
  %v212 = vpack.c.b16 %v150, %v149
  %v213 = vpack.c.b16 %v152, %v151
  %v214 = vpack.c.b16 %v154, %v153
  %v215 = vpack.c.b16 %v156, %v155
  %v216 = vpack.c.b16 %v158, %v157
  %v217 = vpack.c.b16 %v160, %v159
  %v218 = vpack.c.b16 %v162, %v161
  %v219 = vpack.c.b16 %v164, %v163
  %v220 = vpack.c.b16 %v166, %v165
  %v221 = vpack.c.b16 %v168, %v167
  %v222 = vpack.c.b16 %v170, %v169
  %v223 = vpack.c.b16 %v172, %v171
  %v224 = vpack.c.b16 %v174, %v173
  %v225 = vpack.c.b16 %v176, %v175
  %v226 = vpack.c.b16 %v178, %v177
  %v227 = vpack.c.b16 %v180, %v179
  %v228 = vpack.c.b16 %v182, %v181
  %v229 = vpack.c.b16 %v184, %v183
  %v230 = vpack.c.b16 %v186, %v185
  %v231 = vpack.c.b16 %v188, %v187
  %v232 = vpack.c.b16 %v190, %v189
  %v233 = vpack.c.b16 %v192, %v191
  %v234 = vpack.c.b16 %v194, %v193
  %v235 = vpack.c.b16 %v196, %v195
  %v236 = vpack.c.b16 %v198, %v197
  %v237 = vpack.c.b16 %v200, %v199
  %v238 = vpack.c.b16 %v202, %v201
  %v239 = vpack.c.b16 %v204, %v203
  %v240 = vpack.c.b16 %v206, %v205
  %v241 = vpack.c.b16 %v208, %v207
  %v242 = vpack.c.b16 %v210, %v209
  %v247 = vunpack.c.l.b16 %v79
  %v248 = vunpack.c.l.b16 %v80
  %v249 = vunpack.c.l.b16 %v81
  %v250 = vunpack.c.l.b16 %v82
  %v251 = vpack.c.b16 %v248, %v247
  %v252 = vpack.c.b16 %v250, %v249
  %vm255 = vcmask 261120
  %v257 = vsel %vm255, %v211, 0
  %v260 = vsel %vm255, %v212, 0
  %v263 = vsel %vm255, %v213, 0
  %v266 = vsel %vm255, %v214, 0
  %v269 = vsel %vm255, %v215, 0
  %v272 = vsel %vm255, %v216, 0
  %v275 = vsel %vm255, %v217, 0
  %v278 = vsel %vm255, %v218, 0
  %v281 = vsel %vm255, %v219, 0
  %v284 = vsel %vm255, %v220, 0
  %v287 = vsel %vm255, %v221, 0
  %v290 = vsel %vm255, %v222, 0
  %v293 = vsel %vm255, %v223, 0
  %v296 = vsel %vm255, %v224, 0
  %v299 = vsel %vm255, %v225, 0
  %v302 = vsel %vm255, %v226, 0
  %v305 = vsel %vm255, %v227, 0
  %v308 = vsel %vm255, %v228, 0
  %v311 = vsel %vm255, %v229, 0
  %v314 = vsel %vm255, %v230, 0
  %v317 = vsel %vm255, %v231, 0
  %v320 = vsel %vm255, %v232, 0
  %v323 = vsel %vm255, %v233, 0
  %v326 = vsel %vm255, %v234, 0
  %v329 = vsel %vm255, %v235, 0
  %v332 = vsel %vm255, %v236, 0
  %v335 = vsel %vm255, %v237, 0
  %v338 = vsel %vm255, %v238, 0
  %v341 = vsel %vm255, %v239, 0
  %v344 = vsel %vm255, %v240, 0
  %v347 = vsel %vm255, %v241, 0
  %v350 = vsel %vm255, %v242, 0
  %352 = vmatpush.bf16.msra.mxu0 0
  %353 = vmatpush.bf16.msra.mxu0 0
  %354 = vmatpush.bf16.msra.mxu0 0
  %355 = vmatpush.bf16.msra.mxu0 0
  %356 = vmatpush.bf16.msra.mxu0 0
  %357 = vmatpush.bf16.msra.mxu0 0
  %358 = vmatpush.bf16.msra.mxu0 %v252
  %359 = vmatpush.bf16.msra.mxu0 %v251
  %360 = vmatmul.bf16.gmra.mxu0 %v257
  %v361 = vpop.f32.mrf.mxu0
  %v362 = vadd.f32 0.0, %v361
  %v363 = vpop.f32.mrf.mxu0
  %v364 = vadd.f32 0.0, %v363
  %365 = vmatmul.bf16.gmra.mxu0 %v260
  %v366 = vpop.f32.mrf.mxu0
  %v367 = vadd.f32 0.0, %v366
  %v368 = vpop.f32.mrf.mxu0
  %v369 = vadd.f32 0.0, %v368
  %370 = vmatmul.bf16.gmra.mxu0 %v263
  %v371 = vpop.f32.mrf.mxu0
  %v372 = vadd.f32 0.0, %v371
  %v373 = vpop.f32.mrf.mxu0
  %v374 = vadd.f32 0.0, %v373
  %375 = vmatmul.bf16.gmra.mxu0 %v266
  %v376 = vpop.f32.mrf.mxu0
  %v377 = vadd.f32 0.0, %v376
  %v378 = vpop.f32.mrf.mxu0
  %v379 = vadd.f32 0.0, %v378
  %380 = vmatmul.bf16.gmra.mxu0 %v269
  %v381 = vpop.f32.mrf.mxu0
  %v382 = vadd.f32 0.0, %v381
  %v383 = vpop.f32.mrf.mxu0
  %v384 = vadd.f32 0.0, %v383
  %385 = vmatmul.bf16.gmra.mxu0 %v272
  %v386 = vpop.f32.mrf.mxu0
  %v387 = vadd.f32 0.0, %v386
  %v388 = vpop.f32.mrf.mxu0
  %v389 = vadd.f32 0.0, %v388
  %390 = vmatmul.bf16.gmra.mxu0 %v275
  %v391 = vpop.f32.mrf.mxu0
  %v392 = vadd.f32 0.0, %v391
  %v393 = vpop.f32.mrf.mxu0
  %v394 = vadd.f32 0.0, %v393
  %395 = vmatmul.bf16.gmra.mxu0 %v278
  %v396 = vpop.f32.mrf.mxu0
  %v397 = vadd.f32 0.0, %v396
  %v398 = vpop.f32.mrf.mxu0
  %v399 = vadd.f32 0.0, %v398
  %400 = vmatmul.bf16.gmra.mxu0 %v281
  %v401 = vpop.f32.mrf.mxu0
  %v402 = vadd.f32 0.0, %v401
  %v403 = vpop.f32.mrf.mxu0
  %v404 = vadd.f32 0.0, %v403
  %405 = vmatmul.bf16.gmra.mxu0 %v284
  %v406 = vpop.f32.mrf.mxu0
  %v407 = vadd.f32 0.0, %v406
  %v408 = vpop.f32.mrf.mxu0
  %v409 = vadd.f32 0.0, %v408
  %410 = vmatmul.bf16.gmra.mxu0 %v287
  %v411 = vpop.f32.mrf.mxu0
  %v412 = vadd.f32 0.0, %v411
  %v413 = vpop.f32.mrf.mxu0
  %v414 = vadd.f32 0.0, %v413
  %415 = vmatmul.bf16.gmra.mxu0 %v290
  %v416 = vpop.f32.mrf.mxu0
  %v417 = vadd.f32 0.0, %v416
  %v418 = vpop.f32.mrf.mxu0
  %v419 = vadd.f32 0.0, %v418
  %420 = vmatmul.bf16.gmra.mxu0 %v293
  %v421 = vpop.f32.mrf.mxu0
  %v422 = vadd.f32 0.0, %v421
  %v423 = vpop.f32.mrf.mxu0
  %v424 = vadd.f32 0.0, %v423
  %425 = vmatmul.bf16.gmra.mxu0 %v296
  %v426 = vpop.f32.mrf.mxu0
  %v427 = vadd.f32 0.0, %v426
  %v428 = vpop.f32.mrf.mxu0
  %v429 = vadd.f32 0.0, %v428
  %430 = vmatmul.bf16.gmra.mxu0 %v299
  %v431 = vpop.f32.mrf.mxu0
  %v432 = vadd.f32 0.0, %v431
  %v433 = vpop.f32.mrf.mxu0
  %v434 = vadd.f32 0.0, %v433
  %435 = vmatmul.bf16.gmra.mxu0 %v302
  %v436 = vpop.f32.mrf.mxu0
  %v437 = vadd.f32 0.0, %v436
  %v438 = vpop.f32.mrf.mxu0
  %v439 = vadd.f32 0.0, %v438
  %440 = vmatmul.bf16.gmra.mxu0 %v305
  %v441 = vpop.f32.mrf.mxu0
  %v442 = vadd.f32 0.0, %v441
  %v443 = vpop.f32.mrf.mxu0
  %v444 = vadd.f32 0.0, %v443
  %445 = vmatmul.bf16.gmra.mxu0 %v308
  %v446 = vpop.f32.mrf.mxu0
  %v447 = vadd.f32 0.0, %v446
  %v448 = vpop.f32.mrf.mxu0
  %v449 = vadd.f32 0.0, %v448
  %450 = vmatmul.bf16.gmra.mxu0 %v311
  %v451 = vpop.f32.mrf.mxu0
  %v452 = vadd.f32 0.0, %v451
  %v453 = vpop.f32.mrf.mxu0
  %v454 = vadd.f32 0.0, %v453
  %455 = vmatmul.bf16.gmra.mxu0 %v314
  %v456 = vpop.f32.mrf.mxu0
  %v457 = vadd.f32 0.0, %v456
  %v458 = vpop.f32.mrf.mxu0
  %v459 = vadd.f32 0.0, %v458
  %460 = vmatmul.bf16.gmra.mxu0 %v317
  %v461 = vpop.f32.mrf.mxu0
  %v462 = vadd.f32 0.0, %v461
  %v463 = vpop.f32.mrf.mxu0
  %v464 = vadd.f32 0.0, %v463
  %465 = vmatmul.bf16.gmra.mxu0 %v320
  %v466 = vpop.f32.mrf.mxu0
  %v467 = vadd.f32 0.0, %v466
  %v468 = vpop.f32.mrf.mxu0
  %v469 = vadd.f32 0.0, %v468
  %470 = vmatmul.bf16.gmra.mxu0 %v323
  %v471 = vpop.f32.mrf.mxu0
  %v472 = vadd.f32 0.0, %v471
  %v473 = vpop.f32.mrf.mxu0
  %v474 = vadd.f32 0.0, %v473
  %475 = vmatmul.bf16.gmra.mxu0 %v326
  %v476 = vpop.f32.mrf.mxu0
  %v477 = vadd.f32 0.0, %v476
  %v478 = vpop.f32.mrf.mxu0
  %v479 = vadd.f32 0.0, %v478
  %480 = vmatmul.bf16.gmra.mxu0 %v329
  %v481 = vpop.f32.mrf.mxu0
  %v482 = vadd.f32 0.0, %v481
  %v483 = vpop.f32.mrf.mxu0
  %v484 = vadd.f32 0.0, %v483
  %485 = vmatmul.bf16.gmra.mxu0 %v332
  %v486 = vpop.f32.mrf.mxu0
  %v487 = vadd.f32 0.0, %v486
  %v488 = vpop.f32.mrf.mxu0
  %v489 = vadd.f32 0.0, %v488
  %490 = vmatmul.bf16.gmra.mxu0 %v335
  %v491 = vpop.f32.mrf.mxu0
  %v492 = vadd.f32 0.0, %v491
  %v493 = vpop.f32.mrf.mxu0
  %v494 = vadd.f32 0.0, %v493
  %495 = vmatmul.bf16.gmra.mxu0 %v338
  %v496 = vpop.f32.mrf.mxu0
  %v497 = vadd.f32 0.0, %v496
  %v498 = vpop.f32.mrf.mxu0
  %v499 = vadd.f32 0.0, %v498
  %500 = vmatmul.bf16.gmra.mxu0 %v341
  %v501 = vpop.f32.mrf.mxu0
  %v502 = vadd.f32 0.0, %v501
  %v503 = vpop.f32.mrf.mxu0
  %v504 = vadd.f32 0.0, %v503
  %505 = vmatmul.bf16.gmra.mxu0 %v344
  %v506 = vpop.f32.mrf.mxu0
  %v507 = vadd.f32 0.0, %v506
  %v508 = vpop.f32.mrf.mxu0
  %v509 = vadd.f32 0.0, %v508
  %510 = vmatmul.bf16.gmra.mxu0 %v347
  %v511 = vpop.f32.mrf.mxu0
  %v512 = vadd.f32 0.0, %v511
  %v513 = vpop.f32.mrf.mxu0
  %v514 = vadd.f32 0.0, %v513
  %515 = vmatmul.bf16.gmra.mxu0 %v350
  %v516 = vpop.f32.mrf.mxu0
  %v517 = vadd.f32 0.0, %v516
  %v518 = vpop.f32.mrf.mxu0
  %v519 = vadd.f32 0.0, %v518
  %520 = vdwg.mxu0
  %v521 = vpack.c.bf16 %v362, %v362
  %v522 = vpack.c.bf16 %v364, %v364
  %v523 = vpack.c.bf16 %v367, %v367
  %v524 = vpack.c.bf16 %v369, %v369
  %v525 = vpack.c.bf16 %v372, %v372
  %v526 = vpack.c.bf16 %v374, %v374
  %v527 = vpack.c.bf16 %v377, %v377
  %v528 = vpack.c.bf16 %v379, %v379
  %v529 = vpack.c.bf16 %v382, %v382
  %v530 = vpack.c.bf16 %v384, %v384
  %v531 = vpack.c.bf16 %v387, %v387
  %v532 = vpack.c.bf16 %v389, %v389
  %v533 = vpack.c.bf16 %v392, %v392
  %v534 = vpack.c.bf16 %v394, %v394
  %v535 = vpack.c.bf16 %v397, %v397
  %v536 = vpack.c.bf16 %v399, %v399
  %v537 = vpack.c.bf16 %v402, %v402
  %v538 = vpack.c.bf16 %v404, %v404
  %v539 = vpack.c.bf16 %v407, %v407
  %v540 = vpack.c.bf16 %v409, %v409
  %v541 = vpack.c.bf16 %v412, %v412
  %v542 = vpack.c.bf16 %v414, %v414
  %v543 = vpack.c.bf16 %v417, %v417
  %v544 = vpack.c.bf16 %v419, %v419
  %v545 = vpack.c.bf16 %v422, %v422
  %v546 = vpack.c.bf16 %v424, %v424
  %v547 = vpack.c.bf16 %v427, %v427
  %v548 = vpack.c.bf16 %v429, %v429
  %v549 = vpack.c.bf16 %v432, %v432
  %v550 = vpack.c.bf16 %v434, %v434
  %v551 = vpack.c.bf16 %v437, %v437
  %v552 = vpack.c.bf16 %v439, %v439
  %v553 = vpack.c.bf16 %v442, %v442
  %v554 = vpack.c.bf16 %v444, %v444
  %v555 = vpack.c.bf16 %v447, %v447
  %v556 = vpack.c.bf16 %v449, %v449
  %v557 = vpack.c.bf16 %v452, %v452
  %v558 = vpack.c.bf16 %v454, %v454
  %v559 = vpack.c.bf16 %v457, %v457
  %v560 = vpack.c.bf16 %v459, %v459
  %v561 = vpack.c.bf16 %v462, %v462
  %v562 = vpack.c.bf16 %v464, %v464
  %v563 = vpack.c.bf16 %v467, %v467
  %v564 = vpack.c.bf16 %v469, %v469
  %v565 = vpack.c.bf16 %v472, %v472
  %v566 = vpack.c.bf16 %v474, %v474
  %v567 = vpack.c.bf16 %v477, %v477
  %v568 = vpack.c.bf16 %v479, %v479
  %v569 = vpack.c.bf16 %v482, %v482
  %v570 = vpack.c.bf16 %v484, %v484
  %v571 = vpack.c.bf16 %v487, %v487
  %v572 = vpack.c.bf16 %v489, %v489
  %v573 = vpack.c.bf16 %v492, %v492
  %v574 = vpack.c.bf16 %v494, %v494
  %v575 = vpack.c.bf16 %v497, %v497
  %v576 = vpack.c.bf16 %v499, %v499
  %v577 = vpack.c.bf16 %v502, %v502
  %v578 = vpack.c.bf16 %v504, %v504
  %v579 = vpack.c.bf16 %v507, %v507
  %v580 = vpack.c.bf16 %v509, %v509
  %v581 = vpack.c.bf16 %v512, %v512
  %v582 = vpack.c.bf16 %v514, %v514
  %v583 = vpack.c.bf16 %v517, %v517
  %v584 = vpack.c.bf16 %v519, %v519
  %vm585 = vcmask 257024
  %586 = vst.msk [vmem:[%s2] sm:$0xf] %vm585, %v521
  %587 = vst.msk [vmem:[%s2 + $0x4] sm:$0xf] %vm585, %v522
  %588 = vst.msk [vmem:[%s2 + $0x8] sm:$0xf] %vm585, %v523
  %589 = vst.msk [vmem:[%s2 + $0xc] sm:$0xf] %vm585, %v524
  %590 = vst.msk [vmem:[%s2 + $0x10] sm:$0xf] %vm585, %v525
  %591 = vst.msk [vmem:[%s2 + $0x14] sm:$0xf] %vm585, %v526
  %592 = vst.msk [vmem:[%s2 + $0x18] sm:$0xf] %vm585, %v527
  %593 = vst.msk [vmem:[%s2 + $0x1c] sm:$0xf] %vm585, %v528
  %594 = vst.msk [vmem:[%s2 + $0x20] sm:$0xf] %vm585, %v529
  %595 = vst.msk [vmem:[%s2 + $0x24] sm:$0xf] %vm585, %v530
  %596 = vst.msk [vmem:[%s2 + $0x28] sm:$0xf] %vm585, %v531
  %597 = vst.msk [vmem:[%s2 + $0x2c] sm:$0xf] %vm585, %v532
  %598 = vst.msk [vmem:[%s2 + $0x30] sm:$0xf] %vm585, %v533
  %599 = vst.msk [vmem:[%s2 + $0x34] sm:$0xf] %vm585, %v534
  %600 = vst.msk [vmem:[%s2 + $0x38] sm:$0xf] %vm585, %v535
  %601 = vst.msk [vmem:[%s2 + $0x3c] sm:$0xf] %vm585, %v536
  %602 = vst.msk [vmem:[%s2 + $0x40] sm:$0xf] %vm585, %v537
  %603 = vst.msk [vmem:[%s2 + $0x44] sm:$0xf] %vm585, %v538
  %604 = vst.msk [vmem:[%s2 + $0x48] sm:$0xf] %vm585, %v539
  %605 = vst.msk [vmem:[%s2 + $0x4c] sm:$0xf] %vm585, %v540
  %606 = vst.msk [vmem:[%s2 + $0x50] sm:$0xf] %vm585, %v541
  %607 = vst.msk [vmem:[%s2 + $0x54] sm:$0xf] %vm585, %v542
  %608 = vst.msk [vmem:[%s2 + $0x58] sm:$0xf] %vm585, %v543
  %609 = vst.msk [vmem:[%s2 + $0x5c] sm:$0xf] %vm585, %v544
  %610 = vst.msk [vmem:[%s2 + $0x60] sm:$0xf] %vm585, %v545
  %611 = vst.msk [vmem:[%s2 + $0x64] sm:$0xf] %vm585, %v546
  %612 = vst.msk [vmem:[%s2 + $0x68] sm:$0xf] %vm585, %v547
  %613 = vst.msk [vmem:[%s2 + $0x6c] sm:$0xf] %vm585, %v548
  %614 = vst.msk [vmem:[%s2 + $0x70] sm:$0xf] %vm585, %v549
  %615 = vst.msk [vmem:[%s2 + $0x74] sm:$0xf] %vm585, %v550
  %616 = vst.msk [vmem:[%s2 + $0x78] sm:$0xf] %vm585, %v551
  %617 = vst.msk [vmem:[%s2 + $0x7c] sm:$0xf] %vm585, %v552
  %618 = vst.msk [vmem:[%s2 + $0x80] sm:$0xf] %vm585, %v553
  %619 = vst.msk [vmem:[%s2 + $0x84] sm:$0xf] %vm585, %v554
  %620 = vst.msk [vmem:[%s2 + $0x88] sm:$0xf] %vm585, %v555
  %621 = vst.msk [vmem:[%s2 + $0x8c] sm:$0xf] %vm585, %v556
  %622 = vst.msk [vmem:[%s2 + $0x90] sm:$0xf] %vm585, %v557
  %623 = vst.msk [vmem:[%s2 + $0x94] sm:$0xf] %vm585, %v558
  %624 = vst.msk [vmem:[%s2 + $0x98] sm:$0xf] %vm585, %v559
  %625 = vst.msk [vmem:[%s2 + $0x9c] sm:$0xf] %vm585, %v560
  %626 = vst.msk [vmem:[%s2 + $0xa0] sm:$0xf] %vm585, %v561
  %627 = vst.msk [vmem:[%s2 + $0xa4] sm:$0xf] %vm585, %v562
  %628 = vst.msk [vmem:[%s2 + $0xa8] sm:$0xf] %vm585, %v563
  %629 = vst.msk [vmem:[%s2 + $0xac] sm:$0xf] %vm585, %v564
  %630 = vst.msk [vmem:[%s2 + $0xb0] sm:$0xf] %vm585, %v565
  %631 = vst.msk [vmem:[%s2 + $0xb4] sm:$0xf] %vm585, %v566
  %632 = vst.msk [vmem:[%s2 + $0xb8] sm:$0xf] %vm585, %v567
  %633 = vst.msk [vmem:[%s2 + $0xbc] sm:$0xf] %vm585, %v568
  %634 = vst.msk [vmem:[%s2 + $0xc0] sm:$0xf] %vm585, %v569
  %635 = vst.msk [vmem:[%s2 + $0xc4] sm:$0xf] %vm585, %v570
  %636 = vst.msk [vmem:[%s2 + $0xc8] sm:$0xf] %vm585, %v571
  %637 = vst.msk [vmem:[%s2 + $0xcc] sm:$0xf] %vm585, %v572
  %638 = vst.msk [vmem:[%s2 + $0xd0] sm:$0xf] %vm585, %v573
  %639 = vst.msk [vmem:[%s2 + $0xd4] sm:$0xf] %vm585, %v574
  %640 = vst.msk [vmem:[%s2 + $0xd8] sm:$0xf] %vm585, %v575
  %641 = vst.msk [vmem:[%s2 + $0xdc] sm:$0xf] %vm585, %v576
  %642 = vst.msk [vmem:[%s2 + $0xe0] sm:$0xf] %vm585, %v577
  %643 = vst.msk [vmem:[%s2 + $0xe4] sm:$0xf] %vm585, %v578
  %644 = vst.msk [vmem:[%s2 + $0xe8] sm:$0xf] %vm585, %v579
  %645 = vst.msk [vmem:[%s2 + $0xec] sm:$0xf] %vm585, %v580
  %646 = vst.msk [vmem:[%s2 + $0xf0] sm:$0xf] %vm585, %v581
  %647 = vst.msk [vmem:[%s2 + $0xf4] sm:$0xf] %vm585, %v582
  %648 = vst.msk [vmem:[%s2 + $0xf8] sm:$0xf] %vm585, %v583
  %649 = vst.msk [vmem:[%s2 + $0xfc] sm:$0xf] %vm585, %v584
  %v650 = vunpack.c.l.bf16 %v521
  %v651 = vunpack.c.l.bf16 %v522
  %v652 = vunpack.c.l.bf16 %v523
  %v653 = vunpack.c.l.bf16 %v524
  %v654 = vunpack.c.l.bf16 %v525
  %v655 = vunpack.c.l.bf16 %v526
  %v656 = vunpack.c.l.bf16 %v527
  %v657 = vunpack.c.l.bf16 %v528
  %v658 = vunpack.c.l.bf16 %v529
  %v659 = vunpack.c.l.bf16 %v530
  %v660 = vunpack.c.l.bf16 %v531
  %v661 = vunpack.c.l.bf16 %v532
  %v662 = vunpack.c.l.bf16 %v533
  %v663 = vunpack.c.l.bf16 %v534
  %v664 = vunpack.c.l.bf16 %v535
  %v665 = vunpack.c.l.bf16 %v536
  %v666 = vunpack.c.l.bf16 %v537
  %v667 = vunpack.c.l.bf16 %v538
  %v668 = vunpack.c.l.bf16 %v539
  %v669 = vunpack.c.l.bf16 %v540
  %v670 = vunpack.c.l.bf16 %v541
  %v671 = vunpack.c.l.bf16 %v542
  %v672 = vunpack.c.l.bf16 %v543
  %v673 = vunpack.c.l.bf16 %v544
  %v674 = vunpack.c.l.bf16 %v545
  %v675 = vunpack.c.l.bf16 %v546
  %v676 = vunpack.c.l.bf16 %v547
  %v677 = vunpack.c.l.bf16 %v548
  %v678 = vunpack.c.l.bf16 %v549
  %v679 = vunpack.c.l.bf16 %v550
  %v680 = vunpack.c.l.bf16 %v551
  %v681 = vunpack.c.l.bf16 %v552
  %v682 = vunpack.c.l.bf16 %v553
  %v683 = vunpack.c.l.bf16 %v554
  %v684 = vunpack.c.l.bf16 %v555
  %v685 = vunpack.c.l.bf16 %v556
  %v686 = vunpack.c.l.bf16 %v557
  %v687 = vunpack.c.l.bf16 %v558
  %v688 = vunpack.c.l.bf16 %v559
  %v689 = vunpack.c.l.bf16 %v560
  %v690 = vunpack.c.l.bf16 %v561
  %v691 = vunpack.c.l.bf16 %v562
  %v692 = vunpack.c.l.bf16 %v563
  %v693 = vunpack.c.l.bf16 %v564
  %v694 = vunpack.c.l.bf16 %v565
  %v695 = vunpack.c.l.bf16 %v566
  %v696 = vunpack.c.l.bf16 %v567
  %v697 = vunpack.c.l.bf16 %v568
  %v698 = vunpack.c.l.bf16 %v569
  %v699 = vunpack.c.l.bf16 %v570
  %v700 = vunpack.c.l.bf16 %v571
  %v701 = vunpack.c.l.bf16 %v572
  %v702 = vunpack.c.l.bf16 %v573
  %v703 = vunpack.c.l.bf16 %v574
  %v704 = vunpack.c.l.bf16 %v575
  %v705 = vunpack.c.l.bf16 %v576
  %v706 = vunpack.c.l.bf16 %v577
  %v707 = vunpack.c.l.bf16 %v578
  %v708 = vunpack.c.l.bf16 %v579
  %v709 = vunpack.c.l.bf16 %v580
  %v710 = vunpack.c.l.bf16 %v581
  %v711 = vunpack.c.l.bf16 %v582
  %v712 = vunpack.c.l.bf16 %v583
  %v713 = vunpack.c.l.bf16 %v584
  %v714 = vsel %vm255, %v650, 0.0
  %v715 = vsel %vm255, %v651, 0.0
  %v716 = vadd.f32 %v714, %v715
  %v717 = vsel %vm255, %v652, 0.0
  %v718 = vadd.f32 %v716, %v717
  %v719 = vsel %vm255, %v653, 0.0
  %v720 = vadd.f32 %v718, %v719
  %v721 = vsel %vm255, %v654, 0.0
  %v722 = vadd.f32 %v720, %v721
  %v723 = vsel %vm255, %v655, 0.0
  %v724 = vadd.f32 %v722, %v723
  %v725 = vsel %vm255, %v656, 0.0
  %v726 = vadd.f32 %v724, %v725
  %v727 = vsel %vm255, %v657, 0.0
  %v728 = vadd.f32 %v726, %v727
  %v729 = vsel %vm255, %v658, 0.0
  %v730 = vadd.f32 %v728, %v729
  %v731 = vsel %vm255, %v659, 0.0
  %v732 = vadd.f32 %v730, %v731
  %v733 = vsel %vm255, %v660, 0.0
  %v734 = vadd.f32 %v732, %v733
  %v735 = vsel %vm255, %v661, 0.0
  %v736 = vadd.f32 %v734, %v735
  %v737 = vsel %vm255, %v662, 0.0
  %v738 = vadd.f32 %v736, %v737
  %v739 = vsel %vm255, %v663, 0.0
  %v740 = vadd.f32 %v738, %v739
  %v741 = vsel %vm255, %v664, 0.0
  %v742 = vadd.f32 %v740, %v741
  %v743 = vsel %vm255, %v665, 0.0
  %v744 = vadd.f32 %v742, %v743
  %v745 = vsel %vm255, %v666, 0.0
  %v746 = vadd.f32 %v744, %v745
  %v747 = vsel %vm255, %v667, 0.0
  %v748 = vadd.f32 %v746, %v747
  %v749 = vsel %vm255, %v668, 0.0
  %v750 = vadd.f32 %v748, %v749
  %v751 = vsel %vm255, %v669, 0.0
  %v752 = vadd.f32 %v750, %v751
  %v753 = vsel %vm255, %v670, 0.0
  %v754 = vadd.f32 %v752, %v753
  %v755 = vsel %vm255, %v671, 0.0
  %v756 = vadd.f32 %v754, %v755
  %v757 = vsel %vm255, %v672, 0.0
  %v758 = vadd.f32 %v756, %v757
  %v759 = vsel %vm255, %v673, 0.0
  %v760 = vadd.f32 %v758, %v759
  %v761 = vsel %vm255, %v674, 0.0
  %v762 = vadd.f32 %v760, %v761
  %v763 = vsel %vm255, %v675, 0.0
  %v764 = vadd.f32 %v762, %v763
  %v765 = vsel %vm255, %v676, 0.0
  %v766 = vadd.f32 %v764, %v765
  %v767 = vsel %vm255, %v677, 0.0
  %v768 = vadd.f32 %v766, %v767
  %v769 = vsel %vm255, %v678, 0.0
  %v770 = vadd.f32 %v768, %v769
  %v771 = vsel %vm255, %v679, 0.0
  %v772 = vadd.f32 %v770, %v771
  %v773 = vsel %vm255, %v680, 0.0
  %v774 = vadd.f32 %v772, %v773
  %v775 = vsel %vm255, %v681, 0.0
  %v776 = vadd.f32 %v774, %v775
  %v777 = vsel %vm255, %v682, 0.0
  %v778 = vadd.f32 %v776, %v777
  %v779 = vsel %vm255, %v683, 0.0
  %v780 = vadd.f32 %v778, %v779
  %v781 = vsel %vm255, %v684, 0.0
  %v782 = vadd.f32 %v780, %v781
  %v783 = vsel %vm255, %v685, 0.0
  %v784 = vadd.f32 %v782, %v783
  %v785 = vsel %vm255, %v686, 0.0
  %v786 = vadd.f32 %v784, %v785
  %v787 = vsel %vm255, %v687, 0.0
  %v788 = vadd.f32 %v786, %v787
  %v789 = vsel %vm255, %v688, 0.0
  %v790 = vadd.f32 %v788, %v789
  %v791 = vsel %vm255, %v689, 0.0
  %v792 = vadd.f32 %v790, %v791
  %v793 = vsel %vm255, %v690, 0.0
  %v794 = vadd.f32 %v792, %v793
  %v795 = vsel %vm255, %v691, 0.0
  %v796 = vadd.f32 %v794, %v795
  %v797 = vsel %vm255, %v692, 0.0
  %v798 = vadd.f32 %v796, %v797
  %v799 = vsel %vm255, %v693, 0.0
  %v800 = vadd.f32 %v798, %v799
  %v801 = vsel %vm255, %v694, 0.0
  %v802 = vadd.f32 %v800, %v801
  %v803 = vsel %vm255, %v695, 0.0
  %v804 = vadd.f32 %v802, %v803
  %v805 = vsel %vm255, %v696, 0.0
  %v806 = vadd.f32 %v804, %v805
  %v807 = vsel %vm255, %v697, 0.0
  %v808 = vadd.f32 %v806, %v807
  %v809 = vsel %vm255, %v698, 0.0
  %v810 = vadd.f32 %v808, %v809
  %v811 = vsel %vm255, %v699, 0.0
  %v812 = vadd.f32 %v810, %v811
  %v813 = vsel %vm255, %v700, 0.0
  %v814 = vadd.f32 %v812, %v813
  %v815 = vsel %vm255, %v701, 0.0
  %v816 = vadd.f32 %v814, %v815
  %v817 = vsel %vm255, %v702, 0.0
  %v818 = vadd.f32 %v816, %v817
  %v819 = vsel %vm255, %v703, 0.0
  %v820 = vadd.f32 %v818, %v819
  %v821 = vsel %vm255, %v704, 0.0
  %v822 = vadd.f32 %v820, %v821
  %v823 = vsel %vm255, %v705, 0.0
  %v824 = vadd.f32 %v822, %v823
  %v825 = vsel %vm255, %v706, 0.0
  %v826 = vadd.f32 %v824, %v825
  %v827 = vsel %vm255, %v707, 0.0
  %v828 = vadd.f32 %v826, %v827
  %v829 = vsel %vm255, %v708, 0.0
  %v830 = vadd.f32 %v828, %v829
  %v831 = vsel %vm255, %v709, 0.0
  %v832 = vadd.f32 %v830, %v831
  %v833 = vsel %vm255, %v710, 0.0
  %v834 = vadd.f32 %v832, %v833
  %v835 = vsel %vm255, %v711, 0.0
  %v836 = vadd.f32 %v834, %v835
  %v837 = vsel %vm255, %v712, 0.0
  %v838 = vadd.f32 %v836, %v837
  %v839 = vsel %vm255, %v713, 0.0
  %v840 = vadd.f32 %v838, %v839
  %v841 = vrot.slane %v840, 4
  %v842 = vadd.f32 %v840, %v841
  %v843 = vrot.slane %v842, 2
  %v844 = vadd.f32 %v842, %v843
  %v845 = vrot.slane %v844, 1
  %v846 = vadd.f32 %v844, %v845
  %vm847 = vcmask 253952
  %848 = vst.msk [vmem:[%s3] sm:$0x1] %vm847, %v846
  %v849 = vmul.f32 %v650, %v650
  %v850 = vmul.f32 %v651, %v651
  %v851 = vmul.f32 %v652, %v652
  %v852 = vmul.f32 %v653, %v653
  %v853 = vmul.f32 %v654, %v654
  %v854 = vmul.f32 %v655, %v655
  %v855 = vmul.f32 %v656, %v656
  %v856 = vmul.f32 %v657, %v657
  %v857 = vmul.f32 %v658, %v658
  %v858 = vmul.f32 %v659, %v659
  %v859 = vmul.f32 %v660, %v660
  %v860 = vmul.f32 %v661, %v661
  %v861 = vmul.f32 %v662, %v662
  %v862 = vmul.f32 %v663, %v663
  %v863 = vmul.f32 %v664, %v664
  %v864 = vmul.f32 %v665, %v665
  %v865 = vmul.f32 %v666, %v666
  %v866 = vmul.f32 %v667, %v667
  %v867 = vmul.f32 %v668, %v668
  %v868 = vmul.f32 %v669, %v669
  %v869 = vmul.f32 %v670, %v670
  %v870 = vmul.f32 %v671, %v671
  %v871 = vmul.f32 %v672, %v672
  %v872 = vmul.f32 %v673, %v673
  %v873 = vmul.f32 %v674, %v674
  %v874 = vmul.f32 %v675, %v675
  %v875 = vmul.f32 %v676, %v676
  %v876 = vmul.f32 %v677, %v677
  %v877 = vmul.f32 %v678, %v678
  %v878 = vmul.f32 %v679, %v679
  %v879 = vmul.f32 %v680, %v680
  %v880 = vmul.f32 %v681, %v681
  %v881 = vmul.f32 %v682, %v682
  %v882 = vmul.f32 %v683, %v683
  %v883 = vmul.f32 %v684, %v684
  %v884 = vmul.f32 %v685, %v685
  %v885 = vmul.f32 %v686, %v686
  %v886 = vmul.f32 %v687, %v687
  %v887 = vmul.f32 %v688, %v688
  %v888 = vmul.f32 %v689, %v689
  %v889 = vmul.f32 %v690, %v690
  %v890 = vmul.f32 %v691, %v691
  %v891 = vmul.f32 %v692, %v692
  %v892 = vmul.f32 %v693, %v693
  %v893 = vmul.f32 %v694, %v694
  %v894 = vmul.f32 %v695, %v695
  %v895 = vmul.f32 %v696, %v696
  %v896 = vmul.f32 %v697, %v697
  %v897 = vmul.f32 %v698, %v698
  %v898 = vmul.f32 %v699, %v699
  %v899 = vmul.f32 %v700, %v700
  %v900 = vmul.f32 %v701, %v701
  %v901 = vmul.f32 %v702, %v702
  %v902 = vmul.f32 %v703, %v703
  %v903 = vmul.f32 %v704, %v704
  %v904 = vmul.f32 %v705, %v705
  %v905 = vmul.f32 %v706, %v706
  %v906 = vmul.f32 %v707, %v707
  %v907 = vmul.f32 %v708, %v708
  %v908 = vmul.f32 %v709, %v709
  %v909 = vmul.f32 %v710, %v710
  %v910 = vmul.f32 %v711, %v711
  %v911 = vmul.f32 %v712, %v712
  %v912 = vmul.f32 %v713, %v713
  %v913 = vsel %vm255, %v849, 0.0
  %v914 = vsel %vm255, %v850, 0.0
  %v915 = vadd.f32 %v913, %v914
  %v916 = vsel %vm255, %v851, 0.0
  %v917 = vadd.f32 %v915, %v916
  %v918 = vsel %vm255, %v852, 0.0
  %v919 = vadd.f32 %v917, %v918
  %v920 = vsel %vm255, %v853, 0.0
  %v921 = vadd.f32 %v919, %v920
  %v922 = vsel %vm255, %v854, 0.0
  %v923 = vadd.f32 %v921, %v922
  %v924 = vsel %vm255, %v855, 0.0
  %v925 = vadd.f32 %v923, %v924
  %v926 = vsel %vm255, %v856, 0.0
  %v927 = vadd.f32 %v925, %v926
  %v928 = vsel %vm255, %v857, 0.0
  %v929 = vadd.f32 %v927, %v928
  %v930 = vsel %vm255, %v858, 0.0
  %v931 = vadd.f32 %v929, %v930
  %v932 = vsel %vm255, %v859, 0.0
  %v933 = vadd.f32 %v931, %v932
  %v934 = vsel %vm255, %v860, 0.0
  %v935 = vadd.f32 %v933, %v934
  %v936 = vsel %vm255, %v861, 0.0
  %v937 = vadd.f32 %v935, %v936
  %v938 = vsel %vm255, %v862, 0.0
  %v939 = vadd.f32 %v937, %v938
  %v940 = vsel %vm255, %v863, 0.0
  %v941 = vadd.f32 %v939, %v940
  %v942 = vsel %vm255, %v864, 0.0
  %v943 = vadd.f32 %v941, %v942
  %v944 = vsel %vm255, %v865, 0.0
  %v945 = vadd.f32 %v943, %v944
  %v946 = vsel %vm255, %v866, 0.0
  %v947 = vadd.f32 %v945, %v946
  %v948 = vsel %vm255, %v867, 0.0
  %v949 = vadd.f32 %v947, %v948
  %v950 = vsel %vm255, %v868, 0.0
  %v951 = vadd.f32 %v949, %v950
  %v952 = vsel %vm255, %v869, 0.0
  %v953 = vadd.f32 %v951, %v952
  %v954 = vsel %vm255, %v870, 0.0
  %v955 = vadd.f32 %v953, %v954
  %v956 = vsel %vm255, %v871, 0.0
  %v957 = vadd.f32 %v955, %v956
  %v958 = vsel %vm255, %v872, 0.0
  %v959 = vadd.f32 %v957, %v958
  %v960 = vsel %vm255, %v873, 0.0
  %v961 = vadd.f32 %v959, %v960
  %v962 = vsel %vm255, %v874, 0.0
  %v963 = vadd.f32 %v961, %v962
  %v964 = vsel %vm255, %v875, 0.0
  %v965 = vadd.f32 %v963, %v964
  %v966 = vsel %vm255, %v876, 0.0
  %v967 = vadd.f32 %v965, %v966
  %v968 = vsel %vm255, %v877, 0.0
  %v969 = vadd.f32 %v967, %v968
  %v970 = vsel %vm255, %v878, 0.0
  %v971 = vadd.f32 %v969, %v970
  %v972 = vsel %vm255, %v879, 0.0
  %v973 = vadd.f32 %v971, %v972
  %v974 = vsel %vm255, %v880, 0.0
  %v975 = vadd.f32 %v973, %v974
  %v976 = vsel %vm255, %v881, 0.0
  %v977 = vadd.f32 %v975, %v976
  %v978 = vsel %vm255, %v882, 0.0
  %v979 = vadd.f32 %v977, %v978
  %v980 = vsel %vm255, %v883, 0.0
  %v981 = vadd.f32 %v979, %v980
  %v982 = vsel %vm255, %v884, 0.0
  %v983 = vadd.f32 %v981, %v982
  %v984 = vsel %vm255, %v885, 0.0
  %v985 = vadd.f32 %v983, %v984
  %v986 = vsel %vm255, %v886, 0.0
  %v987 = vadd.f32 %v985, %v986
  %v988 = vsel %vm255, %v887, 0.0
  %v989 = vadd.f32 %v987, %v988
  %v990 = vsel %vm255, %v888, 0.0
  %v991 = vadd.f32 %v989, %v990
  %v992 = vsel %vm255, %v889, 0.0
  %v993 = vadd.f32 %v991, %v992
  %v994 = vsel %vm255, %v890, 0.0
  %v995 = vadd.f32 %v993, %v994
  %v996 = vsel %vm255, %v891, 0.0
  %v997 = vadd.f32 %v995, %v996
  %v998 = vsel %vm255, %v892, 0.0
  %v999 = vadd.f32 %v997, %v998
  %v1000 = vsel %vm255, %v893, 0.0
  %v1001 = vadd.f32 %v999, %v1000
  %v1002 = vsel %vm255, %v894, 0.0
  %v1003 = vadd.f32 %v1001, %v1002
  %v1004 = vsel %vm255, %v895, 0.0
  %v1005 = vadd.f32 %v1003, %v1004
  %v1006 = vsel %vm255, %v896, 0.0
  %v1007 = vadd.f32 %v1005, %v1006
  %v1008 = vsel %vm255, %v897, 0.0
  %v1009 = vadd.f32 %v1007, %v1008
  %v1010 = vsel %vm255, %v898, 0.0
  %v1011 = vadd.f32 %v1009, %v1010
  %v1012 = vsel %vm255, %v899, 0.0
  %v1013 = vadd.f32 %v1011, %v1012
  %v1014 = vsel %vm255, %v900, 0.0
  %v1015 = vadd.f32 %v1013, %v1014
  %v1016 = vsel %vm255, %v901, 0.0
  %v1017 = vadd.f32 %v1015, %v1016
  %v1018 = vsel %vm255, %v902, 0.0
  %v1019 = vadd.f32 %v1017, %v1018
  %v1020 = vsel %vm255, %v903, 0.0
  %v1021 = vadd.f32 %v1019, %v1020
  %v1022 = vsel %vm255, %v904, 0.0
  %v1023 = vadd.f32 %v1021, %v1022
  %v1024 = vsel %vm255, %v905, 0.0
  %v1025 = vadd.f32 %v1023, %v1024
  %v1026 = vsel %vm255, %v906, 0.0
  %v1027 = vadd.f32 %v1025, %v1026
  %v1028 = vsel %vm255, %v907, 0.0
  %v1029 = vadd.f32 %v1027, %v1028
  %v1030 = vsel %vm255, %v908, 0.0
  %v1031 = vadd.f32 %v1029, %v1030
  %v1032 = vsel %vm255, %v909, 0.0
  %v1033 = vadd.f32 %v1031, %v1032
  %v1034 = vsel %vm255, %v910, 0.0
  %v1035 = vadd.f32 %v1033, %v1034
  %v1036 = vsel %vm255, %v911, 0.0
  %v1037 = vadd.f32 %v1035, %v1036
  %v1038 = vsel %vm255, %v912, 0.0
  %v1039 = vadd.f32 %v1037, %v1038
  %v1040 = vrot.slane %v1039, 4
  %v1041 = vadd.f32 %v1039, %v1040
  %v1042 = vrot.slane %v1041, 2
  %v1043 = vadd.f32 %v1041, %v1042
  %v1044 = vrot.slane %v1043, 1
  %v1045 = vadd.f32 %v1043, %v1044
  %1046 = vst.msk [vmem:[%s4] sm:$0x1] %vm847, %v1045
  // Predicated region
  $region10: #{pointgencon_forward.4} parent=0 // pred_check
    _
  $region11: #{pointgencon_forward.4} parent=0 // pred_check_branch
    %1048 = sbr.rel (0) target = $region13
  $region12: #{pointgencon_forward.4} parent=0 // pred_region
    _
  $region13: #{pointgencon_forward.4} parent=0 // pred_fallthru
    _
  // Predicated region
  $region14: #{pointgencon_forward.4} parent=0 // pred_check
    _
  $region15: #{pointgencon_forward.4} parent=0 // pred_check_branch
    %1050 = sbr.rel (0) target = $region17
  $region16: #{pointgencon_forward.4} parent=0 // pred_region
    _
  $region17: #{pointgencon_forward.4} parent=0 // pred_fallthru
    _
  // Predicated region
  $region18: #{pointgencon_forward.4} parent=0 // pred_check
    _
  $region19: #{pointgencon_forward.4} parent=0 // pred_check_branch
    %1052 = sbr.rel (0) target = $region21
  $region20: #{pointgencon_forward.4} parent=0 // pred_region
    _
  $region21: #{pointgencon_forward.4} parent=0 // pred_fallthru
    _
  // Predicated region
  $region22: #{pointgencon_forward.4} parent=0 // pred_check
    _
  $region23: #{pointgencon_forward.4} parent=0 // pred_check_branch
    %1054 = sbr.rel (0) target = $region25
  $region24: #{pointgencon_forward.4} parent=0 // pred_region
    _
  $region25: #{pointgencon_forward.4} parent=0 // pred_fallthru
    _
  // Predicated region
  $region26: #{pointgencon_forward.4} parent=0 // pred_check
    _
  $region27: #{pointgencon_forward.4} parent=0 // pred_check_branch
    %1056 = sbr.rel (0) target = $region29
  $region28: #{pointgencon_forward.4} parent=0 // pred_region
    _
  $region29: #{pointgencon_forward.4} parent=0 // pred_fallthru
    _
  // Predicated region
  $region30: #{pointgencon_forward.4} parent=0 // pred_check
    _
  $region31: #{pointgencon_forward.4} parent=0 // pred_check_branch
    %1058 = sbr.rel (0) target = $region33
  $region32: #{pointgencon_forward.4} parent=0 // pred_region
    _
  $region33: #{pointgencon_forward.4} parent=0 // pred_fallthru
    _

// kernel: pointgencon_forward.7
$region0: #{pointgencon_forward.7}
  #allocation0 [shape = 'u32[]', space=smem, size = 0x4, offset = 0x4, fixed_abs, tag = 'smem constant byte address 0x4 - core index']
  #allocation1 [shape = 'u32[72,128]{1,0:T(1,128)}', space=vmem, size = 0x9000, scoped, tag = 'internal scratch']
  %s0 = inlined_call_operand.vmem [shape: bf16[512,8], index: 0, kind: input, shape index: {}]
  %s1 = inlined_call_operand.vmem [shape: f32[1,8], index: 1, kind: input, shape index: {}]
  %s2 = inlined_call_operand.vmem [shape: f32[1,8], index: 2, kind: input, shape index: {}]
  %s3 = inlined_call_operand.vmem [shape: bf16[8,128], index: 3, kind: input, shape index: {}]
  %s4 = inlined_call_operand.vmem [shape: f32[1,128], index: 4, kind: input, shape index: {}]
  %s5 = inlined_call_operand.vmem [shape: bf16[512,128], index: 5, kind: output, shape index: {}]
  %s6 = sld [smem:[#allocation0]]
  $region30: #{pointgencon_forward.7} parent=0
    _
  %s8 = ssub.s32 1, %s6
  %s9 = scalar_select 0, %s8, %s6
  // Predicated region
  $region2: #{pointgencon_forward.7} parent=0 // pred_check
    _
  $region3: #{pointgencon_forward.7} parent=0 // pred_check_branch
    %11 = sbr.rel (0) target = $region5
  $region4: #{pointgencon_forward.7} parent=0 // pred_region
    _
  $region5: #{pointgencon_forward.7} parent=0 // pred_fallthru
    _
  // Predicated region
  $region6: #{pointgencon_forward.7} parent=0 // pred_check
    _
  $region7: #{pointgencon_forward.7} parent=0 // pred_check_branch
    %13 = sbr.rel (0) target = $region9
  $region8: #{pointgencon_forward.7} parent=0 // pred_region
    _
  $region9: #{pointgencon_forward.7} parent=0 // pred_fallthru
    _
  // Predicated region
  $region10: #{pointgencon_forward.7} parent=0 // pred_check
    _
  $region11: #{pointgencon_forward.7} parent=0 // pred_check_branch
    %15 = sbr.rel (0) target = $region13
  $region12: #{pointgencon_forward.7} parent=0 // pred_region
    _
  $region13: #{pointgencon_forward.7} parent=0 // pred_fallthru
    _
  // Predicated region
  $region14: #{pointgencon_forward.7} parent=0 // pred_check
    _
  $region15: #{pointgencon_forward.7} parent=0 // pred_check_branch
    %17 = sbr.rel (0) target = $region17
  $region16: #{pointgencon_forward.7} parent=0 // pred_region
    _
  $region17: #{pointgencon_forward.7} parent=0 // pred_fallthru
    _
  // Predicated region
  $region18: #{pointgencon_forward.7} parent=0 // pred_check
    _
  $region19: #{pointgencon_forward.7} parent=0 // pred_check_branch
    %19 = sbr.rel (0) target = $region21
  $region20: #{pointgencon_forward.7} parent=0 // pred_region
    _
  $region21: #{pointgencon_forward.7} parent=0 // pred_fallthru
    _
  %v21 = vld [vmem:[%s0] sm:$0xf]
  %v22 = vld [vmem:[%s0 + $0x4] sm:$0xf]
  %v23 = vld [vmem:[%s0 + $0x8] sm:$0xf]
  %v24 = vld [vmem:[%s0 + $0xc] sm:$0xf]
  %v25 = vld [vmem:[%s0 + $0x10] sm:$0xf]
  %v26 = vld [vmem:[%s0 + $0x14] sm:$0xf]
  %v27 = vld [vmem:[%s0 + $0x18] sm:$0xf]
  %v28 = vld [vmem:[%s0 + $0x1c] sm:$0xf]
  %v29 = vld [vmem:[%s0 + $0x20] sm:$0xf]
  %v30 = vld [vmem:[%s0 + $0x24] sm:$0xf]
  %v31 = vld [vmem:[%s0 + $0x28] sm:$0xf]
  %v32 = vld [vmem:[%s0 + $0x2c] sm:$0xf]
  %v33 = vld [vmem:[%s0 + $0x30] sm:$0xf]
  %v34 = vld [vmem:[%s0 + $0x34] sm:$0xf]
  %v35 = vld [vmem:[%s0 + $0x38] sm:$0xf]
  %v36 = vld [vmem:[%s0 + $0x3c] sm:$0xf]
  %v37 = vld [vmem:[%s0 + $0x40] sm:$0xf]
  %v38 = vld [vmem:[%s0 + $0x44] sm:$0xf]
  %v39 = vld [vmem:[%s0 + $0x48] sm:$0xf]
  %v40 = vld [vmem:[%s0 + $0x4c] sm:$0xf]
  %v41 = vld [vmem:[%s0 + $0x50] sm:$0xf]
  %v42 = vld [vmem:[%s0 + $0x54] sm:$0xf]
  %v43 = vld [vmem:[%s0 + $0x58] sm:$0xf]
  %v44 = vld [vmem:[%s0 + $0x5c] sm:$0xf]
  %v45 = vld [vmem:[%s0 + $0x60] sm:$0xf]
  %v46 = vld [vmem:[%s0 + $0x64] sm:$0xf]
  %v47 = vld [vmem:[%s0 + $0x68] sm:$0xf]
  %v48 = vld [vmem:[%s0 + $0x6c] sm:$0xf]
  %v49 = vld [vmem:[%s0 + $0x70] sm:$0xf]
  %v50 = vld [vmem:[%s0 + $0x74] sm:$0xf]
  %v51 = vld [vmem:[%s0 + $0x78] sm:$0xf]
  %v52 = vld [vmem:[%s0 + $0x7c] sm:$0xf]
  %v53 = vld [vmem:[%s0 + $0x80] sm:$0xf]
  %v54 = vld [vmem:[%s0 + $0x84] sm:$0xf]
  %v55 = vld [vmem:[%s0 + $0x88] sm:$0xf]
  %v56 = vld [vmem:[%s0 + $0x8c] sm:$0xf]
  %v57 = vld [vmem:[%s0 + $0x90] sm:$0xf]
  %v58 = vld [vmem:[%s0 + $0x94] sm:$0xf]
  %v59 = vld [vmem:[%s0 + $0x98] sm:$0xf]
  %v60 = vld [vmem:[%s0 + $0x9c] sm:$0xf]
  %v61 = vld [vmem:[%s0 + $0xa0] sm:$0xf]
  %v62 = vld [vmem:[%s0 + $0xa4] sm:$0xf]
  %v63 = vld [vmem:[%s0 + $0xa8] sm:$0xf]
  %v64 = vld [vmem:[%s0 + $0xac] sm:$0xf]
  %v65 = vld [vmem:[%s0 + $0xb0] sm:$0xf]
  %v66 = vld [vmem:[%s0 + $0xb4] sm:$0xf]
  %v67 = vld [vmem:[%s0 + $0xb8] sm:$0xf]
  %v68 = vld [vmem:[%s0 + $0xbc] sm:$0xf]
  %v69 = vld [vmem:[%s0 + $0xc0] sm:$0xf]
  %v70 = vld [vmem:[%s0 + $0xc4] sm:$0xf]
  %v71 = vld [vmem:[%s0 + $0xc8] sm:$0xf]
  %v72 = vld [vmem:[%s0 + $0xcc] sm:$0xf]
  %v73 = vld [vmem:[%s0 + $0xd0] sm:$0xf]
  %v74 = vld [vmem:[%s0 + $0xd4] sm:$0xf]
  %v75 = vld [vmem:[%s0 + $0xd8] sm:$0xf]
  %v76 = vld [vmem:[%s0 + $0xdc] sm:$0xf]
  %v77 = vld [vmem:[%s0 + $0xe0] sm:$0xf]
  %v78 = vld [vmem:[%s0 + $0xe4] sm:$0xf]
  %v79 = vld [vmem:[%s0 + $0xe8] sm:$0xf]
  %v80 = vld [vmem:[%s0 + $0xec] sm:$0xf]
  %v81 = vld [vmem:[%s0 + $0xf0] sm:$0xf]
  %v82 = vld [vmem:[%s0 + $0xf4] sm:$0xf]
  %v83 = vld [vmem:[%s0 + $0xf8] sm:$0xf]
  %v84 = vld [vmem:[%s0 + $0xfc] sm:$0xf]
  %v85 = vunpack.c.l.bf16 %v21
  %v86 = vunpack.c.l.bf16 %v22
  %v87 = vunpack.c.l.bf16 %v23
  %v88 = vunpack.c.l.bf16 %v24
  %v89 = vunpack.c.l.bf16 %v25
  %v90 = vunpack.c.l.bf16 %v26
  %v91 = vunpack.c.l.bf16 %v27
  %v92 = vunpack.c.l.bf16 %v28
  %v93 = vunpack.c.l.bf16 %v29
  %v94 = vunpack.c.l.bf16 %v30
  %v95 = vunpack.c.l.bf16 %v31
  %v96 = vunpack.c.l.bf16 %v32
  %v97 = vunpack.c.l.bf16 %v33
  %v98 = vunpack.c.l.bf16 %v34
  %v99 = vunpack.c.l.bf16 %v35
  %v100 = vunpack.c.l.bf16 %v36
  %v101 = vunpack.c.l.bf16 %v37
  %v102 = vunpack.c.l.bf16 %v38
  %v103 = vunpack.c.l.bf16 %v39
  %v104 = vunpack.c.l.bf16 %v40
  %v105 = vunpack.c.l.bf16 %v41
  %v106 = vunpack.c.l.bf16 %v42
  %v107 = vunpack.c.l.bf16 %v43
  %v108 = vunpack.c.l.bf16 %v44
  %v109 = vunpack.c.l.bf16 %v45
  %v110 = vunpack.c.l.bf16 %v46
  %v111 = vunpack.c.l.bf16 %v47
  %v112 = vunpack.c.l.bf16 %v48
  %v113 = vunpack.c.l.bf16 %v49
  %v114 = vunpack.c.l.bf16 %v50
  %v115 = vunpack.c.l.bf16 %v51
  %v116 = vunpack.c.l.bf16 %v52
  %v117 = vunpack.c.l.bf16 %v53
  %v118 = vunpack.c.l.bf16 %v54
  %v119 = vunpack.c.l.bf16 %v55
  %v120 = vunpack.c.l.bf16 %v56
  %v121 = vunpack.c.l.bf16 %v57
  %v122 = vunpack.c.l.bf16 %v58
  %v123 = vunpack.c.l.bf16 %v59
  %v124 = vunpack.c.l.bf16 %v60
  %v125 = vunpack.c.l.bf16 %v61
  %v126 = vunpack.c.l.bf16 %v62
  %v127 = vunpack.c.l.bf16 %v63
  %v128 = vunpack.c.l.bf16 %v64
  %v129 = vunpack.c.l.bf16 %v65
  %v130 = vunpack.c.l.bf16 %v66
  %v131 = vunpack.c.l.bf16 %v67
  %v132 = vunpack.c.l.bf16 %v68
  %v133 = vunpack.c.l.bf16 %v69
  %v134 = vunpack.c.l.bf16 %v70
  %v135 = vunpack.c.l.bf16 %v71
  %v136 = vunpack.c.l.bf16 %v72
  %v137 = vunpack.c.l.bf16 %v73
  %v138 = vunpack.c.l.bf16 %v74
  %v139 = vunpack.c.l.bf16 %v75
  %v140 = vunpack.c.l.bf16 %v76
  %v141 = vunpack.c.l.bf16 %v77
  %v142 = vunpack.c.l.bf16 %v78
  %v143 = vunpack.c.l.bf16 %v79
  %v144 = vunpack.c.l.bf16 %v80
  %v145 = vunpack.c.l.bf16 %v81
  %v146 = vunpack.c.l.bf16 %v82
  %v147 = vunpack.c.l.bf16 %v83
  %v148 = vunpack.c.l.bf16 %v84
  %v149 = vld [vmem:[%s1] sm:$0x1]
  %v151 = vperm.slane %v149, 0
  %v153 = vmul.f32 %v85, %v151
  %v154 = vmul.f32 %v86, %v151
  %v155 = vmul.f32 %v87, %v151
  %v156 = vmul.f32 %v88, %v151
  %v157 = vmul.f32 %v89, %v151
  %v158 = vmul.f32 %v90, %v151
  %v159 = vmul.f32 %v91, %v151
  %v160 = vmul.f32 %v92, %v151
  %v161 = vmul.f32 %v93, %v151
  %v162 = vmul.f32 %v94, %v151
  %v163 = vmul.f32 %v95, %v151
  %v164 = vmul.f32 %v96, %v151
  %v165 = vmul.f32 %v97, %v151
  %v166 = vmul.f32 %v98, %v151
  %v167 = vmul.f32 %v99, %v151
  %v168 = vmul.f32 %v100, %v151
  %v169 = vmul.f32 %v101, %v151
  %v170 = vmul.f32 %v102, %v151
  %v171 = vmul.f32 %v103, %v151
  %v172 = vmul.f32 %v104, %v151
  %v173 = vmul.f32 %v105, %v151
  %v174 = vmul.f32 %v106, %v151
  %v175 = vmul.f32 %v107, %v151
  %v176 = vmul.f32 %v108, %v151
  %v177 = vmul.f32 %v109, %v151
  %v178 = vmul.f32 %v110, %v151
  %v179 = vmul.f32 %v111, %v151
  %v180 = vmul.f32 %v112, %v151
  %v181 = vmul.f32 %v113, %v151
  %v182 = vmul.f32 %v114, %v151
  %v183 = vmul.f32 %v115, %v151
  %v184 = vmul.f32 %v116, %v151
  %v185 = vmul.f32 %v117, %v151
  %v186 = vmul.f32 %v118, %v151
  %v187 = vmul.f32 %v119, %v151
  %v188 = vmul.f32 %v120, %v151
  %v189 = vmul.f32 %v121, %v151
  %v190 = vmul.f32 %v122, %v151
  %v191 = vmul.f32 %v123, %v151
  %v192 = vmul.f32 %v124, %v151
  %v193 = vmul.f32 %v125, %v151
  %v194 = vmul.f32 %v126, %v151
  %v195 = vmul.f32 %v127, %v151
  %v196 = vmul.f32 %v128, %v151
  %v197 = vmul.f32 %v129, %v151
  %v198 = vmul.f32 %v130, %v151
  %v199 = vmul.f32 %v131, %v151
  %v200 = vmul.f32 %v132, %v151
  %v201 = vmul.f32 %v133, %v151
  %v202 = vmul.f32 %v134, %v151
  %v203 = vmul.f32 %v135, %v151
  %v204 = vmul.f32 %v136, %v151
  %v205 = vmul.f32 %v137, %v151
  %v206 = vmul.f32 %v138, %v151
  %v207 = vmul.f32 %v139, %v151
  %v208 = vmul.f32 %v140, %v151
  %v209 = vmul.f32 %v141, %v151
  %v210 = vmul.f32 %v142, %v151
  %v211 = vmul.f32 %v143, %v151
  %v212 = vmul.f32 %v144, %v151
  %v213 = vmul.f32 %v145, %v151
  %v214 = vmul.f32 %v146, %v151
  %v215 = vmul.f32 %v147, %v151
  %v216 = vmul.f32 %v148, %v151
  %v217 = vld [vmem:[%s2] sm:$0x1]
  %v219 = vperm.slane %v217, 0
  %v221 = vadd.f32 %v153, %v219
  %v222 = vadd.f32 %v154, %v219
  %v223 = vadd.f32 %v155, %v219
  %v224 = vadd.f32 %v156, %v219
  %v225 = vadd.f32 %v157, %v219
  %v226 = vadd.f32 %v158, %v219
  %v227 = vadd.f32 %v159, %v219
  %v228 = vadd.f32 %v160, %v219
  %v229 = vadd.f32 %v161, %v219
  %v230 = vadd.f32 %v162, %v219
  %v231 = vadd.f32 %v163, %v219
  %v232 = vadd.f32 %v164, %v219
  %v233 = vadd.f32 %v165, %v219
  %v234 = vadd.f32 %v166, %v219
  %v235 = vadd.f32 %v167, %v219
  %v236 = vadd.f32 %v168, %v219
  %v237 = vadd.f32 %v169, %v219
  %v238 = vadd.f32 %v170, %v219
  %v239 = vadd.f32 %v171, %v219
  %v240 = vadd.f32 %v172, %v219
  %v241 = vadd.f32 %v173, %v219
  %v242 = vadd.f32 %v174, %v219
  %v243 = vadd.f32 %v175, %v219
  %v244 = vadd.f32 %v176, %v219
  %v245 = vadd.f32 %v177, %v219
  %v246 = vadd.f32 %v178, %v219
  %v247 = vadd.f32 %v179, %v219
  %v248 = vadd.f32 %v180, %v219
  %v249 = vadd.f32 %v181, %v219
  %v250 = vadd.f32 %v182, %v219
  %v251 = vadd.f32 %v183, %v219
  %v252 = vadd.f32 %v184, %v219
  %v253 = vadd.f32 %v185, %v219
  %v254 = vadd.f32 %v186, %v219
  %v255 = vadd.f32 %v187, %v219
  %v256 = vadd.f32 %v188, %v219
  %v257 = vadd.f32 %v189, %v219
  %v258 = vadd.f32 %v190, %v219
  %v259 = vadd.f32 %v191, %v219
  %v260 = vadd.f32 %v192, %v219
  %v261 = vadd.f32 %v193, %v219
  %v262 = vadd.f32 %v194, %v219
  %v263 = vadd.f32 %v195, %v219
  %v264 = vadd.f32 %v196, %v219
  %v265 = vadd.f32 %v197, %v219
  %v266 = vadd.f32 %v198, %v219
  %v267 = vadd.f32 %v199, %v219
  %v268 = vadd.f32 %v200, %v219
  %v269 = vadd.f32 %v201, %v219
  %v270 = vadd.f32 %v202, %v219
  %v271 = vadd.f32 %v203, %v219
  %v272 = vadd.f32 %v204, %v219
  %v273 = vadd.f32 %v205, %v219
  %v274 = vadd.f32 %v206, %v219
  %v275 = vadd.f32 %v207, %v219
  %v276 = vadd.f32 %v208, %v219
  %v277 = vadd.f32 %v209, %v219
  %v278 = vadd.f32 %v210, %v219
  %v279 = vadd.f32 %v211, %v219
  %v280 = vadd.f32 %v212, %v219
  %v281 = vadd.f32 %v213, %v219
  %v282 = vadd.f32 %v214, %v219
  %v283 = vadd.f32 %v215, %v219
  %v284 = vadd.f32 %v216, %v219
  %v285 = vmax.f32 %v221, 0.0
  %v286 = vmax.f32 %v222, 0.0
  %v287 = vmax.f32 %v223, 0.0
  %v288 = vmax.f32 %v224, 0.0
  %v289 = vmax.f32 %v225, 0.0
  %v290 = vmax.f32 %v226, 0.0
  %v291 = vmax.f32 %v227, 0.0
  %v292 = vmax.f32 %v228, 0.0
  %v293 = vmax.f32 %v229, 0.0
  %v294 = vmax.f32 %v230, 0.0
  %v295 = vmax.f32 %v231, 0.0
  %v296 = vmax.f32 %v232, 0.0
  %v297 = vmax.f32 %v233, 0.0
  %v298 = vmax.f32 %v234, 0.0
  %v299 = vmax.f32 %v235, 0.0
  %v300 = vmax.f32 %v236, 0.0
  %v301 = vmax.f32 %v237, 0.0
  %v302 = vmax.f32 %v238, 0.0
  %v303 = vmax.f32 %v239, 0.0
  %v304 = vmax.f32 %v240, 0.0
  %v305 = vmax.f32 %v241, 0.0
  %v306 = vmax.f32 %v242, 0.0
  %v307 = vmax.f32 %v243, 0.0
  %v308 = vmax.f32 %v244, 0.0
  %v309 = vmax.f32 %v245, 0.0
  %v310 = vmax.f32 %v246, 0.0
  %v311 = vmax.f32 %v247, 0.0
  %v312 = vmax.f32 %v248, 0.0
  %v313 = vmax.f32 %v249, 0.0
  %v314 = vmax.f32 %v250, 0.0
  %v315 = vmax.f32 %v251, 0.0
  %v316 = vmax.f32 %v252, 0.0
  %v317 = vmax.f32 %v253, 0.0
  %v318 = vmax.f32 %v254, 0.0
  %v319 = vmax.f32 %v255, 0.0
  %v320 = vmax.f32 %v256, 0.0
  %v321 = vmax.f32 %v257, 0.0
  %v322 = vmax.f32 %v258, 0.0
  %v323 = vmax.f32 %v259, 0.0
  %v324 = vmax.f32 %v260, 0.0
  %v325 = vmax.f32 %v261, 0.0
  %v326 = vmax.f32 %v262, 0.0
  %v327 = vmax.f32 %v263, 0.0
  %v328 = vmax.f32 %v264, 0.0
  %v329 = vmax.f32 %v265, 0.0
  %v330 = vmax.f32 %v266, 0.0
  %v331 = vmax.f32 %v267, 0.0
  %v332 = vmax.f32 %v268, 0.0
  %v333 = vmax.f32 %v269, 0.0
  %v334 = vmax.f32 %v270, 0.0
  %v335 = vmax.f32 %v271, 0.0
  %v336 = vmax.f32 %v272, 0.0
  %v337 = vmax.f32 %v273, 0.0
  %v338 = vmax.f32 %v274, 0.0
  %v339 = vmax.f32 %v275, 0.0
  %v340 = vmax.f32 %v276, 0.0
  %v341 = vmax.f32 %v277, 0.0
  %v342 = vmax.f32 %v278, 0.0
  %v343 = vmax.f32 %v279, 0.0
  %v344 = vmax.f32 %v280, 0.0
  %v345 = vmax.f32 %v281, 0.0
  %v346 = vmax.f32 %v282, 0.0
  %v347 = vmax.f32 %v283, 0.0
  %v348 = vmax.f32 %v284, 0.0
  %v349 = vpack.c.bf16 %v286, %v285
  %v350 = vpack.c.bf16 %v288, %v287
  %v351 = vpack.c.bf16 %v290, %v289
  %v352 = vpack.c.bf16 %v292, %v291
  %v353 = vpack.c.bf16 %v294, %v293
  %v354 = vpack.c.bf16 %v296, %v295
  %v355 = vpack.c.bf16 %v298, %v297
  %v356 = vpack.c.bf16 %v300, %v299
  %v357 = vpack.c.bf16 %v302, %v301
  %v358 = vpack.c.bf16 %v304, %v303
  %v359 = vpack.c.bf16 %v306, %v305
  %v360 = vpack.c.bf16 %v308, %v307
  %v361 = vpack.c.bf16 %v310, %v309
  %v362 = vpack.c.bf16 %v312, %v311
  %v363 = vpack.c.bf16 %v314, %v313
  %v364 = vpack.c.bf16 %v316, %v315
  %v365 = vpack.c.bf16 %v318, %v317
  %v366 = vpack.c.bf16 %v320, %v319
  %v367 = vpack.c.bf16 %v322, %v321
  %v368 = vpack.c.bf16 %v324, %v323
  %v369 = vpack.c.bf16 %v326, %v325
  %v370 = vpack.c.bf16 %v328, %v327
  %v371 = vpack.c.bf16 %v330, %v329
  %v372 = vpack.c.bf16 %v332, %v331
  %v373 = vpack.c.bf16 %v334, %v333
  %v374 = vpack.c.bf16 %v336, %v335
  %v375 = vpack.c.bf16 %v338, %v337
  %v376 = vpack.c.bf16 %v340, %v339
  %v377 = vpack.c.bf16 %v342, %v341
  %v378 = vpack.c.bf16 %v344, %v343
  %v379 = vpack.c.bf16 %v346, %v345
  %v380 = vpack.c.bf16 %v348, %v347
  %v381 = vld [vmem:[%s3] sm:$0xf]
  %v382 = vld [vmem:[%s4] sm:$0x1]
  %v384 = vperm.slane %v382, 0
  %vm386 = vcmask 64512
  %v388 = vsel %vm386, %v349, 0
  %v391 = vsel %vm386, %v350, 0
  %v394 = vsel %vm386, %v351, 0
  %v397 = vsel %vm386, %v352, 0
  %v400 = vsel %vm386, %v353, 0
  %v403 = vsel %vm386, %v354, 0
  %v406 = vsel %vm386, %v355, 0
  %v409 = vsel %vm386, %v356, 0
  %v412 = vsel %vm386, %v357, 0
  %v415 = vsel %vm386, %v358, 0
  %v418 = vsel %vm386, %v359, 0
  %v421 = vsel %vm386, %v360, 0
  %v424 = vsel %vm386, %v361, 0
  %v427 = vsel %vm386, %v362, 0
  %v430 = vsel %vm386, %v363, 0
  %v433 = vsel %vm386, %v364, 0
  %v436 = vsel %vm386, %v365, 0
  %v439 = vsel %vm386, %v366, 0
  %v442 = vsel %vm386, %v367, 0
  %v445 = vsel %vm386, %v368, 0
  %v448 = vsel %vm386, %v369, 0
  %v451 = vsel %vm386, %v370, 0
  %v454 = vsel %vm386, %v371, 0
  %v457 = vsel %vm386, %v372, 0
  %v460 = vsel %vm386, %v373, 0
  %v463 = vsel %vm386, %v374, 0
  %v466 = vsel %vm386, %v375, 0
  %v469 = vsel %vm386, %v376, 0
  %v472 = vsel %vm386, %v377, 0
  %v475 = vsel %vm386, %v378, 0
  %v478 = vsel %vm386, %v379, 0
  %v481 = vsel %vm386, %v380, 0
  %vm483 = vcmask 1043456
  %v485 = vsel %vm483, %v381, 0
  %487 = vmatpush.bf16.msra.mxu0 0
  %488 = vmatpush.bf16.msra.mxu0 0
  %489 = vmatpush.bf16.msra.mxu0 0
  %490 = vmatpush.bf16.msra.mxu0 0
  %491 = vmatpush.bf16.msra.mxu0 0
  %492 = vmatpush.bf16.msra.mxu0 0
  %493 = vmatpush.bf16.msra.mxu0 0
  %494 = vmatpush.bf16.msra.mxu0 %v485
  %495 = vmatmul.bf16.gmra.mxu0 %v388
  %v496 = vpop.f32.mrf.mxu0
  %v497 = vadd.f32 %v384, %v496
  %v498 = vpop.f32.mrf.mxu0
  %v499 = vadd.f32 %v384, %v498
  %500 = vmatmul.bf16.gmra.mxu0 %v391
  %v501 = vpop.f32.mrf.mxu0
  %v502 = vadd.f32 %v384, %v501
  %v503 = vpop.f32.mrf.mxu0
  %v504 = vadd.f32 %v384, %v503
  %505 = vmatmul.bf16.gmra.mxu0 %v394
  %v506 = vpop.f32.mrf.mxu0
  %v507 = vadd.f32 %v384, %v506
  %v508 = vpop.f32.mrf.mxu0
  %v509 = vadd.f32 %v384, %v508
  %510 = vmatmul.bf16.gmra.mxu0 %v397
  %v511 = vpop.f32.mrf.mxu0
  %v512 = vadd.f32 %v384, %v511
  %v513 = vpop.f32.mrf.mxu0
  %v514 = vadd.f32 %v384, %v513
  %515 = vmatmul.bf16.gmra.mxu0 %v400
  %v516 = vpop.f32.mrf.mxu0
  %v517 = vadd.f32 %v384, %v516
  %v518 = vpop.f32.mrf.mxu0
  %v519 = vadd.f32 %v384, %v518
  %520 = vmatmul.bf16.gmra.mxu0 %v403
  %v521 = vpop.f32.mrf.mxu0
  %v522 = vadd.f32 %v384, %v521
  %v523 = vpop.f32.mrf.mxu0
  %v524 = vadd.f32 %v384, %v523
  %525 = vmatmul.bf16.gmra.mxu0 %v406
  %v526 = vpop.f32.mrf.mxu0
  %v527 = vadd.f32 %v384, %v526
  %v528 = vpop.f32.mrf.mxu0
  %v529 = vadd.f32 %v384, %v528
  %530 = vmatmul.bf16.gmra.mxu0 %v409
  %v531 = vpop.f32.mrf.mxu0
  %v532 = vadd.f32 %v384, %v531
  %v533 = vpop.f32.mrf.mxu0
  %v534 = vadd.f32 %v384, %v533
  %535 = vmatmul.bf16.gmra.mxu0 %v412
  %v536 = vpop.f32.mrf.mxu0
  %v537 = vadd.f32 %v384, %v536
  %v538 = vpop.f32.mrf.mxu0
  %v539 = vadd.f32 %v384, %v538
  %540 = vmatmul.bf16.gmra.mxu0 %v415
  %v541 = vpop.f32.mrf.mxu0
  %v542 = vadd.f32 %v384, %v541
  %v543 = vpop.f32.mrf.mxu0
  %v544 = vadd.f32 %v384, %v543
  %545 = vmatmul.bf16.gmra.mxu0 %v418
  %v546 = vpop.f32.mrf.mxu0
  %v547 = vadd.f32 %v384, %v546
  %v548 = vpop.f32.mrf.mxu0
  %v549 = vadd.f32 %v384, %v548
  %550 = vmatmul.bf16.gmra.mxu0 %v421
  %v551 = vpop.f32.mrf.mxu0
  %v552 = vadd.f32 %v384, %v551
  %v553 = vpop.f32.mrf.mxu0
  %v554 = vadd.f32 %v384, %v553
  %555 = vmatmul.bf16.gmra.mxu0 %v424
  %v556 = vpop.f32.mrf.mxu0
  %v557 = vadd.f32 %v384, %v556
  %v558 = vpop.f32.mrf.mxu0
  %v559 = vadd.f32 %v384, %v558
  %560 = vmatmul.bf16.gmra.mxu0 %v427
  %v561 = vpop.f32.mrf.mxu0
  %v562 = vadd.f32 %v384, %v561
  %v563 = vpop.f32.mrf.mxu0
  %v564 = vadd.f32 %v384, %v563
  %565 = vmatmul.bf16.gmra.mxu0 %v430
  %v566 = vpop.f32.mrf.mxu0
  %v567 = vadd.f32 %v384, %v566
  %v568 = vpop.f32.mrf.mxu0
  %v569 = vadd.f32 %v384, %v568
  %570 = vmatmul.bf16.gmra.mxu0 %v433
  %v571 = vpop.f32.mrf.mxu0
  %v572 = vadd.f32 %v384, %v571
  %v573 = vpop.f32.mrf.mxu0
  %v574 = vadd.f32 %v384, %v573
  %575 = vmatmul.bf16.gmra.mxu0 %v436
  %v576 = vpop.f32.mrf.mxu0
  %v577 = vadd.f32 %v384, %v576
  %v578 = vpop.f32.mrf.mxu0
  %v579 = vadd.f32 %v384, %v578
  %580 = vmatmul.bf16.gmra.mxu0 %v439
  %v581 = vpop.f32.mrf.mxu0
  %v582 = vadd.f32 %v384, %v581
  %v583 = vpop.f32.mrf.mxu0
  %v584 = vadd.f32 %v384, %v583
  %585 = vmatmul.bf16.gmra.mxu0 %v442
  %v586 = vpop.f32.mrf.mxu0
  %v587 = vadd.f32 %v384, %v586
  %v588 = vpop.f32.mrf.mxu0
  %v589 = vadd.f32 %v384, %v588
  %590 = vmatmul.bf16.gmra.mxu0 %v445
  %v591 = vpop.f32.mrf.mxu0
  %v592 = vadd.f32 %v384, %v591
  %v593 = vpop.f32.mrf.mxu0
  %v594 = vadd.f32 %v384, %v593
  %595 = vmatmul.bf16.gmra.mxu0 %v448
  %v596 = vpop.f32.mrf.mxu0
  %v597 = vadd.f32 %v384, %v596
  %v598 = vpop.f32.mrf.mxu0
  %v599 = vadd.f32 %v384, %v598
  %600 = vmatmul.bf16.gmra.mxu0 %v451
  %v601 = vpop.f32.mrf.mxu0
  %v602 = vadd.f32 %v384, %v601
  %v603 = vpop.f32.mrf.mxu0
  %v604 = vadd.f32 %v384, %v603
  %605 = vmatmul.bf16.gmra.mxu0 %v454
  %v606 = vpop.f32.mrf.mxu0
  %v607 = vadd.f32 %v384, %v606
  %v608 = vpop.f32.mrf.mxu0
  %v609 = vadd.f32 %v384, %v608
  %610 = vmatmul.bf16.gmra.mxu0 %v457
  %v611 = vpop.f32.mrf.mxu0
  %v612 = vadd.f32 %v384, %v611
  %v613 = vpop.f32.mrf.mxu0
  %v614 = vadd.f32 %v384, %v613
  %615 = vmatmul.bf16.gmra.mxu0 %v460
  %v616 = vpop.f32.mrf.mxu0
  %v617 = vadd.f32 %v384, %v616
  %v618 = vpop.f32.mrf.mxu0
  %v619 = vadd.f32 %v384, %v618
  %620 = vmatmul.bf16.gmra.mxu0 %v463
  %v621 = vpop.f32.mrf.mxu0
  %v622 = vadd.f32 %v384, %v621
  %v623 = vpop.f32.mrf.mxu0
  %v624 = vadd.f32 %v384, %v623
  %625 = vmatmul.bf16.gmra.mxu0 %v466
  %v626 = vpop.f32.mrf.mxu0
  %v627 = vadd.f32 %v384, %v626
  %v628 = vpop.f32.mrf.mxu0
  %v629 = vadd.f32 %v384, %v628
  %630 = vmatmul.bf16.gmra.mxu0 %v469
  %v631 = vpop.f32.mrf.mxu0
  %v632 = vadd.f32 %v384, %v631
  %v633 = vpop.f32.mrf.mxu0
  %v634 = vadd.f32 %v384, %v633
  %635 = vmatmul.bf16.gmra.mxu0 %v472
  %v636 = vpop.f32.mrf.mxu0
  %v637 = vadd.f32 %v384, %v636
  %v638 = vpop.f32.mrf.mxu0
  %v639 = vadd.f32 %v384, %v638
  %640 = vmatmul.bf16.gmra.mxu0 %v475
  %v641 = vpop.f32.mrf.mxu0
  %v642 = vadd.f32 %v384, %v641
  %v643 = vpop.f32.mrf.mxu0
  %v644 = vadd.f32 %v384, %v643
  %645 = vmatmul.bf16.gmra.mxu0 %v478
  %v646 = vpop.f32.mrf.mxu0
  %v647 = vadd.f32 %v384, %v646
  %v648 = vpop.f32.mrf.mxu0
  %v649 = vadd.f32 %v384, %v648
  %650 = vmatmul.bf16.gmra.mxu0 %v481
  %v651 = vpop.f32.mrf.mxu0
  %v652 = vadd.f32 %v384, %v651
  %v653 = vpop.f32.mrf.mxu0
  %v654 = vadd.f32 %v384, %v653
  %655 = vdwg.mxu0
  %v656 = vtanh.pop %v497
  %v657 = vtanh.pop %v499
  %v658 = vtanh.pop %v502
  %v659 = vtanh.pop %v504
  %v660 = vtanh.pop %v507
  %v661 = vtanh.pop %v509
  %v662 = vtanh.pop %v512
  %v663 = vtanh.pop %v514
  %v664 = vtanh.pop %v517
  %v665 = vtanh.pop %v519
  %v666 = vtanh.pop %v522
  %v667 = vtanh.pop %v524
  %v668 = vtanh.pop %v527
  %v669 = vtanh.pop %v529
  %v670 = vtanh.pop %v532
  %v671 = vtanh.pop %v534
  %v672 = vtanh.pop %v537
  %v673 = vtanh.pop %v539
  %v674 = vtanh.pop %v542
  %v675 = vtanh.pop %v544
  %v676 = vtanh.pop %v547
  %v677 = vtanh.pop %v549
  %v678 = vtanh.pop %v552
  %v679 = vtanh.pop %v554
  %v680 = vtanh.pop %v557
  %v681 = vtanh.pop %v559
  %v682 = vtanh.pop %v562
  %v683 = vtanh.pop %v564
  %v684 = vtanh.pop %v567
  %v685 = vtanh.pop %v569
  %v686 = vtanh.pop %v572
  %v687 = vtanh.pop %v574
  %v688 = vtanh.pop %v577
  %v689 = vtanh.pop %v579
  %v690 = vtanh.pop %v582
  %v691 = vtanh.pop %v584
  %v692 = vtanh.pop %v587
  %v693 = vtanh.pop %v589
  %v694 = vtanh.pop %v592
  %v695 = vtanh.pop %v594
  %v696 = vtanh.pop %v597
  %v697 = vtanh.pop %v599
  %v698 = vtanh.pop %v602
  %v699 = vtanh.pop %v604
  %v700 = vtanh.pop %v607
  %v701 = vtanh.pop %v609
  %v702 = vtanh.pop %v612
  %v703 = vtanh.pop %v614
  %v704 = vtanh.pop %v617
  %v705 = vtanh.pop %v619
  %v706 = vtanh.pop %v622
  %v707 = vtanh.pop %v624
  %v708 = vtanh.pop %v627
  %v709 = vtanh.pop %v629
  %v710 = vtanh.pop %v632
  %v711 = vtanh.pop %v634
  %v712 = vtanh.pop %v637
  %v713 = vtanh.pop %v639
  %v714 = vtanh.pop %v642
  %v715 = vtanh.pop %v644
  %v716 = vtanh.pop %v647
  %v717 = vtanh.pop %v649
  %v718 = vtanh.pop %v652
  %v719 = vtanh.pop %v654
  %v720 = vmul.f32 %v656, 2.0
  %v721 = vmul.f32 %v657, 2.0
  %v722 = vmul.f32 %v658, 2.0
  %v723 = vmul.f32 %v659, 2.0
  %v724 = vmul.f32 %v660, 2.0
  %v725 = vmul.f32 %v661, 2.0
  %v726 = vmul.f32 %v662, 2.0
  %v727 = vmul.f32 %v663, 2.0
  %v728 = vmul.f32 %v664, 2.0
  %v729 = vmul.f32 %v665, 2.0
  %v730 = vmul.f32 %v666, 2.0
  %v731 = vmul.f32 %v667, 2.0
  %v732 = vmul.f32 %v668, 2.0
  %v733 = vmul.f32 %v669, 2.0
  %v734 = vmul.f32 %v670, 2.0
  %v735 = vmul.f32 %v671, 2.0
  %v736 = vmul.f32 %v672, 2.0
  %v737 = vmul.f32 %v673, 2.0
  %v738 = vmul.f32 %v674, 2.0
  %v739 = vmul.f32 %v675, 2.0
  %v740 = vmul.f32 %v676, 2.0
  %v741 = vmul.f32 %v677, 2.0
  %v742 = vmul.f32 %v678, 2.0
  %v743 = vmul.f32 %v679, 2.0
  %v744 = vmul.f32 %v680, 2.0
  %v745 = vmul.f32 %v681, 2.0
  %v746 = vmul.f32 %v682, 2.0
  %v747 = vmul.f32 %v683, 2.0
  %v748 = vmul.f32 %v684, 2.0
  %v749 = vmul.f32 %v685, 2.0
  %v750 = vmul.f32 %v686, 2.0
  %v751 = vmul.f32 %v687, 2.0
  %v752 = vmul.f32 %v688, 2.0
  %v753 = vmul.f32 %v689, 2.0
  %v754 = vmul.f32 %v690, 2.0
  %v755 = vmul.f32 %v691, 2.0
  %v756 = vmul.f32 %v692, 2.0
  %v757 = vmul.f32 %v693, 2.0
  %v758 = vmul.f32 %v694, 2.0
  %v759 = vmul.f32 %v695, 2.0
  %v760 = vmul.f32 %v696, 2.0
  %v761 = vmul.f32 %v697, 2.0
  %v762 = vmul.f32 %v698, 2.0
  %v763 = vmul.f32 %v699, 2.0
  %v764 = vmul.f32 %v700, 2.0
  %v765 = vmul.f32 %v701, 2.0
  %v766 = vmul.f32 %v702, 2.0
  %v767 = vmul.f32 %v703, 2.0
  %v768 = vmul.f32 %v704, 2.0
  %v769 = vmul.f32 %v705, 2.0
  %v770 = vmul.f32 %v706, 2.0
  %v771 = vmul.f32 %v707, 2.0
  %v772 = vmul.f32 %v708, 2.0
  %v773 = vmul.f32 %v709, 2.0
  %v774 = vmul.f32 %v710, 2.0
  %v775 = vmul.f32 %v711, 2.0
  %v776 = vmul.f32 %v712, 2.0
  %v777 = vmul.f32 %v713, 2.0
  %v778 = vmul.f32 %v714, 2.0
  %v779 = vmul.f32 %v715, 2.0
  %v780 = vmul.f32 %v716, 2.0
  %v781 = vmul.f32 %v717, 2.0
  %v782 = vmul.f32 %v718, 2.0
  %v783 = vmul.f32 %v719, 2.0
  %v784 = vpack.c.bf16 %v720, %v720
  %v785 = vpack.c.bf16 %v721, %v721
  %v786 = vpack.c.bf16 %v722, %v722
  %v787 = vpack.c.bf16 %v723, %v723
  %v788 = vpack.c.bf16 %v724, %v724
  %v789 = vpack.c.bf16 %v725, %v725
  %v790 = vpack.c.bf16 %v726, %v726
  %v791 = vpack.c.bf16 %v727, %v727
  %v792 = vpack.c.bf16 %v728, %v728
  %v793 = vpack.c.bf16 %v729, %v729
  %v794 = vpack.c.bf16 %v730, %v730
  %v795 = vpack.c.bf16 %v731, %v731
  %v796 = vpack.c.bf16 %v732, %v732
  %v797 = vpack.c.bf16 %v733, %v733
  %v798 = vpack.c.bf16 %v734, %v734
  %v799 = vpack.c.bf16 %v735, %v735
  %v800 = vpack.c.bf16 %v736, %v736
  %v801 = vpack.c.bf16 %v737, %v737
  %v802 = vpack.c.bf16 %v738, %v738
  %v803 = vpack.c.bf16 %v739, %v739
  %v804 = vpack.c.bf16 %v740, %v740
  %v805 = vpack.c.bf16 %v741, %v741
  %v806 = vpack.c.bf16 %v742, %v742
  %v807 = vpack.c.bf16 %v743, %v743
  %v808 = vpack.c.bf16 %v744, %v744
  %v809 = vpack.c.bf16 %v745, %v745
  %v810 = vpack.c.bf16 %v746, %v746
  %v811 = vpack.c.bf16 %v747, %v747
  %v812 = vpack.c.bf16 %v748, %v748
  %v813 = vpack.c.bf16 %v749, %v749
  %v814 = vpack.c.bf16 %v750, %v750
  %v815 = vpack.c.bf16 %v751, %v751
  %v816 = vpack.c.bf16 %v752, %v752
  %v817 = vpack.c.bf16 %v753, %v753
  %v818 = vpack.c.bf16 %v754, %v754
  %v819 = vpack.c.bf16 %v755, %v755
  %v820 = vpack.c.bf16 %v756, %v756
  %v821 = vpack.c.bf16 %v757, %v757
  %v822 = vpack.c.bf16 %v758, %v758
  %v823 = vpack.c.bf16 %v759, %v759
  %v824 = vpack.c.bf16 %v760, %v760
  %v825 = vpack.c.bf16 %v761, %v761
  %v826 = vpack.c.bf16 %v762, %v762
  %v827 = vpack.c.bf16 %v763, %v763
  %v828 = vpack.c.bf16 %v764, %v764
  %v829 = vpack.c.bf16 %v765, %v765
  %v830 = vpack.c.bf16 %v766, %v766
  %v831 = vpack.c.bf16 %v767, %v767
  %v832 = vpack.c.bf16 %v768, %v768
  %v833 = vpack.c.bf16 %v769, %v769
  %v834 = vpack.c.bf16 %v770, %v770
  %v835 = vpack.c.bf16 %v771, %v771
  %v836 = vpack.c.bf16 %v772, %v772
  %v837 = vpack.c.bf16 %v773, %v773
  %v838 = vpack.c.bf16 %v774, %v774
  %v839 = vpack.c.bf16 %v775, %v775
  %v840 = vpack.c.bf16 %v776, %v776
  %v841 = vpack.c.bf16 %v777, %v777
  %v842 = vpack.c.bf16 %v778, %v778
  %v843 = vpack.c.bf16 %v779, %v779
  %v844 = vpack.c.bf16 %v780, %v780
  %v845 = vpack.c.bf16 %v781, %v781
  %v846 = vpack.c.bf16 %v782, %v782
  %v847 = vpack.c.bf16 %v783, %v783
  %848 = vst [vmem:[%s5] sm:$0xf] %v784
  %849 = vst [vmem:[%s5 + $0x4] sm:$0xf] %v785
  %850 = vst [vmem:[%s5 + $0x8] sm:$0xf] %v786
  %851 = vst [vmem:[%s5 + $0xc] sm:$0xf] %v787
  %852 = vst [vmem:[%s5 + $0x10] sm:$0xf] %v788
  %853 = vst [vmem:[%s5 + $0x14] sm:$0xf] %v789
  %854 = vst [vmem:[%s5 + $0x18] sm:$0xf] %v790
  %855 = vst [vmem:[%s5 + $0x1c] sm:$0xf] %v791
  %856 = vst [vmem:[%s5 + $0x20] sm:$0xf] %v792
  %857 = vst [vmem:[%s5 + $0x24] sm:$0xf] %v793
  %858 = vst [vmem:[%s5 + $0x28] sm:$0xf] %v794
  %859 = vst [vmem:[%s5 + $0x2c] sm:$0xf] %v795
  %860 = vst [vmem:[%s5 + $0x30] sm:$0xf] %v796
  %861 = vst [vmem:[%s5 + $0x34] sm:$0xf] %v797
  %862 = vst [vmem:[%s5 + $0x38] sm:$0xf] %v798
  %863 = vst [vmem:[%s5 + $0x3c] sm:$0xf] %v799
  %864 = vst [vmem:[%s5 + $0x40] sm:$0xf] %v800
  %865 = vst [vmem:[%s5 + $0x44] sm:$0xf] %v801
  %866 = vst [vmem:[%s5 + $0x48] sm:$0xf] %v802
  %867 = vst [vmem:[%s5 + $0x4c] sm:$0xf] %v803
  %868 = vst [vmem:[%s5 + $0x50] sm:$0xf] %v804
  %869 = vst [vmem:[%s5 + $0x54] sm:$0xf] %v805
  %870 = vst [vmem:[%s5 + $0x58] sm:$0xf] %v806
  %871 = vst [vmem:[%s5 + $0x5c] sm:$0xf] %v807
  %872 = vst [vmem:[%s5 + $0x60] sm:$0xf] %v808
  %873 = vst [vmem:[%s5 + $0x64] sm:$0xf] %v809
  %874 = vst [vmem:[%s5 + $0x68] sm:$0xf] %v810
  %875 = vst [vmem:[%s5 + $0x6c] sm:$0xf] %v811
  %876 = vst [vmem:[%s5 + $0x70] sm:$0xf] %v812
  %877 = vst [vmem:[%s5 + $0x74] sm:$0xf] %v813
  %878 = vst [vmem:[%s5 + $0x78] sm:$0xf] %v814
  %879 = vst [vmem:[%s5 + $0x7c] sm:$0xf] %v815
  %880 = vst [vmem:[%s5 + $0x80] sm:$0xf] %v816
  %881 = vst [vmem:[%s5 + $0x84] sm:$0xf] %v817
  %882 = vst [vmem:[%s5 + $0x88] sm:$0xf] %v818
  %883 = vst [vmem:[%s5 + $0x8c] sm:$0xf] %v819
  %884 = vst [vmem:[%s5 + $0x90] sm:$0xf] %v820
  %885 = vst [vmem:[%s5 + $0x94] sm:$0xf] %v821
  %886 = vst [vmem:[%s5 + $0x98] sm:$0xf] %v822
  %887 = vst [vmem:[%s5 + $0x9c] sm:$0xf] %v823
  %888 = vst [vmem:[%s5 + $0xa0] sm:$0xf] %v824
  %889 = vst [vmem:[%s5 + $0xa4] sm:$0xf] %v825
  %890 = vst [vmem:[%s5 + $0xa8] sm:$0xf] %v826
  %891 = vst [vmem:[%s5 + $0xac] sm:$0xf] %v827
  %892 = vst [vmem:[%s5 + $0xb0] sm:$0xf] %v828
  %893 = vst [vmem:[%s5 + $0xb4] sm:$0xf] %v829
  %894 = vst [vmem:[%s5 + $0xb8] sm:$0xf] %v830
  %895 = vst [vmem:[%s5 + $0xbc] sm:$0xf] %v831
  %896 = vst [vmem:[%s5 + $0xc0] sm:$0xf] %v832
  %897 = vst [vmem:[%s5 + $0xc4] sm:$0xf] %v833
  %898 = vst [vmem:[%s5 + $0xc8] sm:$0xf] %v834
  %899 = vst [vmem:[%s5 + $0xcc] sm:$0xf] %v835
  %900 = vst [vmem:[%s5 + $0xd0] sm:$0xf] %v836
  %901 = vst [vmem:[%s5 + $0xd4] sm:$0xf] %v837
  %902 = vst [vmem:[%s5 + $0xd8] sm:$0xf] %v838
  %903 = vst [vmem:[%s5 + $0xdc] sm:$0xf] %v839
  %904 = vst [vmem:[%s5 + $0xe0] sm:$0xf] %v840
  %905 = vst [vmem:[%s5 + $0xe4] sm:$0xf] %v841
  %906 = vst [vmem:[%s5 + $0xe8] sm:$0xf] %v842
  %907 = vst [vmem:[%s5 + $0xec] sm:$0xf] %v843
  %908 = vst [vmem:[%s5 + $0xf0] sm:$0xf] %v844
  %909 = vst [vmem:[%s5 + $0xf4] sm:$0xf] %v845
  %910 = vst [vmem:[%s5 + $0xf8] sm:$0xf] %v846
  %911 = vst [vmem:[%s5 + $0xfc] sm:$0xf] %v847
  // Predicated region
  $region22: #{pointgencon_forward.7} parent=0 // pred_check
    _
  $region23: #{pointgencon_forward.7} parent=0 // pred_check_branch
    %913 = sbr.rel (0) target = $region25
  $region24: #{pointgencon_forward.7} parent=0 // pred_region
    _
  $region25: #{pointgencon_forward.7} parent=0 // pred_fallthru
    _
  // Predicated region
  $region26: #{pointgencon_forward.7} parent=0 // pred_check
    _
  $region27: #{pointgencon_forward.7} parent=0 // pred_check_branch
    %915 = sbr.rel (0) target = $region29
  $region28: #{pointgencon_forward.7} parent=0 // pred_region
    _
  $region29: #{pointgencon_forward.7} parent=0 // pred_fallthru
    _

// kernel: pointgencon_forward.6
$region0: #{pointgencon_forward.6}
  #allocation0 [shape = 'u32[]', space=smem, size = 0x4, offset = 0x4, fixed_abs, tag = 'smem constant byte address 0x4 - core index']
  #allocation1 [shape = 'u32[72,128]{1,0:T(1,128)}', space=vmem, size = 0x9000, scoped, tag = 'internal scratch']
  %s0 = inlined_call_operand.vmem [shape: bf16[512,16], index: 0, kind: input, shape index: {}]
  %s1 = inlined_call_operand.vmem [shape: f32[1,16], index: 1, kind: input, shape index: {}]
  %s2 = inlined_call_operand.vmem [shape: f32[1,16], index: 2, kind: input, shape index: {}]
  %s3 = inlined_call_operand.vmem [shape: bf16[16,8], index: 3, kind: input, shape index: {}]
  %s4 = inlined_call_operand.vmem [shape: bf16[512,8], index: 4, kind: output, shape index: {0}]
  %s5 = inlined_call_operand.vmem [shape: f32[1,1,8], index: 5, kind: output, shape index: {1}]
  %s6 = inlined_call_operand.vmem [shape: f32[1,1,8], index: 6, kind: output, shape index: {2}]
  %7 = xla_tuple %s4, %s5, %s6
  %s8 = sld [smem:[#allocation0]]
  $region42: #{pointgencon_forward.6} parent=0
    _
  %s10 = ssub.s32 1, %s8
  %s11 = scalar_select 0, %s10, %s8
  // Predicated region
  $region2: #{pointgencon_forward.6} parent=0 // pred_check
    _
  $region3: #{pointgencon_forward.6} parent=0 // pred_check_branch
    %13 = sbr.rel (0) target = $region5
  $region4: #{pointgencon_forward.6} parent=0 // pred_region
    _
  $region5: #{pointgencon_forward.6} parent=0 // pred_fallthru
    _
  // Predicated region
  $region6: #{pointgencon_forward.6} parent=0 // pred_check
    _
  $region7: #{pointgencon_forward.6} parent=0 // pred_check_branch
    %15 = sbr.rel (0) target = $region9
  $region8: #{pointgencon_forward.6} parent=0 // pred_region
    _
  $region9: #{pointgencon_forward.6} parent=0 // pred_fallthru
    _
  // Predicated region
  $region10: #{pointgencon_forward.6} parent=0 // pred_check
    _
  $region11: #{pointgencon_forward.6} parent=0 // pred_check_branch
    %17 = sbr.rel (0) target = $region13
  $region12: #{pointgencon_forward.6} parent=0 // pred_region
    _
  $region13: #{pointgencon_forward.6} parent=0 // pred_fallthru
    _
  // Predicated region
  $region14: #{pointgencon_forward.6} parent=0 // pred_check
    _
  $region15: #{pointgencon_forward.6} parent=0 // pred_check_branch
    %19 = sbr.rel (0) target = $region17
  $region16: #{pointgencon_forward.6} parent=0 // pred_region
    _
  $region17: #{pointgencon_forward.6} parent=0 // pred_fallthru
    _
  %v21 = vld [vmem:[%s0] sm:$0xf]
  %v22 = vld [vmem:[%s0 + $0x4] sm:$0xf]
  %v23 = vld [vmem:[%s0 + $0x8] sm:$0xf]
  %v24 = vld [vmem:[%s0 + $0xc] sm:$0xf]
  %v25 = vld [vmem:[%s0 + $0x10] sm:$0xf]
  %v26 = vld [vmem:[%s0 + $0x14] sm:$0xf]
  %v27 = vld [vmem:[%s0 + $0x18] sm:$0xf]
  %v28 = vld [vmem:[%s0 + $0x1c] sm:$0xf]
  %v29 = vld [vmem:[%s0 + $0x20] sm:$0xf]
  %v30 = vld [vmem:[%s0 + $0x24] sm:$0xf]
  %v31 = vld [vmem:[%s0 + $0x28] sm:$0xf]
  %v32 = vld [vmem:[%s0 + $0x2c] sm:$0xf]
  %v33 = vld [vmem:[%s0 + $0x30] sm:$0xf]
  %v34 = vld [vmem:[%s0 + $0x34] sm:$0xf]
  %v35 = vld [vmem:[%s0 + $0x38] sm:$0xf]
  %v36 = vld [vmem:[%s0 + $0x3c] sm:$0xf]
  %v37 = vld [vmem:[%s0 + $0x40] sm:$0xf]
  %v38 = vld [vmem:[%s0 + $0x44] sm:$0xf]
  %v39 = vld [vmem:[%s0 + $0x48] sm:$0xf]
  %v40 = vld [vmem:[%s0 + $0x4c] sm:$0xf]
  %v41 = vld [vmem:[%s0 + $0x50] sm:$0xf]
  %v42 = vld [vmem:[%s0 + $0x54] sm:$0xf]
  %v43 = vld [vmem:[%s0 + $0x58] sm:$0xf]
  %v44 = vld [vmem:[%s0 + $0x5c] sm:$0xf]
  %v45 = vld [vmem:[%s0 + $0x60] sm:$0xf]
  %v46 = vld [vmem:[%s0 + $0x64] sm:$0xf]
  %v47 = vld [vmem:[%s0 + $0x68] sm:$0xf]
  %v48 = vld [vmem:[%s0 + $0x6c] sm:$0xf]
  %v49 = vld [vmem:[%s0 + $0x70] sm:$0xf]
  %v50 = vld [vmem:[%s0 + $0x74] sm:$0xf]
  %v51 = vld [vmem:[%s0 + $0x78] sm:$0xf]
  %v52 = vld [vmem:[%s0 + $0x7c] sm:$0xf]
  %v53 = vld [vmem:[%s0 + $0x80] sm:$0xf]
  %v54 = vld [vmem:[%s0 + $0x84] sm:$0xf]
  %v55 = vld [vmem:[%s0 + $0x88] sm:$0xf]
  %v56 = vld [vmem:[%s0 + $0x8c] sm:$0xf]
  %v57 = vld [vmem:[%s0 + $0x90] sm:$0xf]
  %v58 = vld [vmem:[%s0 + $0x94] sm:$0xf]
  %v59 = vld [vmem:[%s0 + $0x98] sm:$0xf]
  %v60 = vld [vmem:[%s0 + $0x9c] sm:$0xf]
  %v61 = vld [vmem:[%s0 + $0xa0] sm:$0xf]
  %v62 = vld [vmem:[%s0 + $0xa4] sm:$0xf]
  %v63 = vld [vmem:[%s0 + $0xa8] sm:$0xf]
  %v64 = vld [vmem:[%s0 + $0xac] sm:$0xf]
  %v65 = vld [vmem:[%s0 + $0xb0] sm:$0xf]
  %v66 = vld [vmem:[%s0 + $0xb4] sm:$0xf]
  %v67 = vld [vmem:[%s0 + $0xb8] sm:$0xf]
  %v68 = vld [vmem:[%s0 + $0xbc] sm:$0xf]
  %v69 = vld [vmem:[%s0 + $0xc0] sm:$0xf]
  %v70 = vld [vmem:[%s0 + $0xc4] sm:$0xf]
  %v71 = vld [vmem:[%s0 + $0xc8] sm:$0xf]
  %v72 = vld [vmem:[%s0 + $0xcc] sm:$0xf]
  %v73 = vld [vmem:[%s0 + $0xd0] sm:$0xf]
  %v74 = vld [vmem:[%s0 + $0xd4] sm:$0xf]
  %v75 = vld [vmem:[%s0 + $0xd8] sm:$0xf]
  %v76 = vld [vmem:[%s0 + $0xdc] sm:$0xf]
  %v77 = vld [vmem:[%s0 + $0xe0] sm:$0xf]
  %v78 = vld [vmem:[%s0 + $0xe4] sm:$0xf]
  %v79 = vld [vmem:[%s0 + $0xe8] sm:$0xf]
  %v80 = vld [vmem:[%s0 + $0xec] sm:$0xf]
  %v81 = vld [vmem:[%s0 + $0xf0] sm:$0xf]
  %v82 = vld [vmem:[%s0 + $0xf4] sm:$0xf]
  %v83 = vld [vmem:[%s0 + $0xf8] sm:$0xf]
  %v84 = vld [vmem:[%s0 + $0xfc] sm:$0xf]
  %v85 = vunpack.c.l.bf16 %v21
  %v86 = vunpack.c.l.bf16 %v22
  %v87 = vunpack.c.l.bf16 %v23
  %v88 = vunpack.c.l.bf16 %v24
  %v89 = vunpack.c.l.bf16 %v25
  %v90 = vunpack.c.l.bf16 %v26
  %v91 = vunpack.c.l.bf16 %v27
  %v92 = vunpack.c.l.bf16 %v28
  %v93 = vunpack.c.l.bf16 %v29
  %v94 = vunpack.c.l.bf16 %v30
  %v95 = vunpack.c.l.bf16 %v31
  %v96 = vunpack.c.l.bf16 %v32
  %v97 = vunpack.c.l.bf16 %v33
  %v98 = vunpack.c.l.bf16 %v34
  %v99 = vunpack.c.l.bf16 %v35
  %v100 = vunpack.c.l.bf16 %v36
  %v101 = vunpack.c.l.bf16 %v37
  %v102 = vunpack.c.l.bf16 %v38
  %v103 = vunpack.c.l.bf16 %v39
  %v104 = vunpack.c.l.bf16 %v40
  %v105 = vunpack.c.l.bf16 %v41
  %v106 = vunpack.c.l.bf16 %v42
  %v107 = vunpack.c.l.bf16 %v43
  %v108 = vunpack.c.l.bf16 %v44
  %v109 = vunpack.c.l.bf16 %v45
  %v110 = vunpack.c.l.bf16 %v46
  %v111 = vunpack.c.l.bf16 %v47
  %v112 = vunpack.c.l.bf16 %v48
  %v113 = vunpack.c.l.bf16 %v49
  %v114 = vunpack.c.l.bf16 %v50
  %v115 = vunpack.c.l.bf16 %v51
  %v116 = vunpack.c.l.bf16 %v52
  %v117 = vunpack.c.l.bf16 %v53
  %v118 = vunpack.c.l.bf16 %v54
  %v119 = vunpack.c.l.bf16 %v55
  %v120 = vunpack.c.l.bf16 %v56
  %v121 = vunpack.c.l.bf16 %v57
  %v122 = vunpack.c.l.bf16 %v58
  %v123 = vunpack.c.l.bf16 %v59
  %v124 = vunpack.c.l.bf16 %v60
  %v125 = vunpack.c.l.bf16 %v61
  %v126 = vunpack.c.l.bf16 %v62
  %v127 = vunpack.c.l.bf16 %v63
  %v128 = vunpack.c.l.bf16 %v64
  %v129 = vunpack.c.l.bf16 %v65
  %v130 = vunpack.c.l.bf16 %v66
  %v131 = vunpack.c.l.bf16 %v67
  %v132 = vunpack.c.l.bf16 %v68
  %v133 = vunpack.c.l.bf16 %v69
  %v134 = vunpack.c.l.bf16 %v70
  %v135 = vunpack.c.l.bf16 %v71
  %v136 = vunpack.c.l.bf16 %v72
  %v137 = vunpack.c.l.bf16 %v73
  %v138 = vunpack.c.l.bf16 %v74
  %v139 = vunpack.c.l.bf16 %v75
  %v140 = vunpack.c.l.bf16 %v76
  %v141 = vunpack.c.l.bf16 %v77
  %v142 = vunpack.c.l.bf16 %v78
  %v143 = vunpack.c.l.bf16 %v79
  %v144 = vunpack.c.l.bf16 %v80
  %v145 = vunpack.c.l.bf16 %v81
  %v146 = vunpack.c.l.bf16 %v82
  %v147 = vunpack.c.l.bf16 %v83
  %v148 = vunpack.c.l.bf16 %v84
  %v149 = vld [vmem:[%s1] sm:$0x1]
  %v151 = vperm.slane %v149, 0
  %v153 = vmul.f32 %v85, %v151
  %v154 = vmul.f32 %v86, %v151
  %v155 = vmul.f32 %v87, %v151
  %v156 = vmul.f32 %v88, %v151
  %v157 = vmul.f32 %v89, %v151
  %v158 = vmul.f32 %v90, %v151
  %v159 = vmul.f32 %v91, %v151
  %v160 = vmul.f32 %v92, %v151
  %v161 = vmul.f32 %v93, %v151
  %v162 = vmul.f32 %v94, %v151
  %v163 = vmul.f32 %v95, %v151
  %v164 = vmul.f32 %v96, %v151
  %v165 = vmul.f32 %v97, %v151
  %v166 = vmul.f32 %v98, %v151
  %v167 = vmul.f32 %v99, %v151
  %v168 = vmul.f32 %v100, %v151
  %v169 = vmul.f32 %v101, %v151
  %v170 = vmul.f32 %v102, %v151
  %v171 = vmul.f32 %v103, %v151
  %v172 = vmul.f32 %v104, %v151
  %v173 = vmul.f32 %v105, %v151
  %v174 = vmul.f32 %v106, %v151
  %v175 = vmul.f32 %v107, %v151
  %v176 = vmul.f32 %v108, %v151
  %v177 = vmul.f32 %v109, %v151
  %v178 = vmul.f32 %v110, %v151
  %v179 = vmul.f32 %v111, %v151
  %v180 = vmul.f32 %v112, %v151
  %v181 = vmul.f32 %v113, %v151
  %v182 = vmul.f32 %v114, %v151
  %v183 = vmul.f32 %v115, %v151
  %v184 = vmul.f32 %v116, %v151
  %v185 = vmul.f32 %v117, %v151
  %v186 = vmul.f32 %v118, %v151
  %v187 = vmul.f32 %v119, %v151
  %v188 = vmul.f32 %v120, %v151
  %v189 = vmul.f32 %v121, %v151
  %v190 = vmul.f32 %v122, %v151
  %v191 = vmul.f32 %v123, %v151
  %v192 = vmul.f32 %v124, %v151
  %v193 = vmul.f32 %v125, %v151
  %v194 = vmul.f32 %v126, %v151
  %v195 = vmul.f32 %v127, %v151
  %v196 = vmul.f32 %v128, %v151
  %v197 = vmul.f32 %v129, %v151
  %v198 = vmul.f32 %v130, %v151
  %v199 = vmul.f32 %v131, %v151
  %v200 = vmul.f32 %v132, %v151
  %v201 = vmul.f32 %v133, %v151
  %v202 = vmul.f32 %v134, %v151
  %v203 = vmul.f32 %v135, %v151
  %v204 = vmul.f32 %v136, %v151
  %v205 = vmul.f32 %v137, %v151
  %v206 = vmul.f32 %v138, %v151
  %v207 = vmul.f32 %v139, %v151
  %v208 = vmul.f32 %v140, %v151
  %v209 = vmul.f32 %v141, %v151
  %v210 = vmul.f32 %v142, %v151
  %v211 = vmul.f32 %v143, %v151
  %v212 = vmul.f32 %v144, %v151
  %v213 = vmul.f32 %v145, %v151
  %v214 = vmul.f32 %v146, %v151
  %v215 = vmul.f32 %v147, %v151
  %v216 = vmul.f32 %v148, %v151
  %v217 = vld [vmem:[%s2] sm:$0x1]
  %v219 = vperm.slane %v217, 0
  %v221 = vadd.f32 %v153, %v219
  %v222 = vadd.f32 %v154, %v219
  %v223 = vadd.f32 %v155, %v219
  %v224 = vadd.f32 %v156, %v219
  %v225 = vadd.f32 %v157, %v219
  %v226 = vadd.f32 %v158, %v219
  %v227 = vadd.f32 %v159, %v219
  %v228 = vadd.f32 %v160, %v219
  %v229 = vadd.f32 %v161, %v219
  %v230 = vadd.f32 %v162, %v219
  %v231 = vadd.f32 %v163, %v219
  %v232 = vadd.f32 %v164, %v219
  %v233 = vadd.f32 %v165, %v219
  %v234 = vadd.f32 %v166, %v219
  %v235 = vadd.f32 %v167, %v219
  %v236 = vadd.f32 %v168, %v219
  %v237 = vadd.f32 %v169, %v219
  %v238 = vadd.f32 %v170, %v219
  %v239 = vadd.f32 %v171, %v219
  %v240 = vadd.f32 %v172, %v219
  %v241 = vadd.f32 %v173, %v219
  %v242 = vadd.f32 %v174, %v219
  %v243 = vadd.f32 %v175, %v219
  %v244 = vadd.f32 %v176, %v219
  %v245 = vadd.f32 %v177, %v219
  %v246 = vadd.f32 %v178, %v219
  %v247 = vadd.f32 %v179, %v219
  %v248 = vadd.f32 %v180, %v219
  %v249 = vadd.f32 %v181, %v219
  %v250 = vadd.f32 %v182, %v219
  %v251 = vadd.f32 %v183, %v219
  %v252 = vadd.f32 %v184, %v219
  %v253 = vadd.f32 %v185, %v219
  %v254 = vadd.f32 %v186, %v219
  %v255 = vadd.f32 %v187, %v219
  %v256 = vadd.f32 %v188, %v219
  %v257 = vadd.f32 %v189, %v219
  %v258 = vadd.f32 %v190, %v219
  %v259 = vadd.f32 %v191, %v219
  %v260 = vadd.f32 %v192, %v219
  %v261 = vadd.f32 %v193, %v219
  %v262 = vadd.f32 %v194, %v219
  %v263 = vadd.f32 %v195, %v219
  %v264 = vadd.f32 %v196, %v219
  %v265 = vadd.f32 %v197, %v219
  %v266 = vadd.f32 %v198, %v219
  %v267 = vadd.f32 %v199, %v219
  %v268 = vadd.f32 %v200, %v219
  %v269 = vadd.f32 %v201, %v219
  %v270 = vadd.f32 %v202, %v219
  %v271 = vadd.f32 %v203, %v219
  %v272 = vadd.f32 %v204, %v219
  %v273 = vadd.f32 %v205, %v219
  %v274 = vadd.f32 %v206, %v219
  %v275 = vadd.f32 %v207, %v219
  %v276 = vadd.f32 %v208, %v219
  %v277 = vadd.f32 %v209, %v219
  %v278 = vadd.f32 %v210, %v219
  %v279 = vadd.f32 %v211, %v219
  %v280 = vadd.f32 %v212, %v219
  %v281 = vadd.f32 %v213, %v219
  %v282 = vadd.f32 %v214, %v219
  %v283 = vadd.f32 %v215, %v219
  %v284 = vadd.f32 %v216, %v219
  %v285 = vmax.f32 %v221, 0.0
  %v286 = vmax.f32 %v222, 0.0
  %v287 = vmax.f32 %v223, 0.0
  %v288 = vmax.f32 %v224, 0.0
  %v289 = vmax.f32 %v225, 0.0
  %v290 = vmax.f32 %v226, 0.0
  %v291 = vmax.f32 %v227, 0.0
  %v292 = vmax.f32 %v228, 0.0
  %v293 = vmax.f32 %v229, 0.0
  %v294 = vmax.f32 %v230, 0.0
  %v295 = vmax.f32 %v231, 0.0
  %v296 = vmax.f32 %v232, 0.0
  %v297 = vmax.f32 %v233, 0.0
  %v298 = vmax.f32 %v234, 0.0
  %v299 = vmax.f32 %v235, 0.0
  %v300 = vmax.f32 %v236, 0.0
  %v301 = vmax.f32 %v237, 0.0
  %v302 = vmax.f32 %v238, 0.0
  %v303 = vmax.f32 %v239, 0.0
  %v304 = vmax.f32 %v240, 0.0
  %v305 = vmax.f32 %v241, 0.0
  %v306 = vmax.f32 %v242, 0.0
  %v307 = vmax.f32 %v243, 0.0
  %v308 = vmax.f32 %v244, 0.0
  %v309 = vmax.f32 %v245, 0.0
  %v310 = vmax.f32 %v246, 0.0
  %v311 = vmax.f32 %v247, 0.0
  %v312 = vmax.f32 %v248, 0.0
  %v313 = vmax.f32 %v249, 0.0
  %v314 = vmax.f32 %v250, 0.0
  %v315 = vmax.f32 %v251, 0.0
  %v316 = vmax.f32 %v252, 0.0
  %v317 = vmax.f32 %v253, 0.0
  %v318 = vmax.f32 %v254, 0.0
  %v319 = vmax.f32 %v255, 0.0
  %v320 = vmax.f32 %v256, 0.0
  %v321 = vmax.f32 %v257, 0.0
  %v322 = vmax.f32 %v258, 0.0
  %v323 = vmax.f32 %v259, 0.0
  %v324 = vmax.f32 %v260, 0.0
  %v325 = vmax.f32 %v261, 0.0
  %v326 = vmax.f32 %v262, 0.0
  %v327 = vmax.f32 %v263, 0.0
  %v328 = vmax.f32 %v264, 0.0
  %v329 = vmax.f32 %v265, 0.0
  %v330 = vmax.f32 %v266, 0.0
  %v331 = vmax.f32 %v267, 0.0
  %v332 = vmax.f32 %v268, 0.0
  %v333 = vmax.f32 %v269, 0.0
  %v334 = vmax.f32 %v270, 0.0
  %v335 = vmax.f32 %v271, 0.0
  %v336 = vmax.f32 %v272, 0.0
  %v337 = vmax.f32 %v273, 0.0
  %v338 = vmax.f32 %v274, 0.0
  %v339 = vmax.f32 %v275, 0.0
  %v340 = vmax.f32 %v276, 0.0
  %v341 = vmax.f32 %v277, 0.0
  %v342 = vmax.f32 %v278, 0.0
  %v343 = vmax.f32 %v279, 0.0
  %v344 = vmax.f32 %v280, 0.0
  %v345 = vmax.f32 %v281, 0.0
  %v346 = vmax.f32 %v282, 0.0
  %v347 = vmax.f32 %v283, 0.0
  %v348 = vmax.f32 %v284, 0.0
  %s349 = smul.u32 0, 512
  %v350 = vlaneseq
  %v351 = vshrl.u32 %v350, 7
  %v352 = vadd.s32 %v351, 8
  %v353 = vadd.s32 %v351, 16
  %v354 = vadd.s32 %v351, 24
  %v355 = vadd.s32 %v351, 32
  %v356 = vadd.s32 %v351, 40
  %v357 = vadd.s32 %v351, 48
  %v358 = vadd.s32 %v351, 56
  %v359 = vadd.s32 %v351, 64
  %v360 = vadd.s32 %v351, 72
  %v361 = vadd.s32 %v351, 80
  %v362 = vadd.s32 %v351, 88
  %v363 = vadd.s32 %v351, 96
  %v364 = vadd.s32 %v351, 104
  %v365 = vadd.s32 %v351, 112
  %v366 = vadd.s32 %v351, 120
  %v367 = vadd.s32 %v351, 128
  %v368 = vadd.s32 %v351, 136
  %v369 = vadd.s32 %v351, 144
  %v370 = vadd.s32 %v351, 152
  %v371 = vadd.s32 %v351, 160
  %v372 = vadd.s32 %v351, 168
  %v373 = vadd.s32 %v351, 176
  %v374 = vadd.s32 %v351, 184
  %v375 = vadd.s32 %v351, 192
  %v376 = vadd.s32 %v351, 200
  %v377 = vadd.s32 %v351, 208
  %v378 = vadd.s32 %v351, 216
  %v379 = vadd.s32 %v351, 224
  %v380 = vadd.s32 %v351, 232
  %v381 = vadd.s32 %v351, 240
  %v382 = vadd.s32 %v351, 248
  %v383 = vadd.s32 %v351, 256
  %v384 = vadd.s32 %v351, 264
  %v385 = vadd.s32 %v351, 272
  %v386 = vadd.s32 %v351, 280
  %v387 = vadd.s32 %v351, 288
  %v388 = vadd.s32 %v351, 296
  %v389 = vadd.s32 %v351, 304
  %v390 = vadd.s32 %v351, 312
  %v391 = vadd.s32 %v351, 320
  %v392 = vadd.s32 %v351, 328
  %v393 = vadd.s32 %v351, 336
  %v394 = vadd.s32 %v351, 344
  %v395 = vadd.s32 %v351, 352
  %v396 = vadd.s32 %v351, 360
  %v397 = vadd.s32 %v351, 368
  %v398 = vadd.s32 %v351, 376
  %v399 = vadd.s32 %v351, 384
  %v400 = vadd.s32 %v351, 392
  %v401 = vadd.s32 %v351, 400
  %v402 = vadd.s32 %v351, 408
  %v403 = vadd.s32 %v351, 416
  %v404 = vadd.s32 %v351, 424
  %v405 = vadd.s32 %v351, 432
  %v406 = vadd.s32 %v351, 440
  %v407 = vadd.s32 %v351, 448
  %v408 = vadd.s32 %v351, 456
  %v409 = vadd.s32 %v351, 464
  %v410 = vadd.s32 %v351, 472
  %v411 = vadd.s32 %v351, 480
  %v412 = vadd.s32 %v351, 488
  %v413 = vadd.s32 %v351, 496
  %v414 = vadd.s32 %v351, 504
  %v415 = vstv %s349
  %v416 = vadd.s32 %v415, %v351
  %v417 = vadd.s32 %v415, %v352
  %v418 = vadd.s32 %v415, %v353
  %v419 = vadd.s32 %v415, %v354
  %v420 = vadd.s32 %v415, %v355
  %v421 = vadd.s32 %v415, %v356
  %v422 = vadd.s32 %v415, %v357
  %v423 = vadd.s32 %v415, %v358
  %v424 = vadd.s32 %v415, %v359
  %v425 = vadd.s32 %v415, %v360
  %v426 = vadd.s32 %v415, %v361
  %v427 = vadd.s32 %v415, %v362
  %v428 = vadd.s32 %v415, %v363
  %v429 = vadd.s32 %v415, %v364
  %v430 = vadd.s32 %v415, %v365
  %v431 = vadd.s32 %v415, %v366
  %v432 = vadd.s32 %v415, %v367
  %v433 = vadd.s32 %v415, %v368
  %v434 = vadd.s32 %v415, %v369
  %v435 = vadd.s32 %v415, %v370
  %v436 = vadd.s32 %v415, %v371
  %v437 = vadd.s32 %v415, %v372
  %v438 = vadd.s32 %v415, %v373
  %v439 = vadd.s32 %v415, %v374
  %v440 = vadd.s32 %v415, %v375
  %v441 = vadd.s32 %v415, %v376
  %v442 = vadd.s32 %v415, %v377
  %v443 = vadd.s32 %v415, %v378
  %v444 = vadd.s32 %v415, %v379
  %v445 = vadd.s32 %v415, %v380
  %v446 = vadd.s32 %v415, %v381
  %v447 = vadd.s32 %v415, %v382
  %v448 = vadd.s32 %v415, %v383
  %v449 = vadd.s32 %v415, %v384
  %v450 = vadd.s32 %v415, %v385
  %v451 = vadd.s32 %v415, %v386
  %v452 = vadd.s32 %v415, %v387
  %v453 = vadd.s32 %v415, %v388
  %v454 = vadd.s32 %v415, %v389
  %v455 = vadd.s32 %v415, %v390
  %v456 = vadd.s32 %v415, %v391
  %v457 = vadd.s32 %v415, %v392
  %v458 = vadd.s32 %v415, %v393
  %v459 = vadd.s32 %v415, %v394
  %v460 = vadd.s32 %v415, %v395
  %v461 = vadd.s32 %v415, %v396
  %v462 = vadd.s32 %v415, %v397
  %v463 = vadd.s32 %v415, %v398
  %v464 = vadd.s32 %v415, %v399
  %v465 = vadd.s32 %v415, %v400
  %v466 = vadd.s32 %v415, %v401
  %v467 = vadd.s32 %v415, %v402
  %v468 = vadd.s32 %v415, %v403
  %v469 = vadd.s32 %v415, %v404
  %v470 = vadd.s32 %v415, %v405
  %v471 = vadd.s32 %v415, %v406
  %v472 = vadd.s32 %v415, %v407
  %v473 = vadd.s32 %v415, %v408
  %v474 = vadd.s32 %v415, %v409
  %v475 = vadd.s32 %v415, %v410
  %v476 = vadd.s32 %v415, %v411
  %v477 = vadd.s32 %v415, %v412
  %v478 = vadd.s32 %v415, %v413
  %v479 = vadd.s32 %v415, %v414
  %vm480 = vcmp.lt.s32.totalorder %v416, 128
  %vm481 = vcmp.lt.s32.totalorder %v417, 128
  %vm482 = vcmp.lt.s32.totalorder %v418, 128
  %vm483 = vcmp.lt.s32.totalorder %v419, 128
  %vm484 = vcmp.lt.s32.totalorder %v420, 128
  %vm485 = vcmp.lt.s32.totalorder %v421, 128
  %vm486 = vcmp.lt.s32.totalorder %v422, 128
  %vm487 = vcmp.lt.s32.totalorder %v423, 128
  %vm488 = vcmp.lt.s32.totalorder %v424, 128
  %vm489 = vcmp.lt.s32.totalorder %v425, 128
  %vm490 = vcmp.lt.s32.totalorder %v426, 128
  %vm491 = vcmp.lt.s32.totalorder %v427, 128
  %vm492 = vcmp.lt.s32.totalorder %v428, 128
  %vm493 = vcmp.lt.s32.totalorder %v429, 128
  %vm494 = vcmp.lt.s32.totalorder %v430, 128
  %vm495 = vcmp.lt.s32.totalorder %v431, 128
  %vm496 = vcmp.lt.s32.totalorder %v432, 128
  %vm497 = vcmp.lt.s32.totalorder %v433, 128
  %vm498 = vcmp.lt.s32.totalorder %v434, 128
  %vm499 = vcmp.lt.s32.totalorder %v435, 128
  %vm500 = vcmp.lt.s32.totalorder %v436, 128
  %vm501 = vcmp.lt.s32.totalorder %v437, 128
  %vm502 = vcmp.lt.s32.totalorder %v438, 128
  %vm503 = vcmp.lt.s32.totalorder %v439, 128
  %vm504 = vcmp.lt.s32.totalorder %v440, 128
  %vm505 = vcmp.lt.s32.totalorder %v441, 128
  %vm506 = vcmp.lt.s32.totalorder %v442, 128
  %vm507 = vcmp.lt.s32.totalorder %v443, 128
  %vm508 = vcmp.lt.s32.totalorder %v444, 128
  %vm509 = vcmp.lt.s32.totalorder %v445, 128
  %vm510 = vcmp.lt.s32.totalorder %v446, 128
  %vm511 = vcmp.lt.s32.totalorder %v447, 128
  %vm512 = vcmp.lt.s32.totalorder %v448, 128
  %vm513 = vcmp.lt.s32.totalorder %v449, 128
  %vm514 = vcmp.lt.s32.totalorder %v450, 128
  %vm515 = vcmp.lt.s32.totalorder %v451, 128
  %vm516 = vcmp.lt.s32.totalorder %v452, 128
  %vm517 = vcmp.lt.s32.totalorder %v453, 128
  %vm518 = vcmp.lt.s32.totalorder %v454, 128
  %vm519 = vcmp.lt.s32.totalorder %v455, 128
  %vm520 = vcmp.lt.s32.totalorder %v456, 128
  %vm521 = vcmp.lt.s32.totalorder %v457, 128
  %vm522 = vcmp.lt.s32.totalorder %v458, 128
  %vm523 = vcmp.lt.s32.totalorder %v459, 128
  %vm524 = vcmp.lt.s32.totalorder %v460, 128
  %vm525 = vcmp.lt.s32.totalorder %v461, 128
  %vm526 = vcmp.lt.s32.totalorder %v462, 128
  %vm527 = vcmp.lt.s32.totalorder %v463, 128
  %vm528 = vcmp.lt.s32.totalorder %v464, 128
  %vm529 = vcmp.lt.s32.totalorder %v465, 128
  %vm530 = vcmp.lt.s32.totalorder %v466, 128
  %vm531 = vcmp.lt.s32.totalorder %v467, 128
  %vm532 = vcmp.lt.s32.totalorder %v468, 128
  %vm533 = vcmp.lt.s32.totalorder %v469, 128
  %vm534 = vcmp.lt.s32.totalorder %v470, 128
  %vm535 = vcmp.lt.s32.totalorder %v471, 128
  %vm536 = vcmp.lt.s32.totalorder %v472, 128
  %vm537 = vcmp.lt.s32.totalorder %v473, 128
  %vm538 = vcmp.lt.s32.totalorder %v474, 128
  %vm539 = vcmp.lt.s32.totalorder %v475, 128
  %vm540 = vcmp.lt.s32.totalorder %v476, 128
  %vm541 = vcmp.lt.s32.totalorder %v477, 128
  %vm542 = vcmp.lt.s32.totalorder %v478, 128
  %vm543 = vcmp.lt.s32.totalorder %v479, 128
  %v544 = vsel %vm480, %v285, 0.0
  %v545 = vsel %vm481, %v286, 0.0
  %v546 = vsel %vm482, %v287, 0.0
  %v547 = vsel %vm483, %v288, 0.0
  %v548 = vsel %vm484, %v289, 0.0
  %v549 = vsel %vm485, %v290, 0.0
  %v550 = vsel %vm486, %v291, 0.0
  %v551 = vsel %vm487, %v292, 0.0
  %v552 = vsel %vm488, %v293, 0.0
  %v553 = vsel %vm489, %v294, 0.0
  %v554 = vsel %vm490, %v295, 0.0
  %v555 = vsel %vm491, %v296, 0.0
  %v556 = vsel %vm492, %v297, 0.0
  %v557 = vsel %vm493, %v298, 0.0
  %v558 = vsel %vm494, %v299, 0.0
  %v559 = vsel %vm495, %v300, 0.0
  %v560 = vsel %vm496, %v301, 0.0
  %v561 = vsel %vm497, %v302, 0.0
  %v562 = vsel %vm498, %v303, 0.0
  %v563 = vsel %vm499, %v304, 0.0
  %v564 = vsel %vm500, %v305, 0.0
  %v565 = vsel %vm501, %v306, 0.0
  %v566 = vsel %vm502, %v307, 0.0
  %v567 = vsel %vm503, %v308, 0.0
  %v568 = vsel %vm504, %v309, 0.0
  %v569 = vsel %vm505, %v310, 0.0
  %v570 = vsel %vm506, %v311, 0.0
  %v571 = vsel %vm507, %v312, 0.0
  %v572 = vsel %vm508, %v313, 0.0
  %v573 = vsel %vm509, %v314, 0.0
  %v574 = vsel %vm510, %v315, 0.0
  %v575 = vsel %vm511, %v316, 0.0
  %v576 = vsel %vm512, %v317, 0.0
  %v577 = vsel %vm513, %v318, 0.0
  %v578 = vsel %vm514, %v319, 0.0
  %v579 = vsel %vm515, %v320, 0.0
  %v580 = vsel %vm516, %v321, 0.0
  %v581 = vsel %vm517, %v322, 0.0
  %v582 = vsel %vm518, %v323, 0.0
  %v583 = vsel %vm519, %v324, 0.0
  %v584 = vsel %vm520, %v325, 0.0
  %v585 = vsel %vm521, %v326, 0.0
  %v586 = vsel %vm522, %v327, 0.0
  %v587 = vsel %vm523, %v328, 0.0
  %v588 = vsel %vm524, %v329, 0.0
  %v589 = vsel %vm525, %v330, 0.0
  %v590 = vsel %vm526, %v331, 0.0
  %v591 = vsel %vm527, %v332, 0.0
  %v592 = vsel %vm528, %v333, 0.0
  %v593 = vsel %vm529, %v334, 0.0
  %v594 = vsel %vm530, %v335, 0.0
  %v595 = vsel %vm531, %v336, 0.0
  %v596 = vsel %vm532, %v337, 0.0
  %v597 = vsel %vm533, %v338, 0.0
  %v598 = vsel %vm534, %v339, 0.0
  %v599 = vsel %vm535, %v340, 0.0
  %v600 = vsel %vm536, %v341, 0.0
  %v601 = vsel %vm537, %v342, 0.0
  %v602 = vsel %vm538, %v343, 0.0
  %v603 = vsel %vm539, %v344, 0.0
  %v604 = vsel %vm540, %v345, 0.0
  %v605 = vsel %vm541, %v346, 0.0
  %v606 = vsel %vm542, %v347, 0.0
  %v607 = vsel %vm543, %v348, 0.0
  %v608 = vpack.c.bf16 %v545, %v544
  %v609 = vpack.c.bf16 %v547, %v546
  %v610 = vpack.c.bf16 %v549, %v548
  %v611 = vpack.c.bf16 %v551, %v550
  %v612 = vpack.c.bf16 %v553, %v552
  %v613 = vpack.c.bf16 %v555, %v554
  %v614 = vpack.c.bf16 %v557, %v556
  %v615 = vpack.c.bf16 %v559, %v558
  %v616 = vpack.c.bf16 %v561, %v560
  %v617 = vpack.c.bf16 %v563, %v562
  %v618 = vpack.c.bf16 %v565, %v564
  %v619 = vpack.c.bf16 %v567, %v566
  %v620 = vpack.c.bf16 %v569, %v568
  %v621 = vpack.c.bf16 %v571, %v570
  %v622 = vpack.c.bf16 %v573, %v572
  %v623 = vpack.c.bf16 %v575, %v574
  %v624 = vpack.c.bf16 %v577, %v576
  %v625 = vpack.c.bf16 %v579, %v578
  %v626 = vpack.c.bf16 %v581, %v580
  %v627 = vpack.c.bf16 %v583, %v582
  %v628 = vpack.c.bf16 %v585, %v584
  %v629 = vpack.c.bf16 %v587, %v586
  %v630 = vpack.c.bf16 %v589, %v588
  %v631 = vpack.c.bf16 %v591, %v590
  %v632 = vpack.c.bf16 %v593, %v592
  %v633 = vpack.c.bf16 %v595, %v594
  %v634 = vpack.c.bf16 %v597, %v596
  %v635 = vpack.c.bf16 %v599, %v598
  %v636 = vpack.c.bf16 %v601, %v600
  %v637 = vpack.c.bf16 %v603, %v602
  %v638 = vpack.c.bf16 %v605, %v604
  %v639 = vpack.c.bf16 %v607, %v606
  %v640 = vld [vmem:[%s3] sm:$0xf]
  %v641 = vld [vmem:[%s3 + $0x4] sm:$0xf]
  %v644 = vunpack.c.l.b16 %v640
  %v645 = vunpack.c.l.b16 %v641
  %v646 = vpack.c.b16 %v645, %v644
  %vm648 = vcmask 130048
  %v650 = vsel %vm648, %v608, 0
  %v653 = vsel %vm648, %v609, 0
  %v656 = vsel %vm648, %v610, 0
  %v659 = vsel %vm648, %v611, 0
  %v662 = vsel %vm648, %v612, 0
  %v665 = vsel %vm648, %v613, 0
  %v668 = vsel %vm648, %v614, 0
  %v671 = vsel %vm648, %v615, 0
  %v674 = vsel %vm648, %v616, 0
  %v677 = vsel %vm648, %v617, 0
  %v680 = vsel %vm648, %v618, 0
  %v683 = vsel %vm648, %v619, 0
  %v686 = vsel %vm648, %v620, 0
  %v689 = vsel %vm648, %v621, 0
  %v692 = vsel %vm648, %v622, 0
  %v695 = vsel %vm648, %v623, 0
  %v698 = vsel %vm648, %v624, 0
  %v701 = vsel %vm648, %v625, 0
  %v704 = vsel %vm648, %v626, 0
  %v707 = vsel %vm648, %v627, 0
  %v710 = vsel %vm648, %v628, 0
  %v713 = vsel %vm648, %v629, 0
  %v716 = vsel %vm648, %v630, 0
  %v719 = vsel %vm648, %v631, 0
  %v722 = vsel %vm648, %v632, 0
  %v725 = vsel %vm648, %v633, 0
  %v728 = vsel %vm648, %v634, 0
  %v731 = vsel %vm648, %v635, 0
  %v734 = vsel %vm648, %v636, 0
  %v737 = vsel %vm648, %v637, 0
  %v740 = vsel %vm648, %v638, 0
  %v743 = vsel %vm648, %v639, 0
  %745 = vmatpush.bf16.msra.mxu0 0
  %746 = vmatpush.bf16.msra.mxu0 0
  %747 = vmatpush.bf16.msra.mxu0 0
  %748 = vmatpush.bf16.msra.mxu0 0
  %749 = vmatpush.bf16.msra.mxu0 0
  %750 = vmatpush.bf16.msra.mxu0 0
  %751 = vmatpush.bf16.msra.mxu0 0
  %752 = vmatpush.bf16.msra.mxu0 %v646
  %753 = vmatmul.bf16.gmra.mxu0 %v650
  %v754 = vpop.f32.mrf.mxu0
  %v755 = vadd.f32 0.0, %v754
  %v756 = vpop.f32.mrf.mxu0
  %v757 = vadd.f32 0.0, %v756
  %758 = vmatmul.bf16.gmra.mxu0 %v653
  %v759 = vpop.f32.mrf.mxu0
  %v760 = vadd.f32 0.0, %v759
  %v761 = vpop.f32.mrf.mxu0
  %v762 = vadd.f32 0.0, %v761
  %763 = vmatmul.bf16.gmra.mxu0 %v656
  %v764 = vpop.f32.mrf.mxu0
  %v765 = vadd.f32 0.0, %v764
  %v766 = vpop.f32.mrf.mxu0
  %v767 = vadd.f32 0.0, %v766
  %768 = vmatmul.bf16.gmra.mxu0 %v659
  %v769 = vpop.f32.mrf.mxu0
  %v770 = vadd.f32 0.0, %v769
  %v771 = vpop.f32.mrf.mxu0
  %v772 = vadd.f32 0.0, %v771
  %773 = vmatmul.bf16.gmra.mxu0 %v662
  %v774 = vpop.f32.mrf.mxu0
  %v775 = vadd.f32 0.0, %v774
  %v776 = vpop.f32.mrf.mxu0
  %v777 = vadd.f32 0.0, %v776
  %778 = vmatmul.bf16.gmra.mxu0 %v665
  %v779 = vpop.f32.mrf.mxu0
  %v780 = vadd.f32 0.0, %v779
  %v781 = vpop.f32.mrf.mxu0
  %v782 = vadd.f32 0.0, %v781
  %783 = vmatmul.bf16.gmra.mxu0 %v668
  %v784 = vpop.f32.mrf.mxu0
  %v785 = vadd.f32 0.0, %v784
  %v786 = vpop.f32.mrf.mxu0
  %v787 = vadd.f32 0.0, %v786
  %788 = vmatmul.bf16.gmra.mxu0 %v671
  %v789 = vpop.f32.mrf.mxu0
  %v790 = vadd.f32 0.0, %v789
  %v791 = vpop.f32.mrf.mxu0
  %v792 = vadd.f32 0.0, %v791
  %793 = vmatmul.bf16.gmra.mxu0 %v674
  %v794 = vpop.f32.mrf.mxu0
  %v795 = vadd.f32 0.0, %v794
  %v796 = vpop.f32.mrf.mxu0
  %v797 = vadd.f32 0.0, %v796
  %798 = vmatmul.bf16.gmra.mxu0 %v677
  %v799 = vpop.f32.mrf.mxu0
  %v800 = vadd.f32 0.0, %v799
  %v801 = vpop.f32.mrf.mxu0
  %v802 = vadd.f32 0.0, %v801
  %803 = vmatmul.bf16.gmra.mxu0 %v680
  %v804 = vpop.f32.mrf.mxu0
  %v805 = vadd.f32 0.0, %v804
  %v806 = vpop.f32.mrf.mxu0
  %v807 = vadd.f32 0.0, %v806
  %808 = vmatmul.bf16.gmra.mxu0 %v683
  %v809 = vpop.f32.mrf.mxu0
  %v810 = vadd.f32 0.0, %v809
  %v811 = vpop.f32.mrf.mxu0
  %v812 = vadd.f32 0.0, %v811
  %813 = vmatmul.bf16.gmra.mxu0 %v686
  %v814 = vpop.f32.mrf.mxu0
  %v815 = vadd.f32 0.0, %v814
  %v816 = vpop.f32.mrf.mxu0
  %v817 = vadd.f32 0.0, %v816
  %818 = vmatmul.bf16.gmra.mxu0 %v689
  %v819 = vpop.f32.mrf.mxu0
  %v820 = vadd.f32 0.0, %v819
  %v821 = vpop.f32.mrf.mxu0
  %v822 = vadd.f32 0.0, %v821
  %823 = vmatmul.bf16.gmra.mxu0 %v692
  %v824 = vpop.f32.mrf.mxu0
  %v825 = vadd.f32 0.0, %v824
  %v826 = vpop.f32.mrf.mxu0
  %v827 = vadd.f32 0.0, %v826
  %828 = vmatmul.bf16.gmra.mxu0 %v695
  %v829 = vpop.f32.mrf.mxu0
  %v830 = vadd.f32 0.0, %v829
  %v831 = vpop.f32.mrf.mxu0
  %v832 = vadd.f32 0.0, %v831
  %833 = vmatmul.bf16.gmra.mxu0 %v698
  %v834 = vpop.f32.mrf.mxu0
  %v835 = vadd.f32 0.0, %v834
  %v836 = vpop.f32.mrf.mxu0
  %v837 = vadd.f32 0.0, %v836
  %838 = vmatmul.bf16.gmra.mxu0 %v701
  %v839 = vpop.f32.mrf.mxu0
  %v840 = vadd.f32 0.0, %v839
  %v841 = vpop.f32.mrf.mxu0
  %v842 = vadd.f32 0.0, %v841
  %843 = vmatmul.bf16.gmra.mxu0 %v704
  %v844 = vpop.f32.mrf.mxu0
  %v845 = vadd.f32 0.0, %v844
  %v846 = vpop.f32.mrf.mxu0
  %v847 = vadd.f32 0.0, %v846
  %848 = vmatmul.bf16.gmra.mxu0 %v707
  %v849 = vpop.f32.mrf.mxu0
  %v850 = vadd.f32 0.0, %v849
  %v851 = vpop.f32.mrf.mxu0
  %v852 = vadd.f32 0.0, %v851
  %853 = vmatmul.bf16.gmra.mxu0 %v710
  %v854 = vpop.f32.mrf.mxu0
  %v855 = vadd.f32 0.0, %v854
  %v856 = vpop.f32.mrf.mxu0
  %v857 = vadd.f32 0.0, %v856
  %858 = vmatmul.bf16.gmra.mxu0 %v713
  %v859 = vpop.f32.mrf.mxu0
  %v860 = vadd.f32 0.0, %v859
  %v861 = vpop.f32.mrf.mxu0
  %v862 = vadd.f32 0.0, %v861
  %863 = vmatmul.bf16.gmra.mxu0 %v716
  %v864 = vpop.f32.mrf.mxu0
  %v865 = vadd.f32 0.0, %v864
  %v866 = vpop.f32.mrf.mxu0
  %v867 = vadd.f32 0.0, %v866
  %868 = vmatmul.bf16.gmra.mxu0 %v719
  %v869 = vpop.f32.mrf.mxu0
  %v870 = vadd.f32 0.0, %v869
  %v871 = vpop.f32.mrf.mxu0
  %v872 = vadd.f32 0.0, %v871
  %873 = vmatmul.bf16.gmra.mxu0 %v722
  %v874 = vpop.f32.mrf.mxu0
  %v875 = vadd.f32 0.0, %v874
  %v876 = vpop.f32.mrf.mxu0
  %v877 = vadd.f32 0.0, %v876
  %878 = vmatmul.bf16.gmra.mxu0 %v725
  %v879 = vpop.f32.mrf.mxu0
  %v880 = vadd.f32 0.0, %v879
  %v881 = vpop.f32.mrf.mxu0
  %v882 = vadd.f32 0.0, %v881
  %883 = vmatmul.bf16.gmra.mxu0 %v728
  %v884 = vpop.f32.mrf.mxu0
  %v885 = vadd.f32 0.0, %v884
  %v886 = vpop.f32.mrf.mxu0
  %v887 = vadd.f32 0.0, %v886
  %888 = vmatmul.bf16.gmra.mxu0 %v731
  %v889 = vpop.f32.mrf.mxu0
  %v890 = vadd.f32 0.0, %v889
  %v891 = vpop.f32.mrf.mxu0
  %v892 = vadd.f32 0.0, %v891
  %893 = vmatmul.bf16.gmra.mxu0 %v734
  %v894 = vpop.f32.mrf.mxu0
  %v895 = vadd.f32 0.0, %v894
  %v896 = vpop.f32.mrf.mxu0
  %v897 = vadd.f32 0.0, %v896
  %898 = vmatmul.bf16.gmra.mxu0 %v737
  %v899 = vpop.f32.mrf.mxu0
  %v900 = vadd.f32 0.0, %v899
  %v901 = vpop.f32.mrf.mxu0
  %v902 = vadd.f32 0.0, %v901
  %903 = vmatmul.bf16.gmra.mxu0 %v740
  %v904 = vpop.f32.mrf.mxu0
  %v905 = vadd.f32 0.0, %v904
  %v906 = vpop.f32.mrf.mxu0
  %v907 = vadd.f32 0.0, %v906
  %908 = vmatmul.bf16.gmra.mxu0 %v743
  %v909 = vpop.f32.mrf.mxu0
  %v910 = vadd.f32 0.0, %v909
  %v911 = vpop.f32.mrf.mxu0
  %v912 = vadd.f32 0.0, %v911
  %913 = vdwg.mxu0
  %v914 = vpack.c.bf16 %v755, %v755
  %v915 = vpack.c.bf16 %v757, %v757
  %v916 = vpack.c.bf16 %v760, %v760
  %v917 = vpack.c.bf16 %v762, %v762
  %v918 = vpack.c.bf16 %v765, %v765
  %v919 = vpack.c.bf16 %v767, %v767
  %v920 = vpack.c.bf16 %v770, %v770
  %v921 = vpack.c.bf16 %v772, %v772
  %v922 = vpack.c.bf16 %v775, %v775
  %v923 = vpack.c.bf16 %v777, %v777
  %v924 = vpack.c.bf16 %v780, %v780
  %v925 = vpack.c.bf16 %v782, %v782
  %v926 = vpack.c.bf16 %v785, %v785
  %v927 = vpack.c.bf16 %v787, %v787
  %v928 = vpack.c.bf16 %v790, %v790
  %v929 = vpack.c.bf16 %v792, %v792
  %v930 = vpack.c.bf16 %v795, %v795
  %v931 = vpack.c.bf16 %v797, %v797
  %v932 = vpack.c.bf16 %v800, %v800
  %v933 = vpack.c.bf16 %v802, %v802
  %v934 = vpack.c.bf16 %v805, %v805
  %v935 = vpack.c.bf16 %v807, %v807
  %v936 = vpack.c.bf16 %v810, %v810
  %v937 = vpack.c.bf16 %v812, %v812
  %v938 = vpack.c.bf16 %v815, %v815
  %v939 = vpack.c.bf16 %v817, %v817
  %v940 = vpack.c.bf16 %v820, %v820
  %v941 = vpack.c.bf16 %v822, %v822
  %v942 = vpack.c.bf16 %v825, %v825
  %v943 = vpack.c.bf16 %v827, %v827
  %v944 = vpack.c.bf16 %v830, %v830
  %v945 = vpack.c.bf16 %v832, %v832
  %v946 = vpack.c.bf16 %v835, %v835
  %v947 = vpack.c.bf16 %v837, %v837
  %v948 = vpack.c.bf16 %v840, %v840
  %v949 = vpack.c.bf16 %v842, %v842
  %v950 = vpack.c.bf16 %v845, %v845
  %v951 = vpack.c.bf16 %v847, %v847
  %v952 = vpack.c.bf16 %v850, %v850
  %v953 = vpack.c.bf16 %v852, %v852
  %v954 = vpack.c.bf16 %v855, %v855
  %v955 = vpack.c.bf16 %v857, %v857
  %v956 = vpack.c.bf16 %v860, %v860
  %v957 = vpack.c.bf16 %v862, %v862
  %v958 = vpack.c.bf16 %v865, %v865
  %v959 = vpack.c.bf16 %v867, %v867
  %v960 = vpack.c.bf16 %v870, %v870
  %v961 = vpack.c.bf16 %v872, %v872
  %v962 = vpack.c.bf16 %v875, %v875
  %v963 = vpack.c.bf16 %v877, %v877
  %v964 = vpack.c.bf16 %v880, %v880
  %v965 = vpack.c.bf16 %v882, %v882
  %v966 = vpack.c.bf16 %v885, %v885
  %v967 = vpack.c.bf16 %v887, %v887
  %v968 = vpack.c.bf16 %v890, %v890
  %v969 = vpack.c.bf16 %v892, %v892
  %v970 = vpack.c.bf16 %v895, %v895
  %v971 = vpack.c.bf16 %v897, %v897
  %v972 = vpack.c.bf16 %v900, %v900
  %v973 = vpack.c.bf16 %v902, %v902
  %v974 = vpack.c.bf16 %v905, %v905
  %v975 = vpack.c.bf16 %v907, %v907
  %v976 = vpack.c.bf16 %v910, %v910
  %v977 = vpack.c.bf16 %v912, %v912
  %vm978 = vcmask 60416
  %979 = vst.msk [vmem:[%s4] sm:$0xf] %vm978, %v914
  %980 = vst.msk [vmem:[%s4 + $0x4] sm:$0xf] %vm978, %v915
  %981 = vst.msk [vmem:[%s4 + $0x8] sm:$0xf] %vm978, %v916
  %982 = vst.msk [vmem:[%s4 + $0xc] sm:$0xf] %vm978, %v917
  %983 = vst.msk [vmem:[%s4 + $0x10] sm:$0xf] %vm978, %v918
  %984 = vst.msk [vmem:[%s4 + $0x14] sm:$0xf] %vm978, %v919
  %985 = vst.msk [vmem:[%s4 + $0x18] sm:$0xf] %vm978, %v920
  %986 = vst.msk [vmem:[%s4 + $0x1c] sm:$0xf] %vm978, %v921
  %987 = vst.msk [vmem:[%s4 + $0x20] sm:$0xf] %vm978, %v922
  %988 = vst.msk [vmem:[%s4 + $0x24] sm:$0xf] %vm978, %v923
  %989 = vst.msk [vmem:[%s4 + $0x28] sm:$0xf] %vm978, %v924
  %990 = vst.msk [vmem:[%s4 + $0x2c] sm:$0xf] %vm978, %v925
  %991 = vst.msk [vmem:[%s4 + $0x30] sm:$0xf] %vm978, %v926
  %992 = vst.msk [vmem:[%s4 + $0x34] sm:$0xf] %vm978, %v927
  %993 = vst.msk [vmem:[%s4 + $0x38] sm:$0xf] %vm978, %v928
  %994 = vst.msk [vmem:[%s4 + $0x3c] sm:$0xf] %vm978, %v929
  %995 = vst.msk [vmem:[%s4 + $0x40] sm:$0xf] %vm978, %v930
  %996 = vst.msk [vmem:[%s4 + $0x44] sm:$0xf] %vm978, %v931
  %997 = vst.msk [vmem:[%s4 + $0x48] sm:$0xf] %vm978, %v932
  %998 = vst.msk [vmem:[%s4 + $0x4c] sm:$0xf] %vm978, %v933
  %999 = vst.msk [vmem:[%s4 + $0x50] sm:$0xf] %vm978, %v934
  %1000 = vst.msk [vmem:[%s4 + $0x54] sm:$0xf] %vm978, %v935
  %1001 = vst.msk [vmem:[%s4 + $0x58] sm:$0xf] %vm978, %v936
  %1002 = vst.msk [vmem:[%s4 + $0x5c] sm:$0xf] %vm978, %v937
  %1003 = vst.msk [vmem:[%s4 + $0x60] sm:$0xf] %vm978, %v938
  %1004 = vst.msk [vmem:[%s4 + $0x64] sm:$0xf] %vm978, %v939
  %1005 = vst.msk [vmem:[%s4 + $0x68] sm:$0xf] %vm978, %v940
  %1006 = vst.msk [vmem:[%s4 + $0x6c] sm:$0xf] %vm978, %v941
  %1007 = vst.msk [vmem:[%s4 + $0x70] sm:$0xf] %vm978, %v942
  %1008 = vst.msk [vmem:[%s4 + $0x74] sm:$0xf] %vm978, %v943
  %1009 = vst.msk [vmem:[%s4 + $0x78] sm:$0xf] %vm978, %v944
  %1010 = vst.msk [vmem:[%s4 + $0x7c] sm:$0xf] %vm978, %v945
  %1011 = vst.msk [vmem:[%s4 + $0x80] sm:$0xf] %vm978, %v946
  %1012 = vst.msk [vmem:[%s4 + $0x84] sm:$0xf] %vm978, %v947
  %1013 = vst.msk [vmem:[%s4 + $0x88] sm:$0xf] %vm978, %v948
  %1014 = vst.msk [vmem:[%s4 + $0x8c] sm:$0xf] %vm978, %v949
  %1015 = vst.msk [vmem:[%s4 + $0x90] sm:$0xf] %vm978, %v950
  %1016 = vst.msk [vmem:[%s4 + $0x94] sm:$0xf] %vm978, %v951
  %1017 = vst.msk [vmem:[%s4 + $0x98] sm:$0xf] %vm978, %v952
  %1018 = vst.msk [vmem:[%s4 + $0x9c] sm:$0xf] %vm978, %v953
  %1019 = vst.msk [vmem:[%s4 + $0xa0] sm:$0xf] %vm978, %v954
  %1020 = vst.msk [vmem:[%s4 + $0xa4] sm:$0xf] %vm978, %v955
  %1021 = vst.msk [vmem:[%s4 + $0xa8] sm:$0xf] %vm978, %v956
  %1022 = vst.msk [vmem:[%s4 + $0xac] sm:$0xf] %vm978, %v957
  %1023 = vst.msk [vmem:[%s4 + $0xb0] sm:$0xf] %vm978, %v958
  %1024 = vst.msk [vmem:[%s4 + $0xb4] sm:$0xf] %vm978, %v959
  %1025 = vst.msk [vmem:[%s4 + $0xb8] sm:$0xf] %vm978, %v960
  %1026 = vst.msk [vmem:[%s4 + $0xbc] sm:$0xf] %vm978, %v961
  %1027 = vst.msk [vmem:[%s4 + $0xc0] sm:$0xf] %vm978, %v962
  %1028 = vst.msk [vmem:[%s4 + $0xc4] sm:$0xf] %vm978, %v963
  %1029 = vst.msk [vmem:[%s4 + $0xc8] sm:$0xf] %vm978, %v964
  %1030 = vst.msk [vmem:[%s4 + $0xcc] sm:$0xf] %vm978, %v965
  %1031 = vst.msk [vmem:[%s4 + $0xd0] sm:$0xf] %vm978, %v966
  %1032 = vst.msk [vmem:[%s4 + $0xd4] sm:$0xf] %vm978, %v967
  %1033 = vst.msk [vmem:[%s4 + $0xd8] sm:$0xf] %vm978, %v968
  %1034 = vst.msk [vmem:[%s4 + $0xdc] sm:$0xf] %vm978, %v969
  %1035 = vst.msk [vmem:[%s4 + $0xe0] sm:$0xf] %vm978, %v970
  %1036 = vst.msk [vmem:[%s4 + $0xe4] sm:$0xf] %vm978, %v971
  %1037 = vst.msk [vmem:[%s4 + $0xe8] sm:$0xf] %vm978, %v972
  %1038 = vst.msk [vmem:[%s4 + $0xec] sm:$0xf] %vm978, %v973
  %1039 = vst.msk [vmem:[%s4 + $0xf0] sm:$0xf] %vm978, %v974
  %1040 = vst.msk [vmem:[%s4 + $0xf4] sm:$0xf] %vm978, %v975
  %1041 = vst.msk [vmem:[%s4 + $0xf8] sm:$0xf] %vm978, %v976
  %1042 = vst.msk [vmem:[%s4 + $0xfc] sm:$0xf] %vm978, %v977
  %v1043 = vunpack.c.l.bf16 %v914
  %v1044 = vunpack.c.l.bf16 %v915
  %v1045 = vunpack.c.l.bf16 %v916
  %v1046 = vunpack.c.l.bf16 %v917
  %v1047 = vunpack.c.l.bf16 %v918
  %v1048 = vunpack.c.l.bf16 %v919
  %v1049 = vunpack.c.l.bf16 %v920
  %v1050 = vunpack.c.l.bf16 %v921
  %v1051 = vunpack.c.l.bf16 %v922
  %v1052 = vunpack.c.l.bf16 %v923
  %v1053 = vunpack.c.l.bf16 %v924
  %v1054 = vunpack.c.l.bf16 %v925
  %v1055 = vunpack.c.l.bf16 %v926
  %v1056 = vunpack.c.l.bf16 %v927
  %v1057 = vunpack.c.l.bf16 %v928
  %v1058 = vunpack.c.l.bf16 %v929
  %v1059 = vunpack.c.l.bf16 %v930
  %v1060 = vunpack.c.l.bf16 %v931
  %v1061 = vunpack.c.l.bf16 %v932
  %v1062 = vunpack.c.l.bf16 %v933
  %v1063 = vunpack.c.l.bf16 %v934
  %v1064 = vunpack.c.l.bf16 %v935
  %v1065 = vunpack.c.l.bf16 %v936
  %v1066 = vunpack.c.l.bf16 %v937
  %v1067 = vunpack.c.l.bf16 %v938
  %v1068 = vunpack.c.l.bf16 %v939
  %v1069 = vunpack.c.l.bf16 %v940
  %v1070 = vunpack.c.l.bf16 %v941
  %v1071 = vunpack.c.l.bf16 %v942
  %v1072 = vunpack.c.l.bf16 %v943
  %v1073 = vunpack.c.l.bf16 %v944
  %v1074 = vunpack.c.l.bf16 %v945
  %v1075 = vunpack.c.l.bf16 %v946
  %v1076 = vunpack.c.l.bf16 %v947
  %v1077 = vunpack.c.l.bf16 %v948
  %v1078 = vunpack.c.l.bf16 %v949
  %v1079 = vunpack.c.l.bf16 %v950
  %v1080 = vunpack.c.l.bf16 %v951
  %v1081 = vunpack.c.l.bf16 %v952
  %v1082 = vunpack.c.l.bf16 %v953
  %v1083 = vunpack.c.l.bf16 %v954
  %v1084 = vunpack.c.l.bf16 %v955
  %v1085 = vunpack.c.l.bf16 %v956
  %v1086 = vunpack.c.l.bf16 %v957
  %v1087 = vunpack.c.l.bf16 %v958
  %v1088 = vunpack.c.l.bf16 %v959
  %v1089 = vunpack.c.l.bf16 %v960
  %v1090 = vunpack.c.l.bf16 %v961
  %v1091 = vunpack.c.l.bf16 %v962
  %v1092 = vunpack.c.l.bf16 %v963
  %v1093 = vunpack.c.l.bf16 %v964
  %v1094 = vunpack.c.l.bf16 %v965
  %v1095 = vunpack.c.l.bf16 %v966
  %v1096 = vunpack.c.l.bf16 %v967
  %v1097 = vunpack.c.l.bf16 %v968
  %v1098 = vunpack.c.l.bf16 %v969
  %v1099 = vunpack.c.l.bf16 %v970
  %v1100 = vunpack.c.l.bf16 %v971
  %v1101 = vunpack.c.l.bf16 %v972
  %v1102 = vunpack.c.l.bf16 %v973
  %v1103 = vunpack.c.l.bf16 %v974
  %v1104 = vunpack.c.l.bf16 %v975
  %v1105 = vunpack.c.l.bf16 %v976
  %v1106 = vunpack.c.l.bf16 %v977
  %vm1107 = vcmask 64512
  %v1108 = vsel %vm1107, %v1043, 0.0
  %v1109 = vsel %vm1107, %v1044, 0.0
  %v1110 = vadd.f32 %v1108, %v1109
  %v1111 = vsel %vm1107, %v1045, 0.0
  %v1112 = vadd.f32 %v1110, %v1111
  %v1113 = vsel %vm1107, %v1046, 0.0
  %v1114 = vadd.f32 %v1112, %v1113
  %v1115 = vsel %vm1107, %v1047, 0.0
  %v1116 = vadd.f32 %v1114, %v1115
  %v1117 = vsel %vm1107, %v1048, 0.0
  %v1118 = vadd.f32 %v1116, %v1117
  %v1119 = vsel %vm1107, %v1049, 0.0
  %v1120 = vadd.f32 %v1118, %v1119
  %v1121 = vsel %vm1107, %v1050, 0.0
  %v1122 = vadd.f32 %v1120, %v1121
  %v1123 = vsel %vm1107, %v1051, 0.0
  %v1124 = vadd.f32 %v1122, %v1123
  %v1125 = vsel %vm1107, %v1052, 0.0
  %v1126 = vadd.f32 %v1124, %v1125
  %v1127 = vsel %vm1107, %v1053, 0.0
  %v1128 = vadd.f32 %v1126, %v1127
  %v1129 = vsel %vm1107, %v1054, 0.0
  %v1130 = vadd.f32 %v1128, %v1129
  %v1131 = vsel %vm1107, %v1055, 0.0
  %v1132 = vadd.f32 %v1130, %v1131
  %v1133 = vsel %vm1107, %v1056, 0.0
  %v1134 = vadd.f32 %v1132, %v1133
  %v1135 = vsel %vm1107, %v1057, 0.0
  %v1136 = vadd.f32 %v1134, %v1135
  %v1137 = vsel %vm1107, %v1058, 0.0
  %v1138 = vadd.f32 %v1136, %v1137
  %v1139 = vsel %vm1107, %v1059, 0.0
  %v1140 = vadd.f32 %v1138, %v1139
  %v1141 = vsel %vm1107, %v1060, 0.0
  %v1142 = vadd.f32 %v1140, %v1141
  %v1143 = vsel %vm1107, %v1061, 0.0
  %v1144 = vadd.f32 %v1142, %v1143
  %v1145 = vsel %vm1107, %v1062, 0.0
  %v1146 = vadd.f32 %v1144, %v1145
  %v1147 = vsel %vm1107, %v1063, 0.0
  %v1148 = vadd.f32 %v1146, %v1147
  %v1149 = vsel %vm1107, %v1064, 0.0
  %v1150 = vadd.f32 %v1148, %v1149
  %v1151 = vsel %vm1107, %v1065, 0.0
  %v1152 = vadd.f32 %v1150, %v1151
  %v1153 = vsel %vm1107, %v1066, 0.0
  %v1154 = vadd.f32 %v1152, %v1153
  %v1155 = vsel %vm1107, %v1067, 0.0
  %v1156 = vadd.f32 %v1154, %v1155
  %v1157 = vsel %vm1107, %v1068, 0.0
  %v1158 = vadd.f32 %v1156, %v1157
  %v1159 = vsel %vm1107, %v1069, 0.0
  %v1160 = vadd.f32 %v1158, %v1159
  %v1161 = vsel %vm1107, %v1070, 0.0
  %v1162 = vadd.f32 %v1160, %v1161
  %v1163 = vsel %vm1107, %v1071, 0.0
  %v1164 = vadd.f32 %v1162, %v1163
  %v1165 = vsel %vm1107, %v1072, 0.0
  %v1166 = vadd.f32 %v1164, %v1165
  %v1167 = vsel %vm1107, %v1073, 0.0
  %v1168 = vadd.f32 %v1166, %v1167
  %v1169 = vsel %vm1107, %v1074, 0.0
  %v1170 = vadd.f32 %v1168, %v1169
  %v1171 = vsel %vm1107, %v1075, 0.0
  %v1172 = vadd.f32 %v1170, %v1171
  %v1173 = vsel %vm1107, %v1076, 0.0
  %v1174 = vadd.f32 %v1172, %v1173
  %v1175 = vsel %vm1107, %v1077, 0.0
  %v1176 = vadd.f32 %v1174, %v1175
  %v1177 = vsel %vm1107, %v1078, 0.0
  %v1178 = vadd.f32 %v1176, %v1177
  %v1179 = vsel %vm1107, %v1079, 0.0
  %v1180 = vadd.f32 %v1178, %v1179
  %v1181 = vsel %vm1107, %v1080, 0.0
  %v1182 = vadd.f32 %v1180, %v1181
  %v1183 = vsel %vm1107, %v1081, 0.0
  %v1184 = vadd.f32 %v1182, %v1183
  %v1185 = vsel %vm1107, %v1082, 0.0
  %v1186 = vadd.f32 %v1184, %v1185
  %v1187 = vsel %vm1107, %v1083, 0.0
  %v1188 = vadd.f32 %v1186, %v1187
  %v1189 = vsel %vm1107, %v1084, 0.0
  %v1190 = vadd.f32 %v1188, %v1189
  %v1191 = vsel %vm1107, %v1085, 0.0
  %v1192 = vadd.f32 %v1190, %v1191
  %v1193 = vsel %vm1107, %v1086, 0.0
  %v1194 = vadd.f32 %v1192, %v1193
  %v1195 = vsel %vm1107, %v1087, 0.0
  %v1196 = vadd.f32 %v1194, %v1195
  %v1197 = vsel %vm1107, %v1088, 0.0
  %v1198 = vadd.f32 %v1196, %v1197
  %v1199 = vsel %vm1107, %v1089, 0.0
  %v1200 = vadd.f32 %v1198, %v1199
  %v1201 = vsel %vm1107, %v1090, 0.0
  %v1202 = vadd.f32 %v1200, %v1201
  %v1203 = vsel %vm1107, %v1091, 0.0
  %v1204 = vadd.f32 %v1202, %v1203
  %v1205 = vsel %vm1107, %v1092, 0.0
  %v1206 = vadd.f32 %v1204, %v1205
  %v1207 = vsel %vm1107, %v1093, 0.0
  %v1208 = vadd.f32 %v1206, %v1207
  %v1209 = vsel %vm1107, %v1094, 0.0
  %v1210 = vadd.f32 %v1208, %v1209
  %v1211 = vsel %vm1107, %v1095, 0.0
  %v1212 = vadd.f32 %v1210, %v1211
  %v1213 = vsel %vm1107, %v1096, 0.0
  %v1214 = vadd.f32 %v1212, %v1213
  %v1215 = vsel %vm1107, %v1097, 0.0
  %v1216 = vadd.f32 %v1214, %v1215
  %v1217 = vsel %vm1107, %v1098, 0.0
  %v1218 = vadd.f32 %v1216, %v1217
  %v1219 = vsel %vm1107, %v1099, 0.0
  %v1220 = vadd.f32 %v1218, %v1219
  %v1221 = vsel %vm1107, %v1100, 0.0
  %v1222 = vadd.f32 %v1220, %v1221
  %v1223 = vsel %vm1107, %v1101, 0.0
  %v1224 = vadd.f32 %v1222, %v1223
  %v1225 = vsel %vm1107, %v1102, 0.0
  %v1226 = vadd.f32 %v1224, %v1225
  %v1227 = vsel %vm1107, %v1103, 0.0
  %v1228 = vadd.f32 %v1226, %v1227
  %v1229 = vsel %vm1107, %v1104, 0.0
  %v1230 = vadd.f32 %v1228, %v1229
  %v1231 = vsel %vm1107, %v1105, 0.0
  %v1232 = vadd.f32 %v1230, %v1231
  %v1233 = vsel %vm1107, %v1106, 0.0
  %v1234 = vadd.f32 %v1232, %v1233
  %v1235 = vrot.slane %v1234, 4
  %v1236 = vadd.f32 %v1234, %v1235
  %v1237 = vrot.slane %v1236, 2
  %v1238 = vadd.f32 %v1236, %v1237
  %v1239 = vrot.slane %v1238, 1
  %v1240 = vadd.f32 %v1238, %v1239
  %vm1241 = vcmask 57344
  %1242 = vst.msk [vmem:[%s5] sm:$0x1] %vm1241, %v1240
  %v1243 = vmul.f32 %v1043, %v1043
  %v1244 = vmul.f32 %v1044, %v1044
  %v1245 = vmul.f32 %v1045, %v1045
  %v1246 = vmul.f32 %v1046, %v1046
  %v1247 = vmul.f32 %v1047, %v1047
  %v1248 = vmul.f32 %v1048, %v1048
  %v1249 = vmul.f32 %v1049, %v1049
  %v1250 = vmul.f32 %v1050, %v1050
  %v1251 = vmul.f32 %v1051, %v1051
  %v1252 = vmul.f32 %v1052, %v1052
  %v1253 = vmul.f32 %v1053, %v1053
  %v1254 = vmul.f32 %v1054, %v1054
  %v1255 = vmul.f32 %v1055, %v1055
  %v1256 = vmul.f32 %v1056, %v1056
  %v1257 = vmul.f32 %v1057, %v1057
  %v1258 = vmul.f32 %v1058, %v1058
  %v1259 = vmul.f32 %v1059, %v1059
  %v1260 = vmul.f32 %v1060, %v1060
  %v1261 = vmul.f32 %v1061, %v1061
  %v1262 = vmul.f32 %v1062, %v1062
  %v1263 = vmul.f32 %v1063, %v1063
  %v1264 = vmul.f32 %v1064, %v1064
  %v1265 = vmul.f32 %v1065, %v1065
  %v1266 = vmul.f32 %v1066, %v1066
  %v1267 = vmul.f32 %v1067, %v1067
  %v1268 = vmul.f32 %v1068, %v1068
  %v1269 = vmul.f32 %v1069, %v1069
  %v1270 = vmul.f32 %v1070, %v1070
  %v1271 = vmul.f32 %v1071, %v1071
  %v1272 = vmul.f32 %v1072, %v1072
  %v1273 = vmul.f32 %v1073, %v1073
  %v1274 = vmul.f32 %v1074, %v1074
  %v1275 = vmul.f32 %v1075, %v1075
  %v1276 = vmul.f32 %v1076, %v1076
  %v1277 = vmul.f32 %v1077, %v1077
  %v1278 = vmul.f32 %v1078, %v1078
  %v1279 = vmul.f32 %v1079, %v1079
  %v1280 = vmul.f32 %v1080, %v1080
  %v1281 = vmul.f32 %v1081, %v1081
  %v1282 = vmul.f32 %v1082, %v1082
  %v1283 = vmul.f32 %v1083, %v1083
  %v1284 = vmul.f32 %v1084, %v1084
  %v1285 = vmul.f32 %v1085, %v1085
  %v1286 = vmul.f32 %v1086, %v1086
  %v1287 = vmul.f32 %v1087, %v1087
  %v1288 = vmul.f32 %v1088, %v1088
  %v1289 = vmul.f32 %v1089, %v1089
  %v1290 = vmul.f32 %v1090, %v1090
  %v1291 = vmul.f32 %v1091, %v1091
  %v1292 = vmul.f32 %v1092, %v1092
  %v1293 = vmul.f32 %v1093, %v1093
  %v1294 = vmul.f32 %v1094, %v1094
  %v1295 = vmul.f32 %v1095, %v1095
  %v1296 = vmul.f32 %v1096, %v1096
  %v1297 = vmul.f32 %v1097, %v1097
  %v1298 = vmul.f32 %v1098, %v1098
  %v1299 = vmul.f32 %v1099, %v1099
  %v1300 = vmul.f32 %v1100, %v1100
  %v1301 = vmul.f32 %v1101, %v1101
  %v1302 = vmul.f32 %v1102, %v1102
  %v1303 = vmul.f32 %v1103, %v1103
  %v1304 = vmul.f32 %v1104, %v1104
  %v1305 = vmul.f32 %v1105, %v1105
  %v1306 = vmul.f32 %v1106, %v1106
  %v1307 = vsel %vm1107, %v1243, 0.0
  %v1308 = vsel %vm1107, %v1244, 0.0
  %v1309 = vadd.f32 %v1307, %v1308
  %v1310 = vsel %vm1107, %v1245, 0.0
  %v1311 = vadd.f32 %v1309, %v1310
  %v1312 = vsel %vm1107, %v1246, 0.0
  %v1313 = vadd.f32 %v1311, %v1312
  %v1314 = vsel %vm1107, %v1247, 0.0
  %v1315 = vadd.f32 %v1313, %v1314
  %v1316 = vsel %vm1107, %v1248, 0.0
  %v1317 = vadd.f32 %v1315, %v1316
  %v1318 = vsel %vm1107, %v1249, 0.0
  %v1319 = vadd.f32 %v1317, %v1318
  %v1320 = vsel %vm1107, %v1250, 0.0
  %v1321 = vadd.f32 %v1319, %v1320
  %v1322 = vsel %vm1107, %v1251, 0.0
  %v1323 = vadd.f32 %v1321, %v1322
  %v1324 = vsel %vm1107, %v1252, 0.0
  %v1325 = vadd.f32 %v1323, %v1324
  %v1326 = vsel %vm1107, %v1253, 0.0
  %v1327 = vadd.f32 %v1325, %v1326
  %v1328 = vsel %vm1107, %v1254, 0.0
  %v1329 = vadd.f32 %v1327, %v1328
  %v1330 = vsel %vm1107, %v1255, 0.0
  %v1331 = vadd.f32 %v1329, %v1330
  %v1332 = vsel %vm1107, %v1256, 0.0
  %v1333 = vadd.f32 %v1331, %v1332
  %v1334 = vsel %vm1107, %v1257, 0.0
  %v1335 = vadd.f32 %v1333, %v1334
  %v1336 = vsel %vm1107, %v1258, 0.0
  %v1337 = vadd.f32 %v1335, %v1336
  %v1338 = vsel %vm1107, %v1259, 0.0
  %v1339 = vadd.f32 %v1337, %v1338
  %v1340 = vsel %vm1107, %v1260, 0.0
  %v1341 = vadd.f32 %v1339, %v1340
  %v1342 = vsel %vm1107, %v1261, 0.0
  %v1343 = vadd.f32 %v1341, %v1342
  %v1344 = vsel %vm1107, %v1262, 0.0
  %v1345 = vadd.f32 %v1343, %v1344
  %v1346 = vsel %vm1107, %v1263, 0.0
  %v1347 = vadd.f32 %v1345, %v1346
  %v1348 = vsel %vm1107, %v1264, 0.0
  %v1349 = vadd.f32 %v1347, %v1348
  %v1350 = vsel %vm1107, %v1265, 0.0
  %v1351 = vadd.f32 %v1349, %v1350
  %v1352 = vsel %vm1107, %v1266, 0.0
  %v1353 = vadd.f32 %v1351, %v1352
  %v1354 = vsel %vm1107, %v1267, 0.0
  %v1355 = vadd.f32 %v1353, %v1354
  %v1356 = vsel %vm1107, %v1268, 0.0
  %v1357 = vadd.f32 %v1355, %v1356
  %v1358 = vsel %vm1107, %v1269, 0.0
  %v1359 = vadd.f32 %v1357, %v1358
  %v1360 = vsel %vm1107, %v1270, 0.0
  %v1361 = vadd.f32 %v1359, %v1360
  %v1362 = vsel %vm1107, %v1271, 0.0
  %v1363 = vadd.f32 %v1361, %v1362
  %v1364 = vsel %vm1107, %v1272, 0.0
  %v1365 = vadd.f32 %v1363, %v1364
  %v1366 = vsel %vm1107, %v1273, 0.0
  %v1367 = vadd.f32 %v1365, %v1366
  %v1368 = vsel %vm1107, %v1274, 0.0
  %v1369 = vadd.f32 %v1367, %v1368
  %v1370 = vsel %vm1107, %v1275, 0.0
  %v1371 = vadd.f32 %v1369, %v1370
  %v1372 = vsel %vm1107, %v1276, 0.0
  %v1373 = vadd.f32 %v1371, %v1372
  %v1374 = vsel %vm1107, %v1277, 0.0
  %v1375 = vadd.f32 %v1373, %v1374
  %v1376 = vsel %vm1107, %v1278, 0.0
  %v1377 = vadd.f32 %v1375, %v1376
  %v1378 = vsel %vm1107, %v1279, 0.0
  %v1379 = vadd.f32 %v1377, %v1378
  %v1380 = vsel %vm1107, %v1280, 0.0
  %v1381 = vadd.f32 %v1379, %v1380
  %v1382 = vsel %vm1107, %v1281, 0.0
  %v1383 = vadd.f32 %v1381, %v1382
  %v1384 = vsel %vm1107, %v1282, 0.0
  %v1385 = vadd.f32 %v1383, %v1384
  %v1386 = vsel %vm1107, %v1283, 0.0
  %v1387 = vadd.f32 %v1385, %v1386
  %v1388 = vsel %vm1107, %v1284, 0.0
  %v1389 = vadd.f32 %v1387, %v1388
  %v1390 = vsel %vm1107, %v1285, 0.0
  %v1391 = vadd.f32 %v1389, %v1390
  %v1392 = vsel %vm1107, %v1286, 0.0
  %v1393 = vadd.f32 %v1391, %v1392
  %v1394 = vsel %vm1107, %v1287, 0.0
  %v1395 = vadd.f32 %v1393, %v1394
  %v1396 = vsel %vm1107, %v1288, 0.0
  %v1397 = vadd.f32 %v1395, %v1396
  %v1398 = vsel %vm1107, %v1289, 0.0
  %v1399 = vadd.f32 %v1397, %v1398
  %v1400 = vsel %vm1107, %v1290, 0.0
  %v1401 = vadd.f32 %v1399, %v1400
  %v1402 = vsel %vm1107, %v1291, 0.0
  %v1403 = vadd.f32 %v1401, %v1402
  %v1404 = vsel %vm1107, %v1292, 0.0
  %v1405 = vadd.f32 %v1403, %v1404
  %v1406 = vsel %vm1107, %v1293, 0.0
  %v1407 = vadd.f32 %v1405, %v1406
  %v1408 = vsel %vm1107, %v1294, 0.0
  %v1409 = vadd.f32 %v1407, %v1408
  %v1410 = vsel %vm1107, %v1295, 0.0
  %v1411 = vadd.f32 %v1409, %v1410
  %v1412 = vsel %vm1107, %v1296, 0.0
  %v1413 = vadd.f32 %v1411, %v1412
  %v1414 = vsel %vm1107, %v1297, 0.0
  %v1415 = vadd.f32 %v1413, %v1414
  %v1416 = vsel %vm1107, %v1298, 0.0
  %v1417 = vadd.f32 %v1415, %v1416
  %v1418 = vsel %vm1107, %v1299, 0.0
  %v1419 = vadd.f32 %v1417, %v1418
  %v1420 = vsel %vm1107, %v1300, 0.0
  %v1421 = vadd.f32 %v1419, %v1420
  %v1422 = vsel %vm1107, %v1301, 0.0
  %v1423 = vadd.f32 %v1421, %v1422
  %v1424 = vsel %vm1107, %v1302, 0.0
  %v1425 = vadd.f32 %v1423, %v1424
  %v1426 = vsel %vm1107, %v1303, 0.0
  %v1427 = vadd.f32 %v1425, %v1426
  %v1428 = vsel %vm1107, %v1304, 0.0
  %v1429 = vadd.f32 %v1427, %v1428
  %v1430 = vsel %vm1107, %v1305, 0.0
  %v1431 = vadd.f32 %v1429, %v1430
  %v1432 = vsel %vm1107, %v1306, 0.0
  %v1433 = vadd.f32 %v1431, %v1432
  %v1434 = vrot.slane %v1433, 4
  %v1435 = vadd.f32 %v1433, %v1434
  %v1436 = vrot.slane %v1435, 2
  %v1437 = vadd.f32 %v1435, %v1436
  %v1438 = vrot.slane %v1437, 1
  %v1439 = vadd.f32 %v1437, %v1438
  %1440 = vst.msk [vmem:[%s6] sm:$0x1] %vm1241, %v1439
  // Predicated region
  $region18: #{pointgencon_forward.6} parent=0 // pred_check
    _
  $region19: #{pointgencon_forward.6} parent=0 // pred_check_branch
    %1442 = sbr.rel (0) target = $region21
  $region20: #{pointgencon_forward.6} parent=0 // pred_region
    _
  $region21: #{pointgencon_forward.6} parent=0 // pred_fallthru
    _
  // Predicated region
  $region22: #{pointgencon_forward.6} parent=0 // pred_check
    _
  $region23: #{pointgencon_forward.6} parent=0 // pred_check_branch
    %1444 = sbr.rel (0) target = $region25
  $region24: #{pointgencon_forward.6} parent=0 // pred_region
    _
  $region25: #{pointgencon_forward.6} parent=0 // pred_fallthru
    _
  // Predicated region
  $region26: #{pointgencon_forward.6} parent=0 // pred_check
    _
  $region27: #{pointgencon_forward.6} parent=0 // pred_check_branch
    %1446 = sbr.rel (0) target = $region29
  $region28: #{pointgencon_forward.6} parent=0 // pred_region
    _
  $region29: #{pointgencon_forward.6} parent=0 // pred_fallthru
    _
  // Predicated region
  $region30: #{pointgencon_forward.6} parent=0 // pred_check
    _
  $region31: #{pointgencon_forward.6} parent=0 // pred_check_branch
    %1448 = sbr.rel (0) target = $region33
  $region32: #{pointgencon_forward.6} parent=0 // pred_region
    _
  $region33: #{pointgencon_forward.6} parent=0 // pred_fallthru
    _
  // Predicated region
  $region34: #{pointgencon_forward.6} parent=0 // pred_check
    _
  $region35: #{pointgencon_forward.6} parent=0 // pred_check_branch
    %1450 = sbr.rel (0) target = $region37
  $region36: #{pointgencon_forward.6} parent=0 // pred_region
    _
  $region37: #{pointgencon_forward.6} parent=0 // pred_fallthru
    _
  // Predicated region
  $region38: #{pointgencon_forward.6} parent=0 // pred_check
    _
  $region39: #{pointgencon_forward.6} parent=0 // pred_check_branch
    %1452 = sbr.rel (0) target = $region41
  $region40: #{pointgencon_forward.6} parent=0 // pred_region
    _
  $region41: #{pointgencon_forward.6} parent=0 // pred_fallthru
    _

// kernel: pointgencon_forward.5
$region0: #{pointgencon_forward.5}
  #allocation0 [shape = 'u32[]', space=smem, size = 0x4, offset = 0x4, fixed_abs, tag = 'smem constant byte address 0x4 - core index']
  #allocation1 [shape = 'u32[72,128]{1,0:T(1,128)}', space=vmem, size = 0x9000, scoped, tag = 'internal scratch']
  %s0 = inlined_call_operand.vmem [shape: bf16[512,32], index: 0, kind: input, shape index: {}]
  %s1 = inlined_call_operand.vmem [shape: f32[1,32], index: 1, kind: input, shape index: {}]
  %s2 = inlined_call_operand.vmem [shape: f32[1,32], index: 2, kind: input, shape index: {}]
  %s3 = inlined_call_operand.vmem [shape: bf16[32,16], index: 3, kind: input, shape index: {}]
  %s4 = inlined_call_operand.vmem [shape: bf16[512,16], index: 4, kind: output, shape index: {0}]
  %s5 = inlined_call_operand.vmem [shape: f32[1,1,16], index: 5, kind: output, shape index: {1}]
  %s6 = inlined_call_operand.vmem [shape: f32[1,1,16], index: 6, kind: output, shape index: {2}]
  %7 = xla_tuple %s4, %s5, %s6
  %s8 = sld [smem:[#allocation0]]
  $region42: #{pointgencon_forward.5} parent=0
    _
  %s10 = ssub.s32 1, %s8
  %s11 = scalar_select 0, %s10, %s8
  // Predicated region
  $region2: #{pointgencon_forward.5} parent=0 // pred_check
    _
  $region3: #{pointgencon_forward.5} parent=0 // pred_check_branch
    %13 = sbr.rel (0) target = $region5
  $region4: #{pointgencon_forward.5} parent=0 // pred_region
    _
  $region5: #{pointgencon_forward.5} parent=0 // pred_fallthru
    _
  // Predicated region
  $region6: #{pointgencon_forward.5} parent=0 // pred_check
    _
  $region7: #{pointgencon_forward.5} parent=0 // pred_check_branch
    %15 = sbr.rel (0) target = $region9
  $region8: #{pointgencon_forward.5} parent=0 // pred_region
    _
  $region9: #{pointgencon_forward.5} parent=0 // pred_fallthru
    _
  // Predicated region
  $region10: #{pointgencon_forward.5} parent=0 // pred_check
    _
  $region11: #{pointgencon_forward.5} parent=0 // pred_check_branch
    %17 = sbr.rel (0) target = $region13
  $region12: #{pointgencon_forward.5} parent=0 // pred_region
    _
  $region13: #{pointgencon_forward.5} parent=0 // pred_fallthru
    _
  // Predicated region
  $region14: #{pointgencon_forward.5} parent=0 // pred_check
    _
  $region15: #{pointgencon_forward.5} parent=0 // pred_check_branch
    %19 = sbr.rel (0) target = $region17
  $region16: #{pointgencon_forward.5} parent=0 // pred_region
    _
  $region17: #{pointgencon_forward.5} parent=0 // pred_fallthru
    _
  %v21 = vld [vmem:[%s0] sm:$0xf]
  %v22 = vld [vmem:[%s0 + $0x4] sm:$0xf]
  %v23 = vld [vmem:[%s0 + $0x8] sm:$0xf]
  %v24 = vld [vmem:[%s0 + $0xc] sm:$0xf]
  %v25 = vld [vmem:[%s0 + $0x10] sm:$0xf]
  %v26 = vld [vmem:[%s0 + $0x14] sm:$0xf]
  %v27 = vld [vmem:[%s0 + $0x18] sm:$0xf]
  %v28 = vld [vmem:[%s0 + $0x1c] sm:$0xf]
  %v29 = vld [vmem:[%s0 + $0x20] sm:$0xf]
  %v30 = vld [vmem:[%s0 + $0x24] sm:$0xf]
  %v31 = vld [vmem:[%s0 + $0x28] sm:$0xf]
  %v32 = vld [vmem:[%s0 + $0x2c] sm:$0xf]
  %v33 = vld [vmem:[%s0 + $0x30] sm:$0xf]
  %v34 = vld [vmem:[%s0 + $0x34] sm:$0xf]
  %v35 = vld [vmem:[%s0 + $0x38] sm:$0xf]
  %v36 = vld [vmem:[%s0 + $0x3c] sm:$0xf]
  %v37 = vld [vmem:[%s0 + $0x40] sm:$0xf]
  %v38 = vld [vmem:[%s0 + $0x44] sm:$0xf]
  %v39 = vld [vmem:[%s0 + $0x48] sm:$0xf]
  %v40 = vld [vmem:[%s0 + $0x4c] sm:$0xf]
  %v41 = vld [vmem:[%s0 + $0x50] sm:$0xf]
  %v42 = vld [vmem:[%s0 + $0x54] sm:$0xf]
  %v43 = vld [vmem:[%s0 + $0x58] sm:$0xf]
  %v44 = vld [vmem:[%s0 + $0x5c] sm:$0xf]
  %v45 = vld [vmem:[%s0 + $0x60] sm:$0xf]
  %v46 = vld [vmem:[%s0 + $0x64] sm:$0xf]
  %v47 = vld [vmem:[%s0 + $0x68] sm:$0xf]
  %v48 = vld [vmem:[%s0 + $0x6c] sm:$0xf]
  %v49 = vld [vmem:[%s0 + $0x70] sm:$0xf]
  %v50 = vld [vmem:[%s0 + $0x74] sm:$0xf]
  %v51 = vld [vmem:[%s0 + $0x78] sm:$0xf]
  %v52 = vld [vmem:[%s0 + $0x7c] sm:$0xf]
  %v53 = vld [vmem:[%s0 + $0x80] sm:$0xf]
  %v54 = vld [vmem:[%s0 + $0x84] sm:$0xf]
  %v55 = vld [vmem:[%s0 + $0x88] sm:$0xf]
  %v56 = vld [vmem:[%s0 + $0x8c] sm:$0xf]
  %v57 = vld [vmem:[%s0 + $0x90] sm:$0xf]
  %v58 = vld [vmem:[%s0 + $0x94] sm:$0xf]
  %v59 = vld [vmem:[%s0 + $0x98] sm:$0xf]
  %v60 = vld [vmem:[%s0 + $0x9c] sm:$0xf]
  %v61 = vld [vmem:[%s0 + $0xa0] sm:$0xf]
  %v62 = vld [vmem:[%s0 + $0xa4] sm:$0xf]
  %v63 = vld [vmem:[%s0 + $0xa8] sm:$0xf]
  %v64 = vld [vmem:[%s0 + $0xac] sm:$0xf]
  %v65 = vld [vmem:[%s0 + $0xb0] sm:$0xf]
  %v66 = vld [vmem:[%s0 + $0xb4] sm:$0xf]
  %v67 = vld [vmem:[%s0 + $0xb8] sm:$0xf]
  %v68 = vld [vmem:[%s0 + $0xbc] sm:$0xf]
  %v69 = vld [vmem:[%s0 + $0xc0] sm:$0xf]
  %v70 = vld [vmem:[%s0 + $0xc4] sm:$0xf]
  %v71 = vld [vmem:[%s0 + $0xc8] sm:$0xf]
  %v72 = vld [vmem:[%s0 + $0xcc] sm:$0xf]
  %v73 = vld [vmem:[%s0 + $0xd0] sm:$0xf]
  %v74 = vld [vmem:[%s0 + $0xd4] sm:$0xf]
  %v75 = vld [vmem:[%s0 + $0xd8] sm:$0xf]
  %v76 = vld [vmem:[%s0 + $0xdc] sm:$0xf]
  %v77 = vld [vmem:[%s0 + $0xe0] sm:$0xf]
  %v78 = vld [vmem:[%s0 + $0xe4] sm:$0xf]
  %v79 = vld [vmem:[%s0 + $0xe8] sm:$0xf]
  %v80 = vld [vmem:[%s0 + $0xec] sm:$0xf]
  %v81 = vld [vmem:[%s0 + $0xf0] sm:$0xf]
  %v82 = vld [vmem:[%s0 + $0xf4] sm:$0xf]
  %v83 = vld [vmem:[%s0 + $0xf8] sm:$0xf]
  %v84 = vld [vmem:[%s0 + $0xfc] sm:$0xf]
  %v85 = vunpack.c.l.bf16 %v21
  %v86 = vunpack.c.l.bf16 %v22
  %v87 = vunpack.c.l.bf16 %v23
  %v88 = vunpack.c.l.bf16 %v24
  %v89 = vunpack.c.l.bf16 %v25
  %v90 = vunpack.c.l.bf16 %v26
  %v91 = vunpack.c.l.bf16 %v27
  %v92 = vunpack.c.l.bf16 %v28
  %v93 = vunpack.c.l.bf16 %v29
  %v94 = vunpack.c.l.bf16 %v30
  %v95 = vunpack.c.l.bf16 %v31
  %v96 = vunpack.c.l.bf16 %v32
  %v97 = vunpack.c.l.bf16 %v33
  %v98 = vunpack.c.l.bf16 %v34
  %v99 = vunpack.c.l.bf16 %v35
  %v100 = vunpack.c.l.bf16 %v36
  %v101 = vunpack.c.l.bf16 %v37
  %v102 = vunpack.c.l.bf16 %v38
  %v103 = vunpack.c.l.bf16 %v39
  %v104 = vunpack.c.l.bf16 %v40
  %v105 = vunpack.c.l.bf16 %v41
  %v106 = vunpack.c.l.bf16 %v42
  %v107 = vunpack.c.l.bf16 %v43
  %v108 = vunpack.c.l.bf16 %v44
  %v109 = vunpack.c.l.bf16 %v45
  %v110 = vunpack.c.l.bf16 %v46
  %v111 = vunpack.c.l.bf16 %v47
  %v112 = vunpack.c.l.bf16 %v48
  %v113 = vunpack.c.l.bf16 %v49
  %v114 = vunpack.c.l.bf16 %v50
  %v115 = vunpack.c.l.bf16 %v51
  %v116 = vunpack.c.l.bf16 %v52
  %v117 = vunpack.c.l.bf16 %v53
  %v118 = vunpack.c.l.bf16 %v54
  %v119 = vunpack.c.l.bf16 %v55
  %v120 = vunpack.c.l.bf16 %v56
  %v121 = vunpack.c.l.bf16 %v57
  %v122 = vunpack.c.l.bf16 %v58
  %v123 = vunpack.c.l.bf16 %v59
  %v124 = vunpack.c.l.bf16 %v60
  %v125 = vunpack.c.l.bf16 %v61
  %v126 = vunpack.c.l.bf16 %v62
  %v127 = vunpack.c.l.bf16 %v63
  %v128 = vunpack.c.l.bf16 %v64
  %v129 = vunpack.c.l.bf16 %v65
  %v130 = vunpack.c.l.bf16 %v66
  %v131 = vunpack.c.l.bf16 %v67
  %v132 = vunpack.c.l.bf16 %v68
  %v133 = vunpack.c.l.bf16 %v69
  %v134 = vunpack.c.l.bf16 %v70
  %v135 = vunpack.c.l.bf16 %v71
  %v136 = vunpack.c.l.bf16 %v72
  %v137 = vunpack.c.l.bf16 %v73
  %v138 = vunpack.c.l.bf16 %v74
  %v139 = vunpack.c.l.bf16 %v75
  %v140 = vunpack.c.l.bf16 %v76
  %v141 = vunpack.c.l.bf16 %v77
  %v142 = vunpack.c.l.bf16 %v78
  %v143 = vunpack.c.l.bf16 %v79
  %v144 = vunpack.c.l.bf16 %v80
  %v145 = vunpack.c.l.bf16 %v81
  %v146 = vunpack.c.l.bf16 %v82
  %v147 = vunpack.c.l.bf16 %v83
  %v148 = vunpack.c.l.bf16 %v84
  %v149 = vld [vmem:[%s1] sm:$0x1]
  %v151 = vperm.slane %v149, 0
  %v153 = vmul.f32 %v85, %v151
  %v154 = vmul.f32 %v86, %v151
  %v155 = vmul.f32 %v87, %v151
  %v156 = vmul.f32 %v88, %v151
  %v157 = vmul.f32 %v89, %v151
  %v158 = vmul.f32 %v90, %v151
  %v159 = vmul.f32 %v91, %v151
  %v160 = vmul.f32 %v92, %v151
  %v161 = vmul.f32 %v93, %v151
  %v162 = vmul.f32 %v94, %v151
  %v163 = vmul.f32 %v95, %v151
  %v164 = vmul.f32 %v96, %v151
  %v165 = vmul.f32 %v97, %v151
  %v166 = vmul.f32 %v98, %v151
  %v167 = vmul.f32 %v99, %v151
  %v168 = vmul.f32 %v100, %v151
  %v169 = vmul.f32 %v101, %v151
  %v170 = vmul.f32 %v102, %v151
  %v171 = vmul.f32 %v103, %v151
  %v172 = vmul.f32 %v104, %v151
  %v173 = vmul.f32 %v105, %v151
  %v174 = vmul.f32 %v106, %v151
  %v175 = vmul.f32 %v107, %v151
  %v176 = vmul.f32 %v108, %v151
  %v177 = vmul.f32 %v109, %v151
  %v178 = vmul.f32 %v110, %v151
  %v179 = vmul.f32 %v111, %v151
  %v180 = vmul.f32 %v112, %v151
  %v181 = vmul.f32 %v113, %v151
  %v182 = vmul.f32 %v114, %v151
  %v183 = vmul.f32 %v115, %v151
  %v184 = vmul.f32 %v116, %v151
  %v185 = vmul.f32 %v117, %v151
  %v186 = vmul.f32 %v118, %v151
  %v187 = vmul.f32 %v119, %v151
  %v188 = vmul.f32 %v120, %v151
  %v189 = vmul.f32 %v121, %v151
  %v190 = vmul.f32 %v122, %v151
  %v191 = vmul.f32 %v123, %v151
  %v192 = vmul.f32 %v124, %v151
  %v193 = vmul.f32 %v125, %v151
  %v194 = vmul.f32 %v126, %v151
  %v195 = vmul.f32 %v127, %v151
  %v196 = vmul.f32 %v128, %v151
  %v197 = vmul.f32 %v129, %v151
  %v198 = vmul.f32 %v130, %v151
  %v199 = vmul.f32 %v131, %v151
  %v200 = vmul.f32 %v132, %v151
  %v201 = vmul.f32 %v133, %v151
  %v202 = vmul.f32 %v134, %v151
  %v203 = vmul.f32 %v135, %v151
  %v204 = vmul.f32 %v136, %v151
  %v205 = vmul.f32 %v137, %v151
  %v206 = vmul.f32 %v138, %v151
  %v207 = vmul.f32 %v139, %v151
  %v208 = vmul.f32 %v140, %v151
  %v209 = vmul.f32 %v141, %v151
  %v210 = vmul.f32 %v142, %v151
  %v211 = vmul.f32 %v143, %v151
  %v212 = vmul.f32 %v144, %v151
  %v213 = vmul.f32 %v145, %v151
  %v214 = vmul.f32 %v146, %v151
  %v215 = vmul.f32 %v147, %v151
  %v216 = vmul.f32 %v148, %v151
  %v217 = vld [vmem:[%s2] sm:$0x1]
  %v219 = vperm.slane %v217, 0
  %v221 = vadd.f32 %v153, %v219
  %v222 = vadd.f32 %v154, %v219
  %v223 = vadd.f32 %v155, %v219
  %v224 = vadd.f32 %v156, %v219
  %v225 = vadd.f32 %v157, %v219
  %v226 = vadd.f32 %v158, %v219
  %v227 = vadd.f32 %v159, %v219
  %v228 = vadd.f32 %v160, %v219
  %v229 = vadd.f32 %v161, %v219
  %v230 = vadd.f32 %v162, %v219
  %v231 = vadd.f32 %v163, %v219
  %v232 = vadd.f32 %v164, %v219
  %v233 = vadd.f32 %v165, %v219
  %v234 = vadd.f32 %v166, %v219
  %v235 = vadd.f32 %v167, %v219
  %v236 = vadd.f32 %v168, %v219
  %v237 = vadd.f32 %v169, %v219
  %v238 = vadd.f32 %v170, %v219
  %v239 = vadd.f32 %v171, %v219
  %v240 = vadd.f32 %v172, %v219
  %v241 = vadd.f32 %v173, %v219
  %v242 = vadd.f32 %v174, %v219
  %v243 = vadd.f32 %v175, %v219
  %v244 = vadd.f32 %v176, %v219
  %v245 = vadd.f32 %v177, %v219
  %v246 = vadd.f32 %v178, %v219
  %v247 = vadd.f32 %v179, %v219
  %v248 = vadd.f32 %v180, %v219
  %v249 = vadd.f32 %v181, %v219
  %v250 = vadd.f32 %v182, %v219
  %v251 = vadd.f32 %v183, %v219
  %v252 = vadd.f32 %v184, %v219
  %v253 = vadd.f32 %v185, %v219
  %v254 = vadd.f32 %v186, %v219
  %v255 = vadd.f32 %v187, %v219
  %v256 = vadd.f32 %v188, %v219
  %v257 = vadd.f32 %v189, %v219
  %v258 = vadd.f32 %v190, %v219
  %v259 = vadd.f32 %v191, %v219
  %v260 = vadd.f32 %v192, %v219
  %v261 = vadd.f32 %v193, %v219
  %v262 = vadd.f32 %v194, %v219
  %v263 = vadd.f32 %v195, %v219
  %v264 = vadd.f32 %v196, %v219
  %v265 = vadd.f32 %v197, %v219
  %v266 = vadd.f32 %v198, %v219
  %v267 = vadd.f32 %v199, %v219
  %v268 = vadd.f32 %v200, %v219
  %v269 = vadd.f32 %v201, %v219
  %v270 = vadd.f32 %v202, %v219
  %v271 = vadd.f32 %v203, %v219
  %v272 = vadd.f32 %v204, %v219
  %v273 = vadd.f32 %v205, %v219
  %v274 = vadd.f32 %v206, %v219
  %v275 = vadd.f32 %v207, %v219
  %v276 = vadd.f32 %v208, %v219
  %v277 = vadd.f32 %v209, %v219
  %v278 = vadd.f32 %v210, %v219
  %v279 = vadd.f32 %v211, %v219
  %v280 = vadd.f32 %v212, %v219
  %v281 = vadd.f32 %v213, %v219
  %v282 = vadd.f32 %v214, %v219
  %v283 = vadd.f32 %v215, %v219
  %v284 = vadd.f32 %v216, %v219
  %v285 = vmax.f32 %v221, 0.0
  %v286 = vmax.f32 %v222, 0.0
  %v287 = vmax.f32 %v223, 0.0
  %v288 = vmax.f32 %v224, 0.0
  %v289 = vmax.f32 %v225, 0.0
  %v290 = vmax.f32 %v226, 0.0
  %v291 = vmax.f32 %v227, 0.0
  %v292 = vmax.f32 %v228, 0.0
  %v293 = vmax.f32 %v229, 0.0
  %v294 = vmax.f32 %v230, 0.0
  %v295 = vmax.f32 %v231, 0.0
  %v296 = vmax.f32 %v232, 0.0
  %v297 = vmax.f32 %v233, 0.0
  %v298 = vmax.f32 %v234, 0.0
  %v299 = vmax.f32 %v235, 0.0
  %v300 = vmax.f32 %v236, 0.0
  %v301 = vmax.f32 %v237, 0.0
  %v302 = vmax.f32 %v238, 0.0
  %v303 = vmax.f32 %v239, 0.0
  %v304 = vmax.f32 %v240, 0.0
  %v305 = vmax.f32 %v241, 0.0
  %v306 = vmax.f32 %v242, 0.0
  %v307 = vmax.f32 %v243, 0.0
  %v308 = vmax.f32 %v244, 0.0
  %v309 = vmax.f32 %v245, 0.0
  %v310 = vmax.f32 %v246, 0.0
  %v311 = vmax.f32 %v247, 0.0
  %v312 = vmax.f32 %v248, 0.0
  %v313 = vmax.f32 %v249, 0.0
  %v314 = vmax.f32 %v250, 0.0
  %v315 = vmax.f32 %v251, 0.0
  %v316 = vmax.f32 %v252, 0.0
  %v317 = vmax.f32 %v253, 0.0
  %v318 = vmax.f32 %v254, 0.0
  %v319 = vmax.f32 %v255, 0.0
  %v320 = vmax.f32 %v256, 0.0
  %v321 = vmax.f32 %v257, 0.0
  %v322 = vmax.f32 %v258, 0.0
  %v323 = vmax.f32 %v259, 0.0
  %v324 = vmax.f32 %v260, 0.0
  %v325 = vmax.f32 %v261, 0.0
  %v326 = vmax.f32 %v262, 0.0
  %v327 = vmax.f32 %v263, 0.0
  %v328 = vmax.f32 %v264, 0.0
  %v329 = vmax.f32 %v265, 0.0
  %v330 = vmax.f32 %v266, 0.0
  %v331 = vmax.f32 %v267, 0.0
  %v332 = vmax.f32 %v268, 0.0
  %v333 = vmax.f32 %v269, 0.0
  %v334 = vmax.f32 %v270, 0.0
  %v335 = vmax.f32 %v271, 0.0
  %v336 = vmax.f32 %v272, 0.0
  %v337 = vmax.f32 %v273, 0.0
  %v338 = vmax.f32 %v274, 0.0
  %v339 = vmax.f32 %v275, 0.0
  %v340 = vmax.f32 %v276, 0.0
  %v341 = vmax.f32 %v277, 0.0
  %v342 = vmax.f32 %v278, 0.0
  %v343 = vmax.f32 %v279, 0.0
  %v344 = vmax.f32 %v280, 0.0
  %v345 = vmax.f32 %v281, 0.0
  %v346 = vmax.f32 %v282, 0.0
  %v347 = vmax.f32 %v283, 0.0
  %v348 = vmax.f32 %v284, 0.0
  %s349 = smul.u32 0, 512
  %v350 = vlaneseq
  %v351 = vshrl.u32 %v350, 7
  %v352 = vadd.s32 %v351, 8
  %v353 = vadd.s32 %v351, 16
  %v354 = vadd.s32 %v351, 24
  %v355 = vadd.s32 %v351, 32
  %v356 = vadd.s32 %v351, 40
  %v357 = vadd.s32 %v351, 48
  %v358 = vadd.s32 %v351, 56
  %v359 = vadd.s32 %v351, 64
  %v360 = vadd.s32 %v351, 72
  %v361 = vadd.s32 %v351, 80
  %v362 = vadd.s32 %v351, 88
  %v363 = vadd.s32 %v351, 96
  %v364 = vadd.s32 %v351, 104
  %v365 = vadd.s32 %v351, 112
  %v366 = vadd.s32 %v351, 120
  %v367 = vadd.s32 %v351, 128
  %v368 = vadd.s32 %v351, 136
  %v369 = vadd.s32 %v351, 144
  %v370 = vadd.s32 %v351, 152
  %v371 = vadd.s32 %v351, 160
  %v372 = vadd.s32 %v351, 168
  %v373 = vadd.s32 %v351, 176
  %v374 = vadd.s32 %v351, 184
  %v375 = vadd.s32 %v351, 192
  %v376 = vadd.s32 %v351, 200
  %v377 = vadd.s32 %v351, 208
  %v378 = vadd.s32 %v351, 216
  %v379 = vadd.s32 %v351, 224
  %v380 = vadd.s32 %v351, 232
  %v381 = vadd.s32 %v351, 240
  %v382 = vadd.s32 %v351, 248
  %v383 = vadd.s32 %v351, 256
  %v384 = vadd.s32 %v351, 264
  %v385 = vadd.s32 %v351, 272
  %v386 = vadd.s32 %v351, 280
  %v387 = vadd.s32 %v351, 288
  %v388 = vadd.s32 %v351, 296
  %v389 = vadd.s32 %v351, 304
  %v390 = vadd.s32 %v351, 312
  %v391 = vadd.s32 %v351, 320
  %v392 = vadd.s32 %v351, 328
  %v393 = vadd.s32 %v351, 336
  %v394 = vadd.s32 %v351, 344
  %v395 = vadd.s32 %v351, 352
  %v396 = vadd.s32 %v351, 360
  %v397 = vadd.s32 %v351, 368
  %v398 = vadd.s32 %v351, 376
  %v399 = vadd.s32 %v351, 384
  %v400 = vadd.s32 %v351, 392
  %v401 = vadd.s32 %v351, 400
  %v402 = vadd.s32 %v351, 408
  %v403 = vadd.s32 %v351, 416
  %v404 = vadd.s32 %v351, 424
  %v405 = vadd.s32 %v351, 432
  %v406 = vadd.s32 %v351, 440
  %v407 = vadd.s32 %v351, 448
  %v408 = vadd.s32 %v351, 456
  %v409 = vadd.s32 %v351, 464
  %v410 = vadd.s32 %v351, 472
  %v411 = vadd.s32 %v351, 480
  %v412 = vadd.s32 %v351, 488
  %v413 = vadd.s32 %v351, 496
  %v414 = vadd.s32 %v351, 504
  %v415 = vstv %s349
  %v416 = vadd.s32 %v415, %v351
  %v417 = vadd.s32 %v415, %v352
  %v418 = vadd.s32 %v415, %v353
  %v419 = vadd.s32 %v415, %v354
  %v420 = vadd.s32 %v415, %v355
  %v421 = vadd.s32 %v415, %v356
  %v422 = vadd.s32 %v415, %v357
  %v423 = vadd.s32 %v415, %v358
  %v424 = vadd.s32 %v415, %v359
  %v425 = vadd.s32 %v415, %v360
  %v426 = vadd.s32 %v415, %v361
  %v427 = vadd.s32 %v415, %v362
  %v428 = vadd.s32 %v415, %v363
  %v429 = vadd.s32 %v415, %v364
  %v430 = vadd.s32 %v415, %v365
  %v431 = vadd.s32 %v415, %v366
  %v432 = vadd.s32 %v415, %v367
  %v433 = vadd.s32 %v415, %v368
  %v434 = vadd.s32 %v415, %v369
  %v435 = vadd.s32 %v415, %v370
  %v436 = vadd.s32 %v415, %v371
  %v437 = vadd.s32 %v415, %v372
  %v438 = vadd.s32 %v415, %v373
  %v439 = vadd.s32 %v415, %v374
  %v440 = vadd.s32 %v415, %v375
  %v441 = vadd.s32 %v415, %v376
  %v442 = vadd.s32 %v415, %v377
  %v443 = vadd.s32 %v415, %v378
  %v444 = vadd.s32 %v415, %v379
  %v445 = vadd.s32 %v415, %v380
  %v446 = vadd.s32 %v415, %v381
  %v447 = vadd.s32 %v415, %v382
  %v448 = vadd.s32 %v415, %v383
  %v449 = vadd.s32 %v415, %v384
  %v450 = vadd.s32 %v415, %v385
  %v451 = vadd.s32 %v415, %v386
  %v452 = vadd.s32 %v415, %v387
  %v453 = vadd.s32 %v415, %v388
  %v454 = vadd.s32 %v415, %v389
  %v455 = vadd.s32 %v415, %v390
  %v456 = vadd.s32 %v415, %v391
  %v457 = vadd.s32 %v415, %v392
  %v458 = vadd.s32 %v415, %v393
  %v459 = vadd.s32 %v415, %v394
  %v460 = vadd.s32 %v415, %v395
  %v461 = vadd.s32 %v415, %v396
  %v462 = vadd.s32 %v415, %v397
  %v463 = vadd.s32 %v415, %v398
  %v464 = vadd.s32 %v415, %v399
  %v465 = vadd.s32 %v415, %v400
  %v466 = vadd.s32 %v415, %v401
  %v467 = vadd.s32 %v415, %v402
  %v468 = vadd.s32 %v415, %v403
  %v469 = vadd.s32 %v415, %v404
  %v470 = vadd.s32 %v415, %v405
  %v471 = vadd.s32 %v415, %v406
  %v472 = vadd.s32 %v415, %v407
  %v473 = vadd.s32 %v415, %v408
  %v474 = vadd.s32 %v415, %v409
  %v475 = vadd.s32 %v415, %v410
  %v476 = vadd.s32 %v415, %v411
  %v477 = vadd.s32 %v415, %v412
  %v478 = vadd.s32 %v415, %v413
  %v479 = vadd.s32 %v415, %v414
  %vm480 = vcmp.lt.s32.totalorder %v416, 128
  %vm481 = vcmp.lt.s32.totalorder %v417, 128
  %vm482 = vcmp.lt.s32.totalorder %v418, 128
  %vm483 = vcmp.lt.s32.totalorder %v419, 128
  %vm484 = vcmp.lt.s32.totalorder %v420, 128
  %vm485 = vcmp.lt.s32.totalorder %v421, 128
  %vm486 = vcmp.lt.s32.totalorder %v422, 128
  %vm487 = vcmp.lt.s32.totalorder %v423, 128
  %vm488 = vcmp.lt.s32.totalorder %v424, 128
  %vm489 = vcmp.lt.s32.totalorder %v425, 128
  %vm490 = vcmp.lt.s32.totalorder %v426, 128
  %vm491 = vcmp.lt.s32.totalorder %v427, 128
  %vm492 = vcmp.lt.s32.totalorder %v428, 128
  %vm493 = vcmp.lt.s32.totalorder %v429, 128
  %vm494 = vcmp.lt.s32.totalorder %v430, 128
  %vm495 = vcmp.lt.s32.totalorder %v431, 128
  %vm496 = vcmp.lt.s32.totalorder %v432, 128
  %vm497 = vcmp.lt.s32.totalorder %v433, 128
  %vm498 = vcmp.lt.s32.totalorder %v434, 128
  %vm499 = vcmp.lt.s32.totalorder %v435, 128
  %vm500 = vcmp.lt.s32.totalorder %v436, 128
  %vm501 = vcmp.lt.s32.totalorder %v437, 128
  %vm502 = vcmp.lt.s32.totalorder %v438, 128
  %vm503 = vcmp.lt.s32.totalorder %v439, 128
  %vm504 = vcmp.lt.s32.totalorder %v440, 128
  %vm505 = vcmp.lt.s32.totalorder %v441, 128
  %vm506 = vcmp.lt.s32.totalorder %v442, 128
  %vm507 = vcmp.lt.s32.totalorder %v443, 128
  %vm508 = vcmp.lt.s32.totalorder %v444, 128
  %vm509 = vcmp.lt.s32.totalorder %v445, 128
  %vm510 = vcmp.lt.s32.totalorder %v446, 128
  %vm511 = vcmp.lt.s32.totalorder %v447, 128
  %vm512 = vcmp.lt.s32.totalorder %v448, 128
  %vm513 = vcmp.lt.s32.totalorder %v449, 128
  %vm514 = vcmp.lt.s32.totalorder %v450, 128
  %vm515 = vcmp.lt.s32.totalorder %v451, 128
  %vm516 = vcmp.lt.s32.totalorder %v452, 128
  %vm517 = vcmp.lt.s32.totalorder %v453, 128
  %vm518 = vcmp.lt.s32.totalorder %v454, 128
  %vm519 = vcmp.lt.s32.totalorder %v455, 128
  %vm520 = vcmp.lt.s32.totalorder %v456, 128
  %vm521 = vcmp.lt.s32.totalorder %v457, 128
  %vm522 = vcmp.lt.s32.totalorder %v458, 128
  %vm523 = vcmp.lt.s32.totalorder %v459, 128
  %vm524 = vcmp.lt.s32.totalorder %v460, 128
  %vm525 = vcmp.lt.s32.totalorder %v461, 128
  %vm526 = vcmp.lt.s32.totalorder %v462, 128
  %vm527 = vcmp.lt.s32.totalorder %v463, 128
  %vm528 = vcmp.lt.s32.totalorder %v464, 128
  %vm529 = vcmp.lt.s32.totalorder %v465, 128
  %vm530 = vcmp.lt.s32.totalorder %v466, 128
  %vm531 = vcmp.lt.s32.totalorder %v467, 128
  %vm532 = vcmp.lt.s32.totalorder %v468, 128
  %vm533 = vcmp.lt.s32.totalorder %v469, 128
  %vm534 = vcmp.lt.s32.totalorder %v470, 128
  %vm535 = vcmp.lt.s32.totalorder %v471, 128
  %vm536 = vcmp.lt.s32.totalorder %v472, 128
  %vm537 = vcmp.lt.s32.totalorder %v473, 128
  %vm538 = vcmp.lt.s32.totalorder %v474, 128
  %vm539 = vcmp.lt.s32.totalorder %v475, 128
  %vm540 = vcmp.lt.s32.totalorder %v476, 128
  %vm541 = vcmp.lt.s32.totalorder %v477, 128
  %vm542 = vcmp.lt.s32.totalorder %v478, 128
  %vm543 = vcmp.lt.s32.totalorder %v479, 128
  %v544 = vsel %vm480, %v285, 0.0
  %v545 = vsel %vm481, %v286, 0.0
  %v546 = vsel %vm482, %v287, 0.0
  %v547 = vsel %vm483, %v288, 0.0
  %v548 = vsel %vm484, %v289, 0.0
  %v549 = vsel %vm485, %v290, 0.0
  %v550 = vsel %vm486, %v291, 0.0
  %v551 = vsel %vm487, %v292, 0.0
  %v552 = vsel %vm488, %v293, 0.0
  %v553 = vsel %vm489, %v294, 0.0
  %v554 = vsel %vm490, %v295, 0.0
  %v555 = vsel %vm491, %v296, 0.0
  %v556 = vsel %vm492, %v297, 0.0
  %v557 = vsel %vm493, %v298, 0.0
  %v558 = vsel %vm494, %v299, 0.0
  %v559 = vsel %vm495, %v300, 0.0
  %v560 = vsel %vm496, %v301, 0.0
  %v561 = vsel %vm497, %v302, 0.0
  %v562 = vsel %vm498, %v303, 0.0
  %v563 = vsel %vm499, %v304, 0.0
  %v564 = vsel %vm500, %v305, 0.0
  %v565 = vsel %vm501, %v306, 0.0
  %v566 = vsel %vm502, %v307, 0.0
  %v567 = vsel %vm503, %v308, 0.0
  %v568 = vsel %vm504, %v309, 0.0
  %v569 = vsel %vm505, %v310, 0.0
  %v570 = vsel %vm506, %v311, 0.0
  %v571 = vsel %vm507, %v312, 0.0
  %v572 = vsel %vm508, %v313, 0.0
  %v573 = vsel %vm509, %v314, 0.0
  %v574 = vsel %vm510, %v315, 0.0
  %v575 = vsel %vm511, %v316, 0.0
  %v576 = vsel %vm512, %v317, 0.0
  %v577 = vsel %vm513, %v318, 0.0
  %v578 = vsel %vm514, %v319, 0.0
  %v579 = vsel %vm515, %v320, 0.0
  %v580 = vsel %vm516, %v321, 0.0
  %v581 = vsel %vm517, %v322, 0.0
  %v582 = vsel %vm518, %v323, 0.0
  %v583 = vsel %vm519, %v324, 0.0
  %v584 = vsel %vm520, %v325, 0.0
  %v585 = vsel %vm521, %v326, 0.0
  %v586 = vsel %vm522, %v327, 0.0
  %v587 = vsel %vm523, %v328, 0.0
  %v588 = vsel %vm524, %v329, 0.0
  %v589 = vsel %vm525, %v330, 0.0
  %v590 = vsel %vm526, %v331, 0.0
  %v591 = vsel %vm527, %v332, 0.0
  %v592 = vsel %vm528, %v333, 0.0
  %v593 = vsel %vm529, %v334, 0.0
  %v594 = vsel %vm530, %v335, 0.0
  %v595 = vsel %vm531, %v336, 0.0
  %v596 = vsel %vm532, %v337, 0.0
  %v597 = vsel %vm533, %v338, 0.0
  %v598 = vsel %vm534, %v339, 0.0
  %v599 = vsel %vm535, %v340, 0.0
  %v600 = vsel %vm536, %v341, 0.0
  %v601 = vsel %vm537, %v342, 0.0
  %v602 = vsel %vm538, %v343, 0.0
  %v603 = vsel %vm539, %v344, 0.0
  %v604 = vsel %vm540, %v345, 0.0
  %v605 = vsel %vm541, %v346, 0.0
  %v606 = vsel %vm542, %v347, 0.0
  %v607 = vsel %vm543, %v348, 0.0
  %v608 = vpack.c.bf16 %v545, %v544
  %v609 = vpack.c.bf16 %v547, %v546
  %v610 = vpack.c.bf16 %v549, %v548
  %v611 = vpack.c.bf16 %v551, %v550
  %v612 = vpack.c.bf16 %v553, %v552
  %v613 = vpack.c.bf16 %v555, %v554
  %v614 = vpack.c.bf16 %v557, %v556
  %v615 = vpack.c.bf16 %v559, %v558
  %v616 = vpack.c.bf16 %v561, %v560
  %v617 = vpack.c.bf16 %v563, %v562
  %v618 = vpack.c.bf16 %v565, %v564
  %v619 = vpack.c.bf16 %v567, %v566
  %v620 = vpack.c.bf16 %v569, %v568
  %v621 = vpack.c.bf16 %v571, %v570
  %v622 = vpack.c.bf16 %v573, %v572
  %v623 = vpack.c.bf16 %v575, %v574
  %v624 = vpack.c.bf16 %v577, %v576
  %v625 = vpack.c.bf16 %v579, %v578
  %v626 = vpack.c.bf16 %v581, %v580
  %v627 = vpack.c.bf16 %v583, %v582
  %v628 = vpack.c.bf16 %v585, %v584
  %v629 = vpack.c.bf16 %v587, %v586
  %v630 = vpack.c.bf16 %v589, %v588
  %v631 = vpack.c.bf16 %v591, %v590
  %v632 = vpack.c.bf16 %v593, %v592
  %v633 = vpack.c.bf16 %v595, %v594
  %v634 = vpack.c.bf16 %v597, %v596
  %v635 = vpack.c.bf16 %v599, %v598
  %v636 = vpack.c.bf16 %v601, %v600
  %v637 = vpack.c.bf16 %v603, %v602
  %v638 = vpack.c.bf16 %v605, %v604
  %v639 = vpack.c.bf16 %v607, %v606
  %v640 = vld [vmem:[%s3] sm:$0xf]
  %v641 = vld [vmem:[%s3 + $0x4] sm:$0xf]
  %v642 = vld [vmem:[%s3 + $0x8] sm:$0xf]
  %v643 = vld [vmem:[%s3 + $0xc] sm:$0xf]
  %v648 = vunpack.c.l.b16 %v640
  %v649 = vunpack.c.l.b16 %v641
  %v650 = vunpack.c.l.b16 %v642
  %v651 = vunpack.c.l.b16 %v643
  %v652 = vpack.c.b16 %v649, %v648
  %v653 = vpack.c.b16 %v651, %v650
  %vm656 = vcmask 261120
  %v658 = vsel %vm656, %v608, 0
  %v661 = vsel %vm656, %v609, 0
  %v664 = vsel %vm656, %v610, 0
  %v667 = vsel %vm656, %v611, 0
  %v670 = vsel %vm656, %v612, 0
  %v673 = vsel %vm656, %v613, 0
  %v676 = vsel %vm656, %v614, 0
  %v679 = vsel %vm656, %v615, 0
  %v682 = vsel %vm656, %v616, 0
  %v685 = vsel %vm656, %v617, 0
  %v688 = vsel %vm656, %v618, 0
  %v691 = vsel %vm656, %v619, 0
  %v694 = vsel %vm656, %v620, 0
  %v697 = vsel %vm656, %v621, 0
  %v700 = vsel %vm656, %v622, 0
  %v703 = vsel %vm656, %v623, 0
  %v706 = vsel %vm656, %v624, 0
  %v709 = vsel %vm656, %v625, 0
  %v712 = vsel %vm656, %v626, 0
  %v715 = vsel %vm656, %v627, 0
  %v718 = vsel %vm656, %v628, 0
  %v721 = vsel %vm656, %v629, 0
  %v724 = vsel %vm656, %v630, 0
  %v727 = vsel %vm656, %v631, 0
  %v730 = vsel %vm656, %v632, 0
  %v733 = vsel %vm656, %v633, 0
  %v736 = vsel %vm656, %v634, 0
  %v739 = vsel %vm656, %v635, 0
  %v742 = vsel %vm656, %v636, 0
  %v745 = vsel %vm656, %v637, 0
  %v748 = vsel %vm656, %v638, 0
  %v751 = vsel %vm656, %v639, 0
  %753 = vmatpush.bf16.msra.mxu0 0
  %754 = vmatpush.bf16.msra.mxu0 0
  %755 = vmatpush.bf16.msra.mxu0 0
  %756 = vmatpush.bf16.msra.mxu0 0
  %757 = vmatpush.bf16.msra.mxu0 0
  %758 = vmatpush.bf16.msra.mxu0 0
  %759 = vmatpush.bf16.msra.mxu0 %v653
  %760 = vmatpush.bf16.msra.mxu0 %v652
  %761 = vmatmul.bf16.gmra.mxu0 %v658
  %v762 = vpop.f32.mrf.mxu0
  %v763 = vadd.f32 0.0, %v762
  %v764 = vpop.f32.mrf.mxu0
  %v765 = vadd.f32 0.0, %v764
  %766 = vmatmul.bf16.gmra.mxu0 %v661
  %v767 = vpop.f32.mrf.mxu0
  %v768 = vadd.f32 0.0, %v767
  %v769 = vpop.f32.mrf.mxu0
  %v770 = vadd.f32 0.0, %v769
  %771 = vmatmul.bf16.gmra.mxu0 %v664
  %v772 = vpop.f32.mrf.mxu0
  %v773 = vadd.f32 0.0, %v772
  %v774 = vpop.f32.mrf.mxu0
  %v775 = vadd.f32 0.0, %v774
  %776 = vmatmul.bf16.gmra.mxu0 %v667
  %v777 = vpop.f32.mrf.mxu0
  %v778 = vadd.f32 0.0, %v777
  %v779 = vpop.f32.mrf.mxu0
  %v780 = vadd.f32 0.0, %v779
  %781 = vmatmul.bf16.gmra.mxu0 %v670
  %v782 = vpop.f32.mrf.mxu0
  %v783 = vadd.f32 0.0, %v782
  %v784 = vpop.f32.mrf.mxu0
  %v785 = vadd.f32 0.0, %v784
  %786 = vmatmul.bf16.gmra.mxu0 %v673
  %v787 = vpop.f32.mrf.mxu0
  %v788 = vadd.f32 0.0, %v787
  %v789 = vpop.f32.mrf.mxu0
  %v790 = vadd.f32 0.0, %v789
  %791 = vmatmul.bf16.gmra.mxu0 %v676
  %v792 = vpop.f32.mrf.mxu0
  %v793 = vadd.f32 0.0, %v792
  %v794 = vpop.f32.mrf.mxu0
  %v795 = vadd.f32 0.0, %v794
  %796 = vmatmul.bf16.gmra.mxu0 %v679
  %v797 = vpop.f32.mrf.mxu0
  %v798 = vadd.f32 0.0, %v797
  %v799 = vpop.f32.mrf.mxu0
  %v800 = vadd.f32 0.0, %v799
  %801 = vmatmul.bf16.gmra.mxu0 %v682
  %v802 = vpop.f32.mrf.mxu0
  %v803 = vadd.f32 0.0, %v802
  %v804 = vpop.f32.mrf.mxu0
  %v805 = vadd.f32 0.0, %v804
  %806 = vmatmul.bf16.gmra.mxu0 %v685
  %v807 = vpop.f32.mrf.mxu0
  %v808 = vadd.f32 0.0, %v807
  %v809 = vpop.f32.mrf.mxu0
  %v810 = vadd.f32 0.0, %v809
  %811 = vmatmul.bf16.gmra.mxu0 %v688
  %v812 = vpop.f32.mrf.mxu0
  %v813 = vadd.f32 0.0, %v812
  %v814 = vpop.f32.mrf.mxu0
  %v815 = vadd.f32 0.0, %v814
  %816 = vmatmul.bf16.gmra.mxu0 %v691
  %v817 = vpop.f32.mrf.mxu0
  %v818 = vadd.f32 0.0, %v817
  %v819 = vpop.f32.mrf.mxu0
  %v820 = vadd.f32 0.0, %v819
  %821 = vmatmul.bf16.gmra.mxu0 %v694
  %v822 = vpop.f32.mrf.mxu0
  %v823 = vadd.f32 0.0, %v822
  %v824 = vpop.f32.mrf.mxu0
  %v825 = vadd.f32 0.0, %v824
  %826 = vmatmul.bf16.gmra.mxu0 %v697
  %v827 = vpop.f32.mrf.mxu0
  %v828 = vadd.f32 0.0, %v827
  %v829 = vpop.f32.mrf.mxu0
  %v830 = vadd.f32 0.0, %v829
  %831 = vmatmul.bf16.gmra.mxu0 %v700
  %v832 = vpop.f32.mrf.mxu0
  %v833 = vadd.f32 0.0, %v832
  %v834 = vpop.f32.mrf.mxu0
  %v835 = vadd.f32 0.0, %v834
  %836 = vmatmul.bf16.gmra.mxu0 %v703
  %v837 = vpop.f32.mrf.mxu0
  %v838 = vadd.f32 0.0, %v837
  %v839 = vpop.f32.mrf.mxu0
  %v840 = vadd.f32 0.0, %v839
  %841 = vmatmul.bf16.gmra.mxu0 %v706
  %v842 = vpop.f32.mrf.mxu0
  %v843 = vadd.f32 0.0, %v842
  %v844 = vpop.f32.mrf.mxu0
  %v845 = vadd.f32 0.0, %v844
  %846 = vmatmul.bf16.gmra.mxu0 %v709
  %v847 = vpop.f32.mrf.mxu0
  %v848 = vadd.f32 0.0, %v847
  %v849 = vpop.f32.mrf.mxu0
  %v850 = vadd.f32 0.0, %v849
  %851 = vmatmul.bf16.gmra.mxu0 %v712
  %v852 = vpop.f32.mrf.mxu0
  %v853 = vadd.f32 0.0, %v852
  %v854 = vpop.f32.mrf.mxu0
  %v855 = vadd.f32 0.0, %v854
  %856 = vmatmul.bf16.gmra.mxu0 %v715
  %v857 = vpop.f32.mrf.mxu0
  %v858 = vadd.f32 0.0, %v857
  %v859 = vpop.f32.mrf.mxu0
  %v860 = vadd.f32 0.0, %v859
  %861 = vmatmul.bf16.gmra.mxu0 %v718
  %v862 = vpop.f32.mrf.mxu0
  %v863 = vadd.f32 0.0, %v862
  %v864 = vpop.f32.mrf.mxu0
  %v865 = vadd.f32 0.0, %v864
  %866 = vmatmul.bf16.gmra.mxu0 %v721
  %v867 = vpop.f32.mrf.mxu0
  %v868 = vadd.f32 0.0, %v867
  %v869 = vpop.f32.mrf.mxu0
  %v870 = vadd.f32 0.0, %v869
  %871 = vmatmul.bf16.gmra.mxu0 %v724
  %v872 = vpop.f32.mrf.mxu0
  %v873 = vadd.f32 0.0, %v872
  %v874 = vpop.f32.mrf.mxu0
  %v875 = vadd.f32 0.0, %v874
  %876 = vmatmul.bf16.gmra.mxu0 %v727
  %v877 = vpop.f32.mrf.mxu0
  %v878 = vadd.f32 0.0, %v877
  %v879 = vpop.f32.mrf.mxu0
  %v880 = vadd.f32 0.0, %v879
  %881 = vmatmul.bf16.gmra.mxu0 %v730
  %v882 = vpop.f32.mrf.mxu0
  %v883 = vadd.f32 0.0, %v882
  %v884 = vpop.f32.mrf.mxu0
  %v885 = vadd.f32 0.0, %v884
  %886 = vmatmul.bf16.gmra.mxu0 %v733
  %v887 = vpop.f32.mrf.mxu0
  %v888 = vadd.f32 0.0, %v887
  %v889 = vpop.f32.mrf.mxu0
  %v890 = vadd.f32 0.0, %v889
  %891 = vmatmul.bf16.gmra.mxu0 %v736
  %v892 = vpop.f32.mrf.mxu0
  %v893 = vadd.f32 0.0, %v892
  %v894 = vpop.f32.mrf.mxu0
  %v895 = vadd.f32 0.0, %v894
  %896 = vmatmul.bf16.gmra.mxu0 %v739
  %v897 = vpop.f32.mrf.mxu0
  %v898 = vadd.f32 0.0, %v897
  %v899 = vpop.f32.mrf.mxu0
  %v900 = vadd.f32 0.0, %v899
  %901 = vmatmul.bf16.gmra.mxu0 %v742
  %v902 = vpop.f32.mrf.mxu0
  %v903 = vadd.f32 0.0, %v902
  %v904 = vpop.f32.mrf.mxu0
  %v905 = vadd.f32 0.0, %v904
  %906 = vmatmul.bf16.gmra.mxu0 %v745
  %v907 = vpop.f32.mrf.mxu0
  %v908 = vadd.f32 0.0, %v907
  %v909 = vpop.f32.mrf.mxu0
  %v910 = vadd.f32 0.0, %v909
  %911 = vmatmul.bf16.gmra.mxu0 %v748
  %v912 = vpop.f32.mrf.mxu0
  %v913 = vadd.f32 0.0, %v912
  %v914 = vpop.f32.mrf.mxu0
  %v915 = vadd.f32 0.0, %v914
  %916 = vmatmul.bf16.gmra.mxu0 %v751
  %v917 = vpop.f32.mrf.mxu0
  %v918 = vadd.f32 0.0, %v917
  %v919 = vpop.f32.mrf.mxu0
  %v920 = vadd.f32 0.0, %v919
  %921 = vdwg.mxu0
  %v922 = vpack.c.bf16 %v763, %v763
  %v923 = vpack.c.bf16 %v765, %v765
  %v924 = vpack.c.bf16 %v768, %v768
  %v925 = vpack.c.bf16 %v770, %v770
  %v926 = vpack.c.bf16 %v773, %v773
  %v927 = vpack.c.bf16 %v775, %v775
  %v928 = vpack.c.bf16 %v778, %v778
  %v929 = vpack.c.bf16 %v780, %v780
  %v930 = vpack.c.bf16 %v783, %v783
  %v931 = vpack.c.bf16 %v785, %v785
  %v932 = vpack.c.bf16 %v788, %v788
  %v933 = vpack.c.bf16 %v790, %v790
  %v934 = vpack.c.bf16 %v793, %v793
  %v935 = vpack.c.bf16 %v795, %v795
  %v936 = vpack.c.bf16 %v798, %v798
  %v937 = vpack.c.bf16 %v800, %v800
  %v938 = vpack.c.bf16 %v803, %v803
  %v939 = vpack.c.bf16 %v805, %v805
  %v940 = vpack.c.bf16 %v808, %v808
  %v941 = vpack.c.bf16 %v810, %v810
  %v942 = vpack.c.bf16 %v813, %v813
  %v943 = vpack.c.bf16 %v815, %v815
  %v944 = vpack.c.bf16 %v818, %v818
  %v945 = vpack.c.bf16 %v820, %v820
  %v946 = vpack.c.bf16 %v823, %v823
  %v947 = vpack.c.bf16 %v825, %v825
  %v948 = vpack.c.bf16 %v828, %v828
  %v949 = vpack.c.bf16 %v830, %v830
  %v950 = vpack.c.bf16 %v833, %v833
  %v951 = vpack.c.bf16 %v835, %v835
  %v952 = vpack.c.bf16 %v838, %v838
  %v953 = vpack.c.bf16 %v840, %v840
  %v954 = vpack.c.bf16 %v843, %v843
  %v955 = vpack.c.bf16 %v845, %v845
  %v956 = vpack.c.bf16 %v848, %v848
  %v957 = vpack.c.bf16 %v850, %v850
  %v958 = vpack.c.bf16 %v853, %v853
  %v959 = vpack.c.bf16 %v855, %v855
  %v960 = vpack.c.bf16 %v858, %v858
  %v961 = vpack.c.bf16 %v860, %v860
  %v962 = vpack.c.bf16 %v863, %v863
  %v963 = vpack.c.bf16 %v865, %v865
  %v964 = vpack.c.bf16 %v868, %v868
  %v965 = vpack.c.bf16 %v870, %v870
  %v966 = vpack.c.bf16 %v873, %v873
  %v967 = vpack.c.bf16 %v875, %v875
  %v968 = vpack.c.bf16 %v878, %v878
  %v969 = vpack.c.bf16 %v880, %v880
  %v970 = vpack.c.bf16 %v883, %v883
  %v971 = vpack.c.bf16 %v885, %v885
  %v972 = vpack.c.bf16 %v888, %v888
  %v973 = vpack.c.bf16 %v890, %v890
  %v974 = vpack.c.bf16 %v893, %v893
  %v975 = vpack.c.bf16 %v895, %v895
  %v976 = vpack.c.bf16 %v898, %v898
  %v977 = vpack.c.bf16 %v900, %v900
  %v978 = vpack.c.bf16 %v903, %v903
  %v979 = vpack.c.bf16 %v905, %v905
  %v980 = vpack.c.bf16 %v908, %v908
  %v981 = vpack.c.bf16 %v910, %v910
  %v982 = vpack.c.bf16 %v913, %v913
  %v983 = vpack.c.bf16 %v915, %v915
  %v984 = vpack.c.bf16 %v918, %v918
  %v985 = vpack.c.bf16 %v920, %v920
  %vm986 = vcmask 125952
  %987 = vst.msk [vmem:[%s4] sm:$0xf] %vm986, %v922
  %988 = vst.msk [vmem:[%s4 + $0x4] sm:$0xf] %vm986, %v923
  %989 = vst.msk [vmem:[%s4 + $0x8] sm:$0xf] %vm986, %v924
  %990 = vst.msk [vmem:[%s4 + $0xc] sm:$0xf] %vm986, %v925
  %991 = vst.msk [vmem:[%s4 + $0x10] sm:$0xf] %vm986, %v926
  %992 = vst.msk [vmem:[%s4 + $0x14] sm:$0xf] %vm986, %v927
  %993 = vst.msk [vmem:[%s4 + $0x18] sm:$0xf] %vm986, %v928
  %994 = vst.msk [vmem:[%s4 + $0x1c] sm:$0xf] %vm986, %v929
  %995 = vst.msk [vmem:[%s4 + $0x20] sm:$0xf] %vm986, %v930
  %996 = vst.msk [vmem:[%s4 + $0x24] sm:$0xf] %vm986, %v931
  %997 = vst.msk [vmem:[%s4 + $0x28] sm:$0xf] %vm986, %v932
  %998 = vst.msk [vmem:[%s4 + $0x2c] sm:$0xf] %vm986, %v933
  %999 = vst.msk [vmem:[%s4 + $0x30] sm:$0xf] %vm986, %v934
  %1000 = vst.msk [vmem:[%s4 + $0x34] sm:$0xf] %vm986, %v935
  %1001 = vst.msk [vmem:[%s4 + $0x38] sm:$0xf] %vm986, %v936
  %1002 = vst.msk [vmem:[%s4 + $0x3c] sm:$0xf] %vm986, %v937
  %1003 = vst.msk [vmem:[%s4 + $0x40] sm:$0xf] %vm986, %v938
  %1004 = vst.msk [vmem:[%s4 + $0x44] sm:$0xf] %vm986, %v939
  %1005 = vst.msk [vmem:[%s4 + $0x48] sm:$0xf] %vm986, %v940
  %1006 = vst.msk [vmem:[%s4 + $0x4c] sm:$0xf] %vm986, %v941
  %1007 = vst.msk [vmem:[%s4 + $0x50] sm:$0xf] %vm986, %v942
  %1008 = vst.msk [vmem:[%s4 + $0x54] sm:$0xf] %vm986, %v943
  %1009 = vst.msk [vmem:[%s4 + $0x58] sm:$0xf] %vm986, %v944
  %1010 = vst.msk [vmem:[%s4 + $0x5c] sm:$0xf] %vm986, %v945
  %1011 = vst.msk [vmem:[%s4 + $0x60] sm:$0xf] %vm986, %v946
  %1012 = vst.msk [vmem:[%s4 + $0x64] sm:$0xf] %vm986, %v947
  %1013 = vst.msk [vmem:[%s4 + $0x68] sm:$0xf] %vm986, %v948
  %1014 = vst.msk [vmem:[%s4 + $0x6c] sm:$0xf] %vm986, %v949
  %1015 = vst.msk [vmem:[%s4 + $0x70] sm:$0xf] %vm986, %v950
  %1016 = vst.msk [vmem:[%s4 + $0x74] sm:$0xf] %vm986, %v951
  %1017 = vst.msk [vmem:[%s4 + $0x78] sm:$0xf] %vm986, %v952
  %1018 = vst.msk [vmem:[%s4 + $0x7c] sm:$0xf] %vm986, %v953
  %1019 = vst.msk [vmem:[%s4 + $0x80] sm:$0xf] %vm986, %v954
  %1020 = vst.msk [vmem:[%s4 + $0x84] sm:$0xf] %vm986, %v955
  %1021 = vst.msk [vmem:[%s4 + $0x88] sm:$0xf] %vm986, %v956
  %1022 = vst.msk [vmem:[%s4 + $0x8c] sm:$0xf] %vm986, %v957
  %1023 = vst.msk [vmem:[%s4 + $0x90] sm:$0xf] %vm986, %v958
  %1024 = vst.msk [vmem:[%s4 + $0x94] sm:$0xf] %vm986, %v959
  %1025 = vst.msk [vmem:[%s4 + $0x98] sm:$0xf] %vm986, %v960
  %1026 = vst.msk [vmem:[%s4 + $0x9c] sm:$0xf] %vm986, %v961
  %1027 = vst.msk [vmem:[%s4 + $0xa0] sm:$0xf] %vm986, %v962
  %1028 = vst.msk [vmem:[%s4 + $0xa4] sm:$0xf] %vm986, %v963
  %1029 = vst.msk [vmem:[%s4 + $0xa8] sm:$0xf] %vm986, %v964
  %1030 = vst.msk [vmem:[%s4 + $0xac] sm:$0xf] %vm986, %v965
  %1031 = vst.msk [vmem:[%s4 + $0xb0] sm:$0xf] %vm986, %v966
  %1032 = vst.msk [vmem:[%s4 + $0xb4] sm:$0xf] %vm986, %v967
  %1033 = vst.msk [vmem:[%s4 + $0xb8] sm:$0xf] %vm986, %v968
  %1034 = vst.msk [vmem:[%s4 + $0xbc] sm:$0xf] %vm986, %v969
  %1035 = vst.msk [vmem:[%s4 + $0xc0] sm:$0xf] %vm986, %v970
  %1036 = vst.msk [vmem:[%s4 + $0xc4] sm:$0xf] %vm986, %v971
  %1037 = vst.msk [vmem:[%s4 + $0xc8] sm:$0xf] %vm986, %v972
  %1038 = vst.msk [vmem:[%s4 + $0xcc] sm:$0xf] %vm986, %v973
  %1039 = vst.msk [vmem:[%s4 + $0xd0] sm:$0xf] %vm986, %v974
  %1040 = vst.msk [vmem:[%s4 + $0xd4] sm:$0xf] %vm986, %v975
  %1041 = vst.msk [vmem:[%s4 + $0xd8] sm:$0xf] %vm986, %v976
  %1042 = vst.msk [vmem:[%s4 + $0xdc] sm:$0xf] %vm986, %v977
  %1043 = vst.msk [vmem:[%s4 + $0xe0] sm:$0xf] %vm986, %v978
  %1044 = vst.msk [vmem:[%s4 + $0xe4] sm:$0xf] %vm986, %v979
  %1045 = vst.msk [vmem:[%s4 + $0xe8] sm:$0xf] %vm986, %v980
  %1046 = vst.msk [vmem:[%s4 + $0xec] sm:$0xf] %vm986, %v981
  %1047 = vst.msk [vmem:[%s4 + $0xf0] sm:$0xf] %vm986, %v982
  %1048 = vst.msk [vmem:[%s4 + $0xf4] sm:$0xf] %vm986, %v983
  %1049 = vst.msk [vmem:[%s4 + $0xf8] sm:$0xf] %vm986, %v984
  %1050 = vst.msk [vmem:[%s4 + $0xfc] sm:$0xf] %vm986, %v985
  %v1051 = vunpack.c.l.bf16 %v922
  %v1052 = vunpack.c.l.bf16 %v923
  %v1053 = vunpack.c.l.bf16 %v924
  %v1054 = vunpack.c.l.bf16 %v925
  %v1055 = vunpack.c.l.bf16 %v926
  %v1056 = vunpack.c.l.bf16 %v927
  %v1057 = vunpack.c.l.bf16 %v928
  %v1058 = vunpack.c.l.bf16 %v929
  %v1059 = vunpack.c.l.bf16 %v930
  %v1060 = vunpack.c.l.bf16 %v931
  %v1061 = vunpack.c.l.bf16 %v932
  %v1062 = vunpack.c.l.bf16 %v933
  %v1063 = vunpack.c.l.bf16 %v934
  %v1064 = vunpack.c.l.bf16 %v935
  %v1065 = vunpack.c.l.bf16 %v936
  %v1066 = vunpack.c.l.bf16 %v937
  %v1067 = vunpack.c.l.bf16 %v938
  %v1068 = vunpack.c.l.bf16 %v939
  %v1069 = vunpack.c.l.bf16 %v940
  %v1070 = vunpack.c.l.bf16 %v941
  %v1071 = vunpack.c.l.bf16 %v942
  %v1072 = vunpack.c.l.bf16 %v943
  %v1073 = vunpack.c.l.bf16 %v944
  %v1074 = vunpack.c.l.bf16 %v945
  %v1075 = vunpack.c.l.bf16 %v946
  %v1076 = vunpack.c.l.bf16 %v947
  %v1077 = vunpack.c.l.bf16 %v948
  %v1078 = vunpack.c.l.bf16 %v949
  %v1079 = vunpack.c.l.bf16 %v950
  %v1080 = vunpack.c.l.bf16 %v951
  %v1081 = vunpack.c.l.bf16 %v952
  %v1082 = vunpack.c.l.bf16 %v953
  %v1083 = vunpack.c.l.bf16 %v954
  %v1084 = vunpack.c.l.bf16 %v955
  %v1085 = vunpack.c.l.bf16 %v956
  %v1086 = vunpack.c.l.bf16 %v957
  %v1087 = vunpack.c.l.bf16 %v958
  %v1088 = vunpack.c.l.bf16 %v959
  %v1089 = vunpack.c.l.bf16 %v960
  %v1090 = vunpack.c.l.bf16 %v961
  %v1091 = vunpack.c.l.bf16 %v962
  %v1092 = vunpack.c.l.bf16 %v963
  %v1093 = vunpack.c.l.bf16 %v964
  %v1094 = vunpack.c.l.bf16 %v965
  %v1095 = vunpack.c.l.bf16 %v966
  %v1096 = vunpack.c.l.bf16 %v967
  %v1097 = vunpack.c.l.bf16 %v968
  %v1098 = vunpack.c.l.bf16 %v969
  %v1099 = vunpack.c.l.bf16 %v970
  %v1100 = vunpack.c.l.bf16 %v971
  %v1101 = vunpack.c.l.bf16 %v972
  %v1102 = vunpack.c.l.bf16 %v973
  %v1103 = vunpack.c.l.bf16 %v974
  %v1104 = vunpack.c.l.bf16 %v975
  %v1105 = vunpack.c.l.bf16 %v976
  %v1106 = vunpack.c.l.bf16 %v977
  %v1107 = vunpack.c.l.bf16 %v978
  %v1108 = vunpack.c.l.bf16 %v979
  %v1109 = vunpack.c.l.bf16 %v980
  %v1110 = vunpack.c.l.bf16 %v981
  %v1111 = vunpack.c.l.bf16 %v982
  %v1112 = vunpack.c.l.bf16 %v983
  %v1113 = vunpack.c.l.bf16 %v984
  %v1114 = vunpack.c.l.bf16 %v985
  %vm1115 = vcmask 130048
  %v1116 = vsel %vm1115, %v1051, 0.0
  %v1117 = vsel %vm1115, %v1052, 0.0
  %v1118 = vadd.f32 %v1116, %v1117
  %v1119 = vsel %vm1115, %v1053, 0.0
  %v1120 = vadd.f32 %v1118, %v1119
  %v1121 = vsel %vm1115, %v1054, 0.0
  %v1122 = vadd.f32 %v1120, %v1121
  %v1123 = vsel %vm1115, %v1055, 0.0
  %v1124 = vadd.f32 %v1122, %v1123
  %v1125 = vsel %vm1115, %v1056, 0.0
  %v1126 = vadd.f32 %v1124, %v1125
  %v1127 = vsel %vm1115, %v1057, 0.0
  %v1128 = vadd.f32 %v1126, %v1127
  %v1129 = vsel %vm1115, %v1058, 0.0
  %v1130 = vadd.f32 %v1128, %v1129
  %v1131 = vsel %vm1115, %v1059, 0.0
  %v1132 = vadd.f32 %v1130, %v1131
  %v1133 = vsel %vm1115, %v1060, 0.0
  %v1134 = vadd.f32 %v1132, %v1133
  %v1135 = vsel %vm1115, %v1061, 0.0
  %v1136 = vadd.f32 %v1134, %v1135
  %v1137 = vsel %vm1115, %v1062, 0.0
  %v1138 = vadd.f32 %v1136, %v1137
  %v1139 = vsel %vm1115, %v1063, 0.0
  %v1140 = vadd.f32 %v1138, %v1139
  %v1141 = vsel %vm1115, %v1064, 0.0
  %v1142 = vadd.f32 %v1140, %v1141
  %v1143 = vsel %vm1115, %v1065, 0.0
  %v1144 = vadd.f32 %v1142, %v1143
  %v1145 = vsel %vm1115, %v1066, 0.0
  %v1146 = vadd.f32 %v1144, %v1145
  %v1147 = vsel %vm1115, %v1067, 0.0
  %v1148 = vadd.f32 %v1146, %v1147
  %v1149 = vsel %vm1115, %v1068, 0.0
  %v1150 = vadd.f32 %v1148, %v1149
  %v1151 = vsel %vm1115, %v1069, 0.0
  %v1152 = vadd.f32 %v1150, %v1151
  %v1153 = vsel %vm1115, %v1070, 0.0
  %v1154 = vadd.f32 %v1152, %v1153
  %v1155 = vsel %vm1115, %v1071, 0.0
  %v1156 = vadd.f32 %v1154, %v1155
  %v1157 = vsel %vm1115, %v1072, 0.0
  %v1158 = vadd.f32 %v1156, %v1157
  %v1159 = vsel %vm1115, %v1073, 0.0
  %v1160 = vadd.f32 %v1158, %v1159
  %v1161 = vsel %vm1115, %v1074, 0.0
  %v1162 = vadd.f32 %v1160, %v1161
  %v1163 = vsel %vm1115, %v1075, 0.0
  %v1164 = vadd.f32 %v1162, %v1163
  %v1165 = vsel %vm1115, %v1076, 0.0
  %v1166 = vadd.f32 %v1164, %v1165
  %v1167 = vsel %vm1115, %v1077, 0.0
  %v1168 = vadd.f32 %v1166, %v1167
  %v1169 = vsel %vm1115, %v1078, 0.0
  %v1170 = vadd.f32 %v1168, %v1169
  %v1171 = vsel %vm1115, %v1079, 0.0
  %v1172 = vadd.f32 %v1170, %v1171
  %v1173 = vsel %vm1115, %v1080, 0.0
  %v1174 = vadd.f32 %v1172, %v1173
  %v1175 = vsel %vm1115, %v1081, 0.0
  %v1176 = vadd.f32 %v1174, %v1175
  %v1177 = vsel %vm1115, %v1082, 0.0
  %v1178 = vadd.f32 %v1176, %v1177
  %v1179 = vsel %vm1115, %v1083, 0.0
  %v1180 = vadd.f32 %v1178, %v1179
  %v1181 = vsel %vm1115, %v1084, 0.0
  %v1182 = vadd.f32 %v1180, %v1181
  %v1183 = vsel %vm1115, %v1085, 0.0
  %v1184 = vadd.f32 %v1182, %v1183
  %v1185 = vsel %vm1115, %v1086, 0.0
  %v1186 = vadd.f32 %v1184, %v1185
  %v1187 = vsel %vm1115, %v1087, 0.0
  %v1188 = vadd.f32 %v1186, %v1187
  %v1189 = vsel %vm1115, %v1088, 0.0
  %v1190 = vadd.f32 %v1188, %v1189
  %v1191 = vsel %vm1115, %v1089, 0.0
  %v1192 = vadd.f32 %v1190, %v1191
  %v1193 = vsel %vm1115, %v1090, 0.0
  %v1194 = vadd.f32 %v1192, %v1193
  %v1195 = vsel %vm1115, %v1091, 0.0
  %v1196 = vadd.f32 %v1194, %v1195
  %v1197 = vsel %vm1115, %v1092, 0.0
  %v1198 = vadd.f32 %v1196, %v1197
  %v1199 = vsel %vm1115, %v1093, 0.0
  %v1200 = vadd.f32 %v1198, %v1199
  %v1201 = vsel %vm1115, %v1094, 0.0
  %v1202 = vadd.f32 %v1200, %v1201
  %v1203 = vsel %vm1115, %v1095, 0.0
  %v1204 = vadd.f32 %v1202, %v1203
  %v1205 = vsel %vm1115, %v1096, 0.0
  %v1206 = vadd.f32 %v1204, %v1205
  %v1207 = vsel %vm1115, %v1097, 0.0
  %v1208 = vadd.f32 %v1206, %v1207
  %v1209 = vsel %vm1115, %v1098, 0.0
  %v1210 = vadd.f32 %v1208, %v1209
  %v1211 = vsel %vm1115, %v1099, 0.0
  %v1212 = vadd.f32 %v1210, %v1211
  %v1213 = vsel %vm1115, %v1100, 0.0
  %v1214 = vadd.f32 %v1212, %v1213
  %v1215 = vsel %vm1115, %v1101, 0.0
  %v1216 = vadd.f32 %v1214, %v1215
  %v1217 = vsel %vm1115, %v1102, 0.0
  %v1218 = vadd.f32 %v1216, %v1217
  %v1219 = vsel %vm1115, %v1103, 0.0
  %v1220 = vadd.f32 %v1218, %v1219
  %v1221 = vsel %vm1115, %v1104, 0.0
  %v1222 = vadd.f32 %v1220, %v1221
  %v1223 = vsel %vm1115, %v1105, 0.0
  %v1224 = vadd.f32 %v1222, %v1223
  %v1225 = vsel %vm1115, %v1106, 0.0
  %v1226 = vadd.f32 %v1224, %v1225
  %v1227 = vsel %vm1115, %v1107, 0.0
  %v1228 = vadd.f32 %v1226, %v1227
  %v1229 = vsel %vm1115, %v1108, 0.0
  %v1230 = vadd.f32 %v1228, %v1229
  %v1231 = vsel %vm1115, %v1109, 0.0
  %v1232 = vadd.f32 %v1230, %v1231
  %v1233 = vsel %vm1115, %v1110, 0.0
  %v1234 = vadd.f32 %v1232, %v1233
  %v1235 = vsel %vm1115, %v1111, 0.0
  %v1236 = vadd.f32 %v1234, %v1235
  %v1237 = vsel %vm1115, %v1112, 0.0
  %v1238 = vadd.f32 %v1236, %v1237
  %v1239 = vsel %vm1115, %v1113, 0.0
  %v1240 = vadd.f32 %v1238, %v1239
  %v1241 = vsel %vm1115, %v1114, 0.0
  %v1242 = vadd.f32 %v1240, %v1241
  %v1243 = vrot.slane %v1242, 4
  %v1244 = vadd.f32 %v1242, %v1243
  %v1245 = vrot.slane %v1244, 2
  %v1246 = vadd.f32 %v1244, %v1245
  %v1247 = vrot.slane %v1246, 1
  %v1248 = vadd.f32 %v1246, %v1247
  %vm1249 = vcmask 122880
  %1250 = vst.msk [vmem:[%s5] sm:$0x1] %vm1249, %v1248
  %v1251 = vmul.f32 %v1051, %v1051
  %v1252 = vmul.f32 %v1052, %v1052
  %v1253 = vmul.f32 %v1053, %v1053
  %v1254 = vmul.f32 %v1054, %v1054
  %v1255 = vmul.f32 %v1055, %v1055
  %v1256 = vmul.f32 %v1056, %v1056
  %v1257 = vmul.f32 %v1057, %v1057
  %v1258 = vmul.f32 %v1058, %v1058
  %v1259 = vmul.f32 %v1059, %v1059
  %v1260 = vmul.f32 %v1060, %v1060
  %v1261 = vmul.f32 %v1061, %v1061
  %v1262 = vmul.f32 %v1062, %v1062
  %v1263 = vmul.f32 %v1063, %v1063
  %v1264 = vmul.f32 %v1064, %v1064
  %v1265 = vmul.f32 %v1065, %v1065
  %v1266 = vmul.f32 %v1066, %v1066
  %v1267 = vmul.f32 %v1067, %v1067
  %v1268 = vmul.f32 %v1068, %v1068
  %v1269 = vmul.f32 %v1069, %v1069
  %v1270 = vmul.f32 %v1070, %v1070
  %v1271 = vmul.f32 %v1071, %v1071
  %v1272 = vmul.f32 %v1072, %v1072
  %v1273 = vmul.f32 %v1073, %v1073
  %v1274 = vmul.f32 %v1074, %v1074
  %v1275 = vmul.f32 %v1075, %v1075
  %v1276 = vmul.f32 %v1076, %v1076
  %v1277 = vmul.f32 %v1077, %v1077
  %v1278 = vmul.f32 %v1078, %v1078
  %v1279 = vmul.f32 %v1079, %v1079
  %v1280 = vmul.f32 %v1080, %v1080
  %v1281 = vmul.f32 %v1081, %v1081
  %v1282 = vmul.f32 %v1082, %v1082
  %v1283 = vmul.f32 %v1083, %v1083
  %v1284 = vmul.f32 %v1084, %v1084
  %v1285 = vmul.f32 %v1085, %v1085
  %v1286 = vmul.f32 %v1086, %v1086
  %v1287 = vmul.f32 %v1087, %v1087
  %v1288 = vmul.f32 %v1088, %v1088
  %v1289 = vmul.f32 %v1089, %v1089
  %v1290 = vmul.f32 %v1090, %v1090
  %v1291 = vmul.f32 %v1091, %v1091
  %v1292 = vmul.f32 %v1092, %v1092
  %v1293 = vmul.f32 %v1093, %v1093
  %v1294 = vmul.f32 %v1094, %v1094
  %v1295 = vmul.f32 %v1095, %v1095
  %v1296 = vmul.f32 %v1096, %v1096
  %v1297 = vmul.f32 %v1097, %v1097
  %v1298 = vmul.f32 %v1098, %v1098
  %v1299 = vmul.f32 %v1099, %v1099
  %v1300 = vmul.f32 %v1100, %v1100
  %v1301 = vmul.f32 %v1101, %v1101
  %v1302 = vmul.f32 %v1102, %v1102
  %v1303 = vmul.f32 %v1103, %v1103
  %v1304 = vmul.f32 %v1104, %v1104
  %v1305 = vmul.f32 %v1105, %v1105
  %v1306 = vmul.f32 %v1106, %v1106
  %v1307 = vmul.f32 %v1107, %v1107
  %v1308 = vmul.f32 %v1108, %v1108
  %v1309 = vmul.f32 %v1109, %v1109
  %v1310 = vmul.f32 %v1110, %v1110
  %v1311 = vmul.f32 %v1111, %v1111
  %v1312 = vmul.f32 %v1112, %v1112
  %v1313 = vmul.f32 %v1113, %v1113
  %v1314 = vmul.f32 %v1114, %v1114
  %v1315 = vsel %vm1115, %v1251, 0.0
  %v1316 = vsel %vm1115, %v1252, 0.0
  %v1317 = vadd.f32 %v1315, %v1316
  %v1318 = vsel %vm1115, %v1253, 0.0
  %v1319 = vadd.f32 %v1317, %v1318
  %v1320 = vsel %vm1115, %v1254, 0.0
  %v1321 = vadd.f32 %v1319, %v1320
  %v1322 = vsel %vm1115, %v1255, 0.0
  %v1323 = vadd.f32 %v1321, %v1322
  %v1324 = vsel %vm1115, %v1256, 0.0
  %v1325 = vadd.f32 %v1323, %v1324
  %v1326 = vsel %vm1115, %v1257, 0.0
  %v1327 = vadd.f32 %v1325, %v1326
  %v1328 = vsel %vm1115, %v1258, 0.0
  %v1329 = vadd.f32 %v1327, %v1328
  %v1330 = vsel %vm1115, %v1259, 0.0
  %v1331 = vadd.f32 %v1329, %v1330
  %v1332 = vsel %vm1115, %v1260, 0.0
  %v1333 = vadd.f32 %v1331, %v1332
  %v1334 = vsel %vm1115, %v1261, 0.0
  %v1335 = vadd.f32 %v1333, %v1334
  %v1336 = vsel %vm1115, %v1262, 0.0
  %v1337 = vadd.f32 %v1335, %v1336
  %v1338 = vsel %vm1115, %v1263, 0.0
  %v1339 = vadd.f32 %v1337, %v1338
  %v1340 = vsel %vm1115, %v1264, 0.0
  %v1341 = vadd.f32 %v1339, %v1340
  %v1342 = vsel %vm1115, %v1265, 0.0
  %v1343 = vadd.f32 %v1341, %v1342
  %v1344 = vsel %vm1115, %v1266, 0.0
  %v1345 = vadd.f32 %v1343, %v1344
  %v1346 = vsel %vm1115, %v1267, 0.0
  %v1347 = vadd.f32 %v1345, %v1346
  %v1348 = vsel %vm1115, %v1268, 0.0
  %v1349 = vadd.f32 %v1347, %v1348
  %v1350 = vsel %vm1115, %v1269, 0.0
  %v1351 = vadd.f32 %v1349, %v1350
  %v1352 = vsel %vm1115, %v1270, 0.0
  %v1353 = vadd.f32 %v1351, %v1352
  %v1354 = vsel %vm1115, %v1271, 0.0
  %v1355 = vadd.f32 %v1353, %v1354
  %v1356 = vsel %vm1115, %v1272, 0.0
  %v1357 = vadd.f32 %v1355, %v1356
  %v1358 = vsel %vm1115, %v1273, 0.0
  %v1359 = vadd.f32 %v1357, %v1358
  %v1360 = vsel %vm1115, %v1274, 0.0
  %v1361 = vadd.f32 %v1359, %v1360
  %v1362 = vsel %vm1115, %v1275, 0.0
  %v1363 = vadd.f32 %v1361, %v1362
  %v1364 = vsel %vm1115, %v1276, 0.0
  %v1365 = vadd.f32 %v1363, %v1364
  %v1366 = vsel %vm1115, %v1277, 0.0
  %v1367 = vadd.f32 %v1365, %v1366
  %v1368 = vsel %vm1115, %v1278, 0.0
  %v1369 = vadd.f32 %v1367, %v1368
  %v1370 = vsel %vm1115, %v1279, 0.0
  %v1371 = vadd.f32 %v1369, %v1370
  %v1372 = vsel %vm1115, %v1280, 0.0
  %v1373 = vadd.f32 %v1371, %v1372
  %v1374 = vsel %vm1115, %v1281, 0.0
  %v1375 = vadd.f32 %v1373, %v1374
  %v1376 = vsel %vm1115, %v1282, 0.0
  %v1377 = vadd.f32 %v1375, %v1376
  %v1378 = vsel %vm1115, %v1283, 0.0
  %v1379 = vadd.f32 %v1377, %v1378
  %v1380 = vsel %vm1115, %v1284, 0.0
  %v1381 = vadd.f32 %v1379, %v1380
  %v1382 = vsel %vm1115, %v1285, 0.0
  %v1383 = vadd.f32 %v1381, %v1382
  %v1384 = vsel %vm1115, %v1286, 0.0
  %v1385 = vadd.f32 %v1383, %v1384
  %v1386 = vsel %vm1115, %v1287, 0.0
  %v1387 = vadd.f32 %v1385, %v1386
  %v1388 = vsel %vm1115, %v1288, 0.0
  %v1389 = vadd.f32 %v1387, %v1388
  %v1390 = vsel %vm1115, %v1289, 0.0
  %v1391 = vadd.f32 %v1389, %v1390
  %v1392 = vsel %vm1115, %v1290, 0.0
  %v1393 = vadd.f32 %v1391, %v1392
  %v1394 = vsel %vm1115, %v1291, 0.0
  %v1395 = vadd.f32 %v1393, %v1394
  %v1396 = vsel %vm1115, %v1292, 0.0
  %v1397 = vadd.f32 %v1395, %v1396
  %v1398 = vsel %vm1115, %v1293, 0.0
  %v1399 = vadd.f32 %v1397, %v1398
  %v1400 = vsel %vm1115, %v1294, 0.0
  %v1401 = vadd.f32 %v1399, %v1400
  %v1402 = vsel %vm1115, %v1295, 0.0
  %v1403 = vadd.f32 %v1401, %v1402
  %v1404 = vsel %vm1115, %v1296, 0.0
  %v1405 = vadd.f32 %v1403, %v1404
  %v1406 = vsel %vm1115, %v1297, 0.0
  %v1407 = vadd.f32 %v1405, %v1406
  %v1408 = vsel %vm1115, %v1298, 0.0
  %v1409 = vadd.f32 %v1407, %v1408
  %v1410 = vsel %vm1115, %v1299, 0.0
  %v1411 = vadd.f32 %v1409, %v1410
  %v1412 = vsel %vm1115, %v1300, 0.0
  %v1413 = vadd.f32 %v1411, %v1412
  %v1414 = vsel %vm1115, %v1301, 0.0
  %v1415 = vadd.f32 %v1413, %v1414
  %v1416 = vsel %vm1115, %v1302, 0.0
  %v1417 = vadd.f32 %v1415, %v1416
  %v1418 = vsel %vm1115, %v1303, 0.0
  %v1419 = vadd.f32 %v1417, %v1418
  %v1420 = vsel %vm1115, %v1304, 0.0
  %v1421 = vadd.f32 %v1419, %v1420
  %v1422 = vsel %vm1115, %v1305, 0.0
  %v1423 = vadd.f32 %v1421, %v1422
  %v1424 = vsel %vm1115, %v1306, 0.0
  %v1425 = vadd.f32 %v1423, %v1424
  %v1426 = vsel %vm1115, %v1307, 0.0
  %v1427 = vadd.f32 %v1425, %v1426
  %v1428 = vsel %vm1115, %v1308, 0.0
  %v1429 = vadd.f32 %v1427, %v1428
  %v1430 = vsel %vm1115, %v1309, 0.0
  %v1431 = vadd.f32 %v1429, %v1430
  %v1432 = vsel %vm1115, %v1310, 0.0
  %v1433 = vadd.f32 %v1431, %v1432
  %v1434 = vsel %vm1115, %v1311, 0.0
  %v1435 = vadd.f32 %v1433, %v1434
  %v1436 = vsel %vm1115, %v1312, 0.0
  %v1437 = vadd.f32 %v1435, %v1436
  %v1438 = vsel %vm1115, %v1313, 0.0
  %v1439 = vadd.f32 %v1437, %v1438
  %v1440 = vsel %vm1115, %v1314, 0.0
  %v1441 = vadd.f32 %v1439, %v1440
  %v1442 = vrot.slane %v1441, 4
  %v1443 = vadd.f32 %v1441, %v1442
  %v1444 = vrot.slane %v1443, 2
  %v1445 = vadd.f32 %v1443, %v1444
  %v1446 = vrot.slane %v1445, 1
  %v1447 = vadd.f32 %v1445, %v1446
  %1448 = vst.msk [vmem:[%s6] sm:$0x1] %vm1249, %v1447
  // Predicated region
  $region18: #{pointgencon_forward.5} parent=0 // pred_check
    _
  $region19: #{pointgencon_forward.5} parent=0 // pred_check_branch
    %1450 = sbr.rel (0) target = $region21
  $region20: #{pointgencon_forward.5} parent=0 // pred_region
    _
  $region21: #{pointgencon_forward.5} parent=0 // pred_fallthru
    _
  // Predicated region
  $region22: #{pointgencon_forward.5} parent=0 // pred_check
    _
  $region23: #{pointgencon_forward.5} parent=0 // pred_check_branch
    %1452 = sbr.rel (0) target = $region25
  $region24: #{pointgencon_forward.5} parent=0 // pred_region
    _
  $region25: #{pointgencon_forward.5} parent=0 // pred_fallthru
    _
  // Predicated region
  $region26: #{pointgencon_forward.5} parent=0 // pred_check
    _
  $region27: #{pointgencon_forward.5} parent=0 // pred_check_branch
    %1454 = sbr.rel (0) target = $region29
  $region28: #{pointgencon_forward.5} parent=0 // pred_region
    _
  $region29: #{pointgencon_forward.5} parent=0 // pred_fallthru
    _
  // Predicated region
  $region30: #{pointgencon_forward.5} parent=0 // pred_check
    _
  $region31: #{pointgencon_forward.5} parent=0 // pred_check_branch
    %1456 = sbr.rel (0) target = $region33
  $region32: #{pointgencon_forward.5} parent=0 // pred_region
    _
  $region33: #{pointgencon_forward.5} parent=0 // pred_fallthru
    _
  // Predicated region
  $region34: #{pointgencon_forward.5} parent=0 // pred_check
    _
  $region35: #{pointgencon_forward.5} parent=0 // pred_check_branch
    %1458 = sbr.rel (0) target = $region37
  $region36: #{pointgencon_forward.5} parent=0 // pred_region
    _
  $region37: #{pointgencon_forward.5} parent=0 // pred_fallthru
    _
  // Predicated region
  $region38: #{pointgencon_forward.5} parent=0 // pred_check
    _
  $region39: #{pointgencon_forward.5} parent=0 // pred_check_branch
    %1460 = sbr.rel (0) target = $region41
  $region40: #{pointgencon_forward.5} parent=0 // pred_region
    _
  $region41: #{pointgencon_forward.5} parent=0 // pred_fallthru
    _

</llo_original>
